<compile_context>
chip_gen: v7x
topology: tpu7x:2x2x1
jax: 0.10.0
libtpu: 0.0.40
codegen_flags: <defaults>
</compile_context>

<pallas_src>
import numpy as np
import jax
import jax.numpy as jnp
from jax.experimental import pallas as pl
from jax.experimental.pallas import tpu as pltpu


# ----------------------------------------------------------------------------
# Generation-aware VMEM budget + tiling helpers
# ----------------------------------------------------------------------------

_VMEM_CAP = None


def _vmem_cap_bytes():
    """Physical per-core VMEM (128 MiB on v5e/v6e, 64 MiB on v7x)."""
    global _VMEM_CAP
    if _VMEM_CAP is None:
        cap = 128 << 20
        try:
            cap = int(getattr(pltpu.get_tpu_info(), "vmem_capacity_bytes", cap))
        except Exception:
            pass
        _VMEM_CAP = cap
    return _VMEM_CAP


def _vmem_limit(block_bytes):
    """~2x (double-buffered) block bytes + headroom, generation-aware ceiling."""
    ceiling = (48 << 20) if _vmem_cap_bytes() <= (64 << 20) else (100 << 20)
    want = 2 * int(block_bytes) + (8 << 20)
    return int(max(32 << 20, min(ceiling, want)))


def _round_up(x, m):
    return ((x + m - 1) // m) * m


def _pad_and_tile(ncols, tile=512, max_single=1024):
    """Pad the flattened N*P column axis to a lane-aligned size, pick a tile.

    Always returns (padded_cols, tile) with tile a multiple of 128 that
    divides padded_cols (no monolithic unaligned fallback).
    """
    padded = _round_up(ncols, 128)
    if padded <= max_single:
        return padded, padded
    padded = _round_up(ncols, tile)
    return padded, tile


def _pick_channel_tile(c, target=8):
    for t in range(min(c, target), 0, -1):
        if c % t == 0:
            return t
    return c


# ----------------------------------------------------------------------------
# Pallas kernels
# ----------------------------------------------------------------------------

def _conv_bn_prelu_kernel(p_ref, wt_ref, scale_ref, shift_ref, alpha_ref, o_ref):
    """(Cout,K) @ (K,T) im2col conv + folded BN affine + per-channel PReLU.

    p_ref:     (K, T)      channel-major im2col patches, T = N*P tile (bf16)
    wt_ref:    (Cout, K)   bf16 weights
    scale_ref: (Cout, 1)   gamma / sqrt(var + eps)          (f32)
    shift_ref: (Cout, 1)   beta - mean * scale              (f32)
    alpha_ref: (Cout, 1)   PReLU slope                      (f32)
    o_ref:     (Cout, T)   bf16
    """
    acc = jnp.dot(wt_ref[...], p_ref[...], preferred_element_type=jnp.float32)
    y = acc * scale_ref[...] + shift_ref[...]
    y = jnp.where(y >= 0.0, y, alpha_ref[...] * y)
    o_ref[...] = y.astype(o_ref.dtype)


def _conv_bn_prelu_head_kernel(p_ref, wt_ref, scale_ref, shift_ref, alpha_ref,
                               hw_ref, hb_ref, o_ref):
    """Conv+BN+PReLU fused with the 1x1 classifier head (pre-upsample).

    hw_ref: (classes, Cout) bf16 head weights
    hb_ref: (classes, 1)    f32 head bias
    o_ref:  (classes, T)    pre-sigmoid logits (sigmoid applied after upsample)
    """
    acc = jnp.dot(wt_ref[...], p_ref[...], preferred_element_type=jnp.float32)
    y = acc * scale_ref[...] + shift_ref[...]
    y = jnp.where(y >= 0.0, y, alpha_ref[...] * y)                   # (Cout, T) f32
    z = jnp.dot(hw_ref[...], y.astype(jnp.bfloat16),
                preferred_element_type=jnp.float32) + hb_ref[...]     # (classes, T)
    o_ref[...] = z.astype(o_ref.dtype)


def _upsample_planes(x, uwt, uht):
    """Bilinear x2 (align_corners=True) on a stack of independent planes.

    x:   (M, H, W)  bf16  (M = channel*batch planes)
    uwt: (W, 2W)    bf16  column-interpolation matrix (transposed)
    uht: (H, 2H)    bf16  row-interpolation matrix (transposed)
    Returns (M, 2H, 2W) float32.

    Both interpolation passes are flat 2-D MXU matmuls (M folded into the row
    axis); the per-channel broadcast_to + batched dot_general of the previous
    version is gone.  The two minor-dim transposes go to the XLU.
    """
    m, h, w = x.shape
    w2 = uwt.shape[1]
    h2 = uht.shape[1]
    t = jnp.dot(x.reshape(m * h, w), uwt, preferred_element_type=jnp.float32)
    t = jnp.swapaxes(t.reshape(m, h, w2), 1, 2)                   # (M, W2, H)  f32
    r = jnp.dot(t.astype(jnp.bfloat16).reshape(m * w2, h), uht,
                preferred_element_type=jnp.float32)               # (M*W2, H2)
    return jnp.swapaxes(r.reshape(m, w2, h2), 1, 2)               # (M, H2, W2) f32


def _upsample_kernel(x_ref, uwt_ref, uht_ref, o_ref):
    """x_ref: (c_blk, N, H, W) -> o_ref: (c_blk, N, 2H, 2W), channel-major."""
    cb, nb, h, w = x_ref.shape
    x = x_ref[...].reshape(cb * nb, h, w)
    y = _upsample_planes(x, uwt_ref[...], uht_ref[...])
    o_ref[...] = y.reshape(cb, nb, 2 * h, 2 * w).astype(o_ref.dtype)


def _upsample_sigmoid_kernel(x_ref, uwt_ref, uht_ref, o_ref):
    """x_ref: (classes, 1, H, W) logits -> o_ref: (1, classes, 2H, 2W) probs."""
    cb, nb, h, w = x_ref.shape                                     # nb == 1
    x = x_ref[...].reshape(cb * nb, h, w)
    y = _upsample_planes(x, uwt_ref[...], uht_ref[...])            # f32
    # exact, numerically stable sigmoid (exp on the EUP, exact divide).
    e = jnp.exp(-jnp.abs(y))
    s = jnp.where(y >= 0.0, 1.0 / (1.0 + e), e / (1.0 + e))
    o_ref[...] = s.reshape(nb, cb, 2 * h, 2 * w).astype(o_ref.dtype)


# ----------------------------------------------------------------------------
# JAX-side glue: im2col (channel-major, batch folded) and interpolation mats
# ----------------------------------------------------------------------------

def _im2col_cm(a, ksize, stride, pad):
    """Channel-major im2col on a (C, N, H, W) activation.

    Returns patches (K, N*Ho*Wo) with K ordered (kh, kw, c) -- matching the
    (Cout, K) weight layout -- plus (Ho, Wo).
    # TODO(synk): fuse into the conv kernels (halo-tile DMA + 9 shifted dots)
    # to avoid writing/reading the 9x-sized patch array through HBM.
    """
    c, n, h, w = a.shape
    ap = jnp.pad(a, ((0, 0), (0, 0), (pad, pad), (pad, pad)))
    ho = (h + 2 * pad - ksize) // stride + 1
    wo = (w + 2 * pad - ksize) // stride + 1
    cols = []
    for kh in range(ksize):
        for kw in range(ksize):
            cols.append(ap[:, :, kh:kh + stride * ho:stride,
                           kw:kw + stride * wo:stride])
    pat = jnp.stack(cols, axis=0)                       # (k*k, C, N, Ho, Wo)
    return pat.reshape(ksize * ksize * c, n * ho * wo), ho, wo


def _bilinear_matrix(n_in, n_out):
    """align_corners=True interpolation matrix (n_out, n_in). Rows sum to 1."""
    u = np.zeros((n_out, n_in), dtype=np.float32)
    if n_in == 1:
        u[:, 0] = 1.0
        return u
    scale = (n_in - 1) / (n_out - 1)
    for i in range(n_out):
        src = i * scale
        lo = min(int(np.floor(src)), n_in - 1)
        hi = min(lo + 1, n_in - 1)
        frac = src - lo
        u[i, lo] += 1.0 - frac
        u[i, hi] += frac
    return u


# ----------------------------------------------------------------------------
# Layer wrappers
# ----------------------------------------------------------------------------

def conv_bn_prelu(a, p, stride, head=None):
    """3x3 Conv + BN (folded affine) + PReLU (optionally + folded 1x1 head).

    a: (Cin, N, H, W) channel-major bf16 -> (Cout_or_classes, N, Ho, Wo) bf16.
    Batch is folded into the matmul column/lane axis (patches (K, N*Ho*Wo));
    the column axis is padded to a 128 multiple and tiled.
    """
    wt, scale, shift, alpha = p["wt"], p["scale"], p["shift"], p["alpha"]
    cout, kdim = wt.shape
    n = a.shape[1]
    patches, ho, wo = _im2col_cm(a, 3, stride, 1)        # (K, N*P) bf16
    ncols = patches.shape[1]
    padded, tile = _pad_and_tile(ncols)
    if padded != ncols:
        patches = jnp.pad(patches, ((0, 0), (0, padded - ncols)))
    out_c = cout if head is None else head["wt"].shape[0]

    in_specs = [
        pl.BlockSpec((kdim, tile), lambda j: (0, j)),
        pl.BlockSpec((cout, kdim), lambda j: (0, 0)),
        pl.BlockSpec((cout, 1), lambda j: (0, 0)),
        pl.BlockSpec((cout, 1), lambda j: (0, 0)),
        pl.BlockSpec((cout, 1), lambda j: (0, 0)),
    ]
    args = [patches, wt, scale, shift, alpha]
    if head is None:
        kernel = _conv_bn_prelu_kernel
    else:
        kernel = _conv_bn_prelu_head_kernel
        hc = head["wt"].shape[0]
        in_specs += [pl.BlockSpec((hc, cout), lambda j: (0, 0)),
                     pl.BlockSpec((hc, 1), lambda j: (0, 0))]
        args += [head["wt"], head["b"]]

    blk_bytes = (kdim * tile * 2 + cout * kdim * 2 + 3 * cout * 4
                 + out_c * tile * 2 + cout * tile * 4)
    out = pl.pallas_call(
        kernel,
        out_shape=jax.ShapeDtypeStruct((out_c, padded), jnp.bfloat16),
        grid=(padded // tile,),
        in_specs=in_specs,
        out_specs=pl.BlockSpec((out_c, tile), lambda j: (0, j)),
        compiler_params=pltpu.CompilerParams(
            dimension_semantics=("parallel",),
            vmem_limit_bytes=_vmem_limit(blk_bytes)),
    )(*args)
    return out[:, :ncols].reshape(out_c, n, ho, wo)


def upsample2x(a, *, sigmoid=False):
    """Bilinear x2 (align_corners=True) on a channel-major (C, N, H, W) input.

    sigmoid=False: returns (C, N, 2H, 2W) bf16 (feeds the next conv), gridded
                   over channel tiles with all batch planes folded into the
                   matmul row axis.
    sigmoid=True:  returns (N, C, 2H, 2W) float32 probabilities; the CNHW ->
                   NCHW permutation happens for free via the BlockSpecs.
    """
    c, n, h, w = a.shape
    h2, w2 = 2 * h, 2 * w
    uwt = jnp.asarray(_bilinear_matrix(w, w2).T, dtype=jnp.bfloat16)  # (W, W2)
    uht = jnp.asarray(_bilinear_matrix(h, h2).T, dtype=jnp.bfloat16)  # (H, H2)
    mat_specs = [pl.BlockSpec((w, w2), lambda i: (0, 0)),
                 pl.BlockSpec((h, h2), lambda i: (0, 0))]

    if sigmoid:
        blk_bytes = (c * h * w * 2 + c * h2 * w2 * 4
                     + 8 * c * (h * w2 + w2 * h2) + (w * w2 + h * h2) * 2)
        return pl.pallas_call(
            _upsample_sigmoid_kernel,
            out_shape=jax.ShapeDtypeStruct((n, c, h2, w2), jnp.float32),
            grid=(n,),
            in_specs=[pl.BlockSpec((c, 1, h, w), lambda i: (0, i, 0, 0))] + mat_specs,
            out_specs=pl.BlockSpec((1, c, h2, w2), lambda i: (i, 0, 0, 0)),
            compiler_params=pltpu.CompilerParams(
                dimension_semantics=("parallel",),
                vmem_limit_bytes=_vmem_limit(blk_bytes)),
        )(a, uwt, uht)

    c_blk = _pick_channel_tile(c)
    blk_bytes = (c_blk * n * (h * w * 2 + h2 * w2 * 2 + 8 * (h * w2 + w2 * h2))
                 + (w * w2 + h * h2) * 2)
    return pl.pallas_call(
        _upsample_kernel,
        out_shape=jax.ShapeDtypeStruct((c, n, h2, w2), jnp.bfloat16),
        grid=(c // c_blk,),
        in_specs=[pl.BlockSpec((c_blk, n, h, w), lambda i: (i, 0, 0, 0))] + mat_specs,
        out_specs=pl.BlockSpec((c_blk, n, h2, w2), lambda i: (i, 0, 0, 0)),
        compiler_params=pltpu.CompilerParams(
            dimension_semantics=("parallel",),
            vmem_limit_bytes=_vmem_limit(blk_bytes)),
    )(a, uwt, uht)


# ----------------------------------------------------------------------------
# Parameter construction (mirrors init_params():
#   Conv2d: kaiming_normal_(mode='fan_out'), bias=0
#   BatchNorm2d: weight=1, bias=0 (eval-mode running stats -> identity affine)
#   PReLU: default per-channel slope 0.25)
# ----------------------------------------------------------------------------

def _make_cbr(key, cin, cout, eps=1e-5):
    fan_out = cout * 3 * 3
    std = float(np.sqrt(2.0 / fan_out))
    w = jax.random.normal(key, (3, 3, cin, cout), dtype=jnp.float32) * std
    # (Cout, K) with K ordered (kh, kw, cin), matching _im2col_cm.
    wt = jnp.transpose(w.reshape(9 * cin, cout)).astype(jnp.bfloat16)
    gamma = jnp.ones((cout,), jnp.float32)
    beta = jnp.zeros((cout,), jnp.float32)
    mean = jnp.zeros((cout,), jnp.float32)
    var = jnp.ones((cout,), jnp.float32)
    scale = gamma / jnp.sqrt(var + eps)
    shift = beta - mean * scale
    return {
        "wt": wt,
        "scale": scale.reshape(cout, 1),
        "shift": shift.reshape(cout, 1),
        "alpha": jnp.full((cout, 1), 0.25, jnp.float32),
    }


def make_params(key, in_ch=1, classes=3):
    k1, k2, k3, k4, k5 = jax.random.split(key, 5)
    params = {
        "c1": _make_cbr(k1, in_ch, 16),
        "c2": _make_cbr(k2, 16, 32),
        "c3": _make_cbr(k3, 32, 32),
        "c4": _make_cbr(k4, 32, 16),
    }
    fan_out = classes * 1 * 1
    std = float(np.sqrt(2.0 / fan_out))
    params["head"] = {
        "wt": (jax.random.normal(k5, (classes, 16), dtype=jnp.float32) * std
               ).astype(jnp.bfloat16),
        "b": jnp.zeros((classes, 1), jnp.float32),      # init.constant_(bias, 0)
    }
    return params


# ----------------------------------------------------------------------------
# Forward pass:  y = sigmoid(base_net(x)) -- channel-major (C, N, H, W)
# internally; output is NCHW float32.
# ----------------------------------------------------------------------------

@jax.jit
def espnetv2_autoencoder_forward(x_nchw, params):
    x = jnp.transpose(x_nchw, (1, 0, 2, 3)).astype(jnp.bfloat16)  # (1, N, H, W)
    x = conv_bn_prelu(x, params["c1"], stride=2)            # (16, N, H/2, W/2)
    x = conv_bn_prelu(x, params["c2"], stride=2)            # (32, N, H/4, W/4)
    x = conv_bn_prelu(x, params["c3"], stride=1)            # (32, N, H/4, W/4)
    # TODO(synk): fold this upsample into c4 as a fractionally-strided conv to
    # drop the (32, N, H/2, W/2) intermediate + its patch array from HBM.
    x = upsample2x(x)                                        # (32, N, H/2, W/2)
    # 1x1 classifier head folded into c4 (exact: a 1x1 conv commutes with the
    # bilinear upsample since the interpolation weights sum to 1, bias incl.).
    x = conv_bn_prelu(x, params["c4"], stride=1,
                      head=params["head"])                   # (3, N, H/2, W/2) logits
    y = upsample2x(x, sigmoid=True)                          # (N, 3, H, W) f32 in (0,1)
    return y


if __name__ == "__main__":
    key = jax.random.PRNGKey(0)
    kx, kp = jax.random.split(key)

    # args.channels = 1 (single-channel input), classes = 3
    N, C, H, W = 2, 1, 16, 16
    x = jax.random.normal(kx, (N, C, H, W), dtype=jnp.float32)
    params = make_params(kp, in_ch=C, classes=3)

    out = espnetv2_autoencoder_forward(x, params)
    out = jax.block_until_ready(out)

    assert out.shape == (N, 3, H, W), out.shape
    assert bool(jnp.all(jnp.isfinite(out)))
    assert bool(jnp.all((out >= 0.0) & (out <= 1.0)))   # sigmoid output range
    print("KERNEL_OK")
</pallas_src>

<mosaic_0001>
module attributes {stable_mosaic.version = 11 : i64} {
  func.func @_conv_bn_prelu_kernel(%arg0: i32, %arg1: memref<9x128xbf16, #tpu.memory_space<vmem>>, %arg2: memref<16x9xbf16, #tpu.memory_space<vmem>>, %arg3: memref<16x1xf32, #tpu.memory_space<vmem>>, %arg4: memref<16x1xf32, #tpu.memory_space<vmem>>, %arg5: memref<16x1xf32, #tpu.memory_space<vmem>>, %arg6: memref<16x128xbf16, #tpu.memory_space<vmem>>) attributes {dimension_semantics = [#tpu.dimension_semantics<parallel>], iteration_bounds = array<i64: 1>, scalar_prefetch = 0 : i64, scratch_operands = 0 : i64, tpu.core_type = #tpu.core_type<tc>, window_params = [{transform_indices = @transform_0, window_bounds = array<i64: 9, 128>}, {pipeline_mode = #tpu.pipeline_mode<synchronous>, transform_indices = @transform_1, window_bounds = array<i64: 16, 9>}, {pipeline_mode = #tpu.pipeline_mode<synchronous>, transform_indices = @transform_2, window_bounds = array<i64: 16, 1>}, {pipeline_mode = #tpu.pipeline_mode<synchronous>, transform_indices = @transform_3, window_bounds = array<i64: 16, 1>}, {pipeline_mode = #tpu.pipeline_mode<synchronous>, transform_indices = @transform_4, window_bounds = array<i64: 16, 1>}, {transform_indices = @transform_5, window_bounds = array<i64: 16, 128>}]} {
    %c0 = arith.constant 0 : index
    %c0_0 = arith.constant 0 : index
    %0 = vector.load %arg2[%c0, %c0_0] : memref<16x9xbf16, #tpu.memory_space<vmem>>, vector<16x9xbf16>
    %c0_1 = arith.constant 0 : index
    %c0_2 = arith.constant 0 : index
    %1 = vector.load %arg1[%c0_1, %c0_2] : memref<9x128xbf16, #tpu.memory_space<vmem>>, vector<9x128xbf16>
    %cst = arith.constant dense<0.000000e+00> : vector<16x128xf32>
    %2 = tpu.matmul %0, %1, %cst {dimension_numbers = #tpu.dot_dimension_numbers<[1], [0], [0], [1], [0, 0, 1, 1], [], []>} : vector<16x9xbf16>, vector<9x128xbf16>, vector<16x128xf32> -> vector<16x128xf32>
    %c0_3 = arith.constant 0 : index
    %c0_4 = arith.constant 0 : index
    %3 = vector.load %arg3[%c0_3, %c0_4] : memref<16x1xf32, #tpu.memory_space<vmem>>, vector<16x1xf32>
    %4 = vector.broadcast %3 : vector<16x1xf32> to vector<16x128xf32>
    %5 = arith.mulf %2, %4 : vector<16x128xf32>
    %c0_5 = arith.constant 0 : index
    %c0_6 = arith.constant 0 : index
    %6 = vector.load %arg4[%c0_5, %c0_6] : memref<16x1xf32, #tpu.memory_space<vmem>>, vector<16x1xf32>
    %7 = vector.broadcast %6 : vector<16x1xf32> to vector<16x128xf32>
    %8 = arith.addf %5, %7 : vector<16x128xf32>
    %cst_7 = arith.constant 0.000000e+00 : f32
    %9 = vector.broadcast %cst_7 : f32 to vector<16x128xf32>
    %10 = arith.cmpf oge, %8, %9 : vector<16x128xf32>
    %c0_8 = arith.constant 0 : index
    %c0_9 = arith.constant 0 : index
    %11 = vector.load %arg5[%c0_8, %c0_9] : memref<16x1xf32, #tpu.memory_space<vmem>>, vector<16x1xf32>
    %12 = vector.broadcast %11 : vector<16x1xf32> to vector<16x128xf32>
    %13 = arith.mulf %12, %8 : vector<16x128xf32>
    %14 = arith.select %10, %8, %13 : vector<16x128xi1>, vector<16x128xf32>
    %15 = arith.truncf %14 : vector<16x128xf32> to vector<16x128xbf16>
    %c0_10 = arith.constant 0 : index
    %c0_11 = arith.constant 0 : index
    %16 = vector.load %arg6[%c0_10, %c0_11] : memref<16x128xbf16, #tpu.memory_space<vmem>>, vector<16x128xbf16>
    tpu.vector_store %arg6[%c0_10, %c0_11], %15 {strides = array<i32>} : memref<16x128xbf16, #tpu.memory_space<vmem>>, vector<16x128xbf16>,
    return
  }
  func.func @transform_0(%arg0: i32) -> (i32, i32) {
    %c0_i32 = arith.constant 0 : i32
    %c0_i32_0 = arith.constant 0 : i32
    return %c0_i32, %arg0 : i32, i32
  }
  func.func @transform_1(%arg0: i32) -> (i32, i32) {
    %c0_i32 = arith.constant 0 : i32
    %c0_i32_0 = arith.constant 0 : i32
    %c0_i32_1 = arith.constant 0 : i32
    return %c0_i32, %c0_i32_0 : i32, i32
  }
  func.func @transform_2(%arg0: i32) -> (i32, i32) {
    %c0_i32 = arith.constant 0 : i32
    %c0_i32_0 = arith.constant 0 : i32
    %c0_i32_1 = arith.constant 0 : i32
    return %c0_i32, %c0_i32_0 : i32, i32
  }
  func.func @transform_3(%arg0: i32) -> (i32, i32) {
    %c0_i32 = arith.constant 0 : i32
    %c0_i32_0 = arith.constant 0 : i32
    %c0_i32_1 = arith.constant 0 : i32
    return %c0_i32, %c0_i32_0 : i32, i32
  }
  func.func @transform_4(%arg0: i32) -> (i32, i32) {
    %c0_i32 = arith.constant 0 : i32
    %c0_i32_0 = arith.constant 0 : i32
    %c0_i32_1 = arith.constant 0 : i32
    return %c0_i32, %c0_i32_0 : i32, i32
  }
  func.func @transform_5(%arg0: i32) -> (i32, i32) {
    %c0_i32 = arith.constant 0 : i32
    %c0_i32_0 = arith.constant 0 : i32
    return %c0_i32, %arg0 : i32, i32
  }
}

module attributes {stable_mosaic.version = 11 : i64} {
  func.func @_conv_bn_prelu_kernel(%arg0: i32, %arg1: memref<144x128xbf16, #tpu.memory_space<vmem>>, %arg2: memref<32x144xbf16, #tpu.memory_space<vmem>>, %arg3: memref<32x1xf32, #tpu.memory_space<vmem>>, %arg4: memref<32x1xf32, #tpu.memory_space<vmem>>, %arg5: memref<32x1xf32, #tpu.memory_space<vmem>>, %arg6: memref<32x128xbf16, #tpu.memory_space<vmem>>) attributes {dimension_semantics = [#tpu.dimension_semantics<parallel>], iteration_bounds = array<i64: 1>, scalar_prefetch = 0 : i64, scratch_operands = 0 : i64, tpu.core_type = #tpu.core_type<tc>, window_params = [{transform_indices = @transform_0, window_bounds = array<i64: 144, 128>}, {pipeline_mode = #tpu.pipeline_mode<synchronous>, transform_indices = @transform_1, window_bounds = array<i64: 32, 144>}, {pipeline_mode = #tpu.pipeline_mode<synchronous>, transform_indices = @transform_2, window_bounds = array<i64: 32, 1>}, {pipeline_mode = #tpu.pipeline_mode<synchronous>, transform_indices = @transform_3, window_bounds = array<i64: 32, 1>}, {pipeline_mode = #tpu.pipeline_mode<synchronous>, transform_indices = @transform_4, window_bounds = array<i64: 32, 1>}, {transform_indices = @transform_5, window_bounds = array<i64: 32, 128>}]} {
    %c0 = arith.constant 0 : index
    %c0_0 = arith.constant 0 : index
    %0 = vector.load %arg2[%c0, %c0_0] : memref<32x144xbf16, #tpu.memory_space<vmem>>, vector<32x144xbf16>
    %c0_1 = arith.constant 0 : index
    %c0_2 = arith.constant 0 : index
    %1 = vector.load %arg1[%c0_1, %c0_2] : memref<144x128xbf16, #tpu.memory_space<vmem>>, vector<144x128xbf16>
    %cst = arith.constant dense<0.000000e+00> : vector<32x128xf32>
    %2 = tpu.matmul %0, %1, %cst {dimension_numbers = #tpu.dot_dimension_numbers<[1], [0], [0], [1], [0, 0, 1, 1], [], []>} : vector<32x144xbf16>, vector<144x128xbf16>, vector<32x128xf32> -> vector<32x128xf32>
    %c0_3 = arith.constant 0 : index
    %c0_4 = arith.constant 0 : index
    %3 = vector.load %arg3[%c0_3, %c0_4] : memref<32x1xf32, #tpu.memory_space<vmem>>, vector<32x1xf32>
    %4 = vector.broadcast %3 : vector<32x1xf32> to vector<32x128xf32>
    %5 = arith.mulf %2, %4 : vector<32x128xf32>
    %c0_5 = arith.constant 0 : index
    %c0_6 = arith.constant 0 : index
    %6 = vector.load %arg4[%c0_5, %c0_6] : memref<32x1xf32, #tpu.memory_space<vmem>>, vector<32x1xf32>
    %7 = vector.broadcast %6 : vector<32x1xf32> to vector<32x128xf32>
    %8 = arith.addf %5, %7 : vector<32x128xf32>
    %cst_7 = arith.constant 0.000000e+00 : f32
    %9 = vector.broadcast %cst_7 : f32 to vector<32x128xf32>
    %10 = arith.cmpf oge, %8, %9 : vector<32x128xf32>
    %c0_8 = arith.constant 0 : index
    %c0_9 = arith.constant 0 : index
    %11 = vector.load %arg5[%c0_8, %c0_9] : memref<32x1xf32, #tpu.memory_space<vmem>>, vector<32x1xf32>
    %12 = vector.broadcast %11 : vector<32x1xf32> to vector<32x128xf32>
    %13 = arith.mulf %12, %8 : vector<32x128xf32>
    %14 = arith.select %10, %8, %13 : vector<32x128xi1>, vector<32x128xf32>
    %15 = arith.truncf %14 : vector<32x128xf32> to vector<32x128xbf16>
    %c0_10 = arith.constant 0 : index
    %c0_11 = arith.constant 0 : index
    %16 = vector.load %arg6[%c0_10, %c0_11] : memref<32x128xbf16, #tpu.memory_space<vmem>>, vector<32x128xbf16>
    tpu.vector_store %arg6[%c0_10, %c0_11], %15 {strides = array<i32>} : memref<32x128xbf16, #tpu.memory_space<vmem>>, vector<32x128xbf16>,
    return
  }
  func.func @transform_0(%arg0: i32) -> (i32, i32) {
    %c0_i32 = arith.constant 0 : i32
    %c0_i32_0 = arith.constant 0 : i32
    return %c0_i32, %arg0 : i32, i32
  }
  func.func @transform_1(%arg0: i32) -> (i32, i32) {
    %c0_i32 = arith.constant 0 : i32
    %c0_i32_0 = arith.constant 0 : i32
    %c0_i32_1 = arith.constant 0 : i32
    return %c0_i32, %c0_i32_0 : i32, i32
  }
  func.func @transform_2(%arg0: i32) -> (i32, i32) {
    %c0_i32 = arith.constant 0 : i32
    %c0_i32_0 = arith.constant 0 : i32
    %c0_i32_1 = arith.constant 0 : i32
    return %c0_i32, %c0_i32_0 : i32, i32
  }
  func.func @transform_3(%arg0: i32) -> (i32, i32) {
    %c0_i32 = arith.constant 0 : i32
    %c0_i32_0 = arith.constant 0 : i32
    %c0_i32_1 = arith.constant 0 : i32
    return %c0_i32, %c0_i32_0 : i32, i32
  }
  func.func @transform_4(%arg0: i32) -> (i32, i32) {
    %c0_i32 = arith.constant 0 : i32
    %c0_i32_0 = arith.constant 0 : i32
    %c0_i32_1 = arith.constant 0 : i32
    return %c0_i32, %c0_i32_0 : i32, i32
  }
  func.func @transform_5(%arg0: i32) -> (i32, i32) {
    %c0_i32 = arith.constant 0 : i32
    %c0_i32_0 = arith.constant 0 : i32
    return %c0_i32, %arg0 : i32, i32
  }
}

module attributes {stable_mosaic.version = 11 : i64} {
  func.func @_conv_bn_prelu_kernel(%arg0: i32, %arg1: memref<288x128xbf16, #tpu.memory_space<vmem>>, %arg2: memref<32x288xbf16, #tpu.memory_space<vmem>>, %arg3: memref<32x1xf32, #tpu.memory_space<vmem>>, %arg4: memref<32x1xf32, #tpu.memory_space<vmem>>, %arg5: memref<32x1xf32, #tpu.memory_space<vmem>>, %arg6: memref<32x128xbf16, #tpu.memory_space<vmem>>) attributes {dimension_semantics = [#tpu.dimension_semantics<parallel>], iteration_bounds = array<i64: 1>, scalar_prefetch = 0 : i64, scratch_operands = 0 : i64, tpu.core_type = #tpu.core_type<tc>, window_params = [{transform_indices = @transform_0, window_bounds = array<i64: 288, 128>}, {pipeline_mode = #tpu.pipeline_mode<synchronous>, transform_indices = @transform_1, window_bounds = array<i64: 32, 288>}, {pipeline_mode = #tpu.pipeline_mode<synchronous>, transform_indices = @transform_2, window_bounds = array<i64: 32, 1>}, {pipeline_mode = #tpu.pipeline_mode<synchronous>, transform_indices = @transform_3, window_bounds = array<i64: 32, 1>}, {pipeline_mode = #tpu.pipeline_mode<synchronous>, transform_indices = @transform_4, window_bounds = array<i64: 32, 1>}, {transform_indices = @transform_5, window_bounds = array<i64: 32, 128>}]} {
    %c0 = arith.constant 0 : index
    %c0_0 = arith.constant 0 : index
    %0 = vector.load %arg2[%c0, %c0_0] : memref<32x288xbf16, #tpu.memory_space<vmem>>, vector<32x288xbf16>
    %c0_1 = arith.constant 0 : index
    %c0_2 = arith.constant 0 : index
    %1 = vector.load %arg1[%c0_1, %c0_2] : memref<288x128xbf16, #tpu.memory_space<vmem>>, vector<288x128xbf16>
    %cst = arith.constant dense<0.000000e+00> : vector<32x128xf32>
    %2 = tpu.matmul %0, %1, %cst {dimension_numbers = #tpu.dot_dimension_numbers<[1], [0], [0], [1], [0, 0, 1, 1], [], []>} : vector<32x288xbf16>, vector<288x128xbf16>, vector<32x128xf32> -> vector<32x128xf32>
    %c0_3 = arith.constant 0 : index
    %c0_4 = arith.constant 0 : index
    %3 = vector.load %arg3[%c0_3, %c0_4] : memref<32x1xf32, #tpu.memory_space<vmem>>, vector<32x1xf32>
    %4 = vector.broadcast %3 : vector<32x1xf32> to vector<32x128xf32>
    %5 = arith.mulf %2, %4 : vector<32x128xf32>
    %c0_5 = arith.constant 0 : index
    %c0_6 = arith.constant 0 : index
    %6 = vector.load %arg4[%c0_5, %c0_6] : memref<32x1xf32, #tpu.memory_space<vmem>>, vector<32x1xf32>
    %7 = vector.broadcast %6 : vector<32x1xf32> to vector<32x128xf32>
    %8 = arith.addf %5, %7 : vector<32x128xf32>
    %cst_7 = arith.constant 0.000000e+00 : f32
    %9 = vector.broadcast %cst_7 : f32 to vector<32x128xf32>
    %10 = arith.cmpf oge, %8, %9 : vector<32x128xf32>
    %c0_8 = arith.constant 0 : index
    %c0_9 = arith.constant 0 : index
    %11 = vector.load %arg5[%c0_8, %c0_9] : memref<32x1xf32, #tpu.memory_space<vmem>>, vector<32x1xf32>
    %12 = vector.broadcast %11 : vector<32x1xf32> to vector<32x128xf32>
    %13 = arith.mulf %12, %8 : vector<32x128xf32>
    %14 = arith.select %10, %8, %13 : vector<32x128xi1>, vector<32x128xf32>
    %15 = arith.truncf %14 : vector<32x128xf32> to vector<32x128xbf16>
    %c0_10 = arith.constant 0 : index
    %c0_11 = arith.constant 0 : index
    %16 = vector.load %arg6[%c0_10, %c0_11] : memref<32x128xbf16, #tpu.memory_space<vmem>>, vector<32x128xbf16>
    tpu.vector_store %arg6[%c0_10, %c0_11], %15 {strides = array<i32>} : memref<32x128xbf16, #tpu.memory_space<vmem>>, vector<32x128xbf16>,
    return
  }
  func.func @transform_0(%arg0: i32) -> (i32, i32) {
    %c0_i32 = arith.constant 0 : i32
    %c0_i32_0 = arith.constant 0 : i32
    return %c0_i32, %arg0 : i32, i32
  }
  func.func @transform_1(%arg0: i32) -> (i32, i32) {
    %c0_i32 = arith.constant 0 : i32
    %c0_i32_0 = arith.constant 0 : i32
    %c0_i32_1 = arith.constant 0 : i32
    return %c0_i32, %c0_i32_0 : i32, i32
  }
  func.func @transform_2(%arg0: i32) -> (i32, i32) {
    %c0_i32 = arith.constant 0 : i32
    %c0_i32_0 = arith.constant 0 : i32
    %c0_i32_1 = arith.constant 0 : i32
    return %c0_i32, %c0_i32_0 : i32, i32
  }
  func.func @transform_3(%arg0: i32) -> (i32, i32) {
    %c0_i32 = arith.constant 0 : i32
    %c0_i32_0 = arith.constant 0 : i32
    %c0_i32_1 = arith.constant 0 : i32
    return %c0_i32, %c0_i32_0 : i32, i32
  }
  func.func @transform_4(%arg0: i32) -> (i32, i32) {
    %c0_i32 = arith.constant 0 : i32
    %c0_i32_0 = arith.constant 0 : i32
    %c0_i32_1 = arith.constant 0 : i32
    return %c0_i32, %c0_i32_0 : i32, i32
  }
  func.func @transform_5(%arg0: i32) -> (i32, i32) {
    %c0_i32 = arith.constant 0 : i32
    %c0_i32_0 = arith.constant 0 : i32
    return %c0_i32, %arg0 : i32, i32
  }
}

module attributes {stable_mosaic.version = 11 : i64} {
  func.func @_upsample_kernel(%arg0: i32, %arg1: memref<8x2x4x4xbf16, #tpu.memory_space<vmem>>, %arg2: memref<4x8xbf16, #tpu.memory_space<vmem>>, %arg3: memref<4x8xbf16, #tpu.memory_space<vmem>>, %arg4: memref<8x2x8x8xbf16, #tpu.memory_space<vmem>>) attributes {dimension_semantics = [#tpu.dimension_semantics<parallel>], iteration_bounds = array<i64: 4>, scalar_prefetch = 0 : i64, scratch_operands = 0 : i64, tpu.core_type = #tpu.core_type<tc>, window_params = [{transform_indices = @transform_0, window_bounds = array<i64: 8, 2, 4, 4>}, {pipeline_mode = #tpu.pipeline_mode<synchronous>, transform_indices = @transform_1, window_bounds = array<i64: 4, 8>}, {pipeline_mode = #tpu.pipeline_mode<synchronous>, transform_indices = @transform_2, window_bounds = array<i64: 4, 8>}, {transform_indices = @transform_3, window_bounds = array<i64: 8, 2, 8, 8>}]} {
    %c0 = arith.constant 0 : index
    %c0_0 = arith.constant 0 : index
    %c0_1 = arith.constant 0 : index
    %c0_2 = arith.constant 0 : index
    %0 = vector.load %arg1[%c0, %c0_0, %c0_1, %c0_2] : memref<8x2x4x4xbf16, #tpu.memory_space<vmem>>, vector<8x2x4x4xbf16>
    %1 = vector.shape_cast %0 : vector<8x2x4x4xbf16> to vector<16x4x4xbf16>
    %c0_3 = arith.constant 0 : index
    %c0_4 = arith.constant 0 : index
    %2 = vector.load %arg2[%c0_3, %c0_4] : memref<4x8xbf16, #tpu.memory_space<vmem>>, vector<4x8xbf16>
    %c0_5 = arith.constant 0 : index
    %c0_6 = arith.constant 0 : index
    %3 = vector.load %arg3[%c0_5, %c0_6] : memref<4x8xbf16, #tpu.memory_space<vmem>>, vector<4x8xbf16>
    %4 = vector.shape_cast %1 : vector<16x4x4xbf16> to vector<64x4xbf16>
    %cst = arith.constant dense<0.000000e+00> : vector<64x8xf32>
    %5 = tpu.matmul %4, %2, %cst {dimension_numbers = #tpu.dot_dimension_numbers<[1], [0], [0], [1], [0, 0, 1, 1], [], []>} : vector<64x4xbf16>, vector<4x8xbf16>, vector<64x8xf32> -> vector<64x8xf32>
    %6 = vector.shape_cast %5 : vector<64x8xf32> to vector<16x4x8xf32>
    %7 = tpu.transpose %6, [0, 2, 1] : vector<16x4x8xf32> -> vector<16x8x4xf32>
    %8 = arith.truncf %7 : vector<16x8x4xf32> to vector<16x8x4xbf16>
    %9 = vector.shape_cast %8 : vector<16x8x4xbf16> to vector<128x4xbf16>
    %cst_7 = arith.constant dense<0.000000e+00> : vector<128x8xf32>
    %10 = tpu.matmul %9, %3, %cst_7 {dimension_numbers = #tpu.dot_dimension_numbers<[1], [0], [0], [1], [0, 0, 1, 1], [], []>} : vector<128x4xbf16>, vector<4x8xbf16>, vector<128x8xf32> -> vector<128x8xf32>
    %11 = vector.shape_cast %10 : vector<128x8xf32> to vector<16x8x8xf32>
    %12 = tpu.transpose %11, [0, 2, 1] : vector<16x8x8xf32> -> vector<16x8x8xf32>
    %13 = vector.shape_cast %12 : vector<16x8x8xf32> to vector<8x2x8x8xf32>
    %14 = arith.truncf %13 : vector<8x2x8x8xf32> to vector<8x2x8x8xbf16>
    %c0_8 = arith.constant 0 : index
    %c0_9 = arith.constant 0 : index
    %c0_10 = arith.constant 0 : index
    %c0_11 = arith.constant 0 : index
    %15 = vector.load %arg4[%c0_8, %c0_9, %c0_10, %c0_11] : memref<8x2x8x8xbf16, #tpu.memory_space<vmem>>, vector<8x2x8x8xbf16>
    tpu.vector_store %arg4[%c0_8, %c0_9, %c0_10, %c0_11], %14 {strides = array<i32>} : memref<8x2x8x8xbf16, #tpu.memory_space<vmem>>, vector<8x2x8x8xbf16>,
    return
  }
  func.func @transform_0(%arg0: i32) -> (i32, i32, i32, i32) {
    %c0_i32 = arith.constant 0 : i32
    %c0_i32_0 = arith.constant 0 : i32
    %c0_i32_1 = arith.constant 0 : i32
    %c0_i32_2 = arith.constant 0 : i32
    return %arg0, %c0_i32, %c0_i32_0, %c0_i32_1 : i32, i32, i32, i32
  }
  func.func @transform_1(%arg0: i32) -> (i32, i32) {
    %c0_i32 = arith.constant 0 : i32
    %c0_i32_0 = arith.constant 0 : i32
    %c0_i32_1 = arith.constant 0 : i32
    return %c0_i32, %c0_i32_0 : i32, i32
  }
  func.func @transform_2(%arg0: i32) -> (i32, i32) {
    %c0_i32 = arith.constant 0 : i32
    %c0_i32_0 = arith.constant 0 : i32
    %c0_i32_1 = arith.constant 0 : i32
    return %c0_i32, %c0_i32_0 : i32, i32
  }
  func.func @transform_3(%arg0: i32) -> (i32, i32, i32, i32) {
    %c0_i32 = arith.constant 0 : i32
    %c0_i32_0 = arith.constant 0 : i32
    %c0_i32_1 = arith.constant 0 : i32
    %c0_i32_2 = arith.constant 0 : i32
    return %arg0, %c0_i32, %c0_i32_0, %c0_i32_1 : i32, i32, i32, i32
  }
}

module attributes {stable_mosaic.version = 11 : i64} {
  func.func @_conv_bn_prelu_head_kernel(%arg0: i32, %arg1: memref<288x128xbf16, #tpu.memory_space<vmem>>, %arg2: memref<16x288xbf16, #tpu.memory_space<vmem>>, %arg3: memref<16x1xf32, #tpu.memory_space<vmem>>, %arg4: memref<16x1xf32, #tpu.memory_space<vmem>>, %arg5: memref<16x1xf32, #tpu.memory_space<vmem>>, %arg6: memref<3x16xbf16, #tpu.memory_space<vmem>>, %arg7: memref<3x1xf32, #tpu.memory_space<vmem>>, %arg8: memref<3x128xbf16, #tpu.memory_space<vmem>>) attributes {dimension_semantics = [#tpu.dimension_semantics<parallel>], iteration_bounds = array<i64: 1>, scalar_prefetch = 0 : i64, scratch_operands = 0 : i64, tpu.core_type = #tpu.core_type<tc>, window_params = [{transform_indices = @transform_0, window_bounds = array<i64: 288, 128>}, {pipeline_mode = #tpu.pipeline_mode<synchronous>, transform_indices = @transform_1, window_bounds = array<i64: 16, 288>}, {pipeline_mode = #tpu.pipeline_mode<synchronous>, transform_indices = @transform_2, window_bounds = array<i64: 16, 1>}, {pipeline_mode = #tpu.pipeline_mode<synchronous>, transform_indices = @transform_3, window_bounds = array<i64: 16, 1>}, {pipeline_mode = #tpu.pipeline_mode<synchronous>, transform_indices = @transform_4, window_bounds = array<i64: 16, 1>}, {pipeline_mode = #tpu.pipeline_mode<synchronous>, transform_indices = @transform_5, window_bounds = array<i64: 3, 16>}, {pipeline_mode = #tpu.pipeline_mode<synchronous>, transform_indices = @transform_6, window_bounds = array<i64: 3, 1>}, {transform_indices = @transform_7, window_bounds = array<i64: 3, 128>}]} {
    %c0 = arith.constant 0 : index
    %c0_0 = arith.constant 0 : index
    %0 = vector.load %arg2[%c0, %c0_0] : memref<16x288xbf16, #tpu.memory_space<vmem>>, vector<16x288xbf16>
    %c0_1 = arith.constant 0 : index
    %c0_2 = arith.constant 0 : index
    %1 = vector.load %arg1[%c0_1, %c0_2] : memref<288x128xbf16, #tpu.memory_space<vmem>>, vector<288x128xbf16>
    %cst = arith.constant dense<0.000000e+00> : vector<16x128xf32>
    %2 = tpu.matmul %0, %1, %cst {dimension_numbers = #tpu.dot_dimension_numbers<[1], [0], [0], [1], [0, 0, 1, 1], [], []>} : vector<16x288xbf16>, vector<288x128xbf16>, vector<16x128xf32> -> vector<16x128xf32>
    %c0_3 = arith.constant 0 : index
    %c0_4 = arith.constant 0 : index
    %3 = vector.load %arg3[%c0_3, %c0_4] : memref<16x1xf32, #tpu.memory_space<vmem>>, vector<16x1xf32>
    %4 = vector.broadcast %3 : vector<16x1xf32> to vector<16x128xf32>
    %5 = arith.mulf %2, %4 : vector<16x128xf32>
    %c0_5 = arith.constant 0 : index
    %c0_6 = arith.constant 0 : index
    %6 = vector.load %arg4[%c0_5, %c0_6] : memref<16x1xf32, #tpu.memory_space<vmem>>, vector<16x1xf32>
    %7 = vector.broadcast %6 : vector<16x1xf32> to vector<16x128xf32>
    %8 = arith.addf %5, %7 : vector<16x128xf32>
    %cst_7 = arith.constant 0.000000e+00 : f32
    %9 = vector.broadcast %cst_7 : f32 to vector<16x128xf32>
    %10 = arith.cmpf oge, %8, %9 : vector<16x128xf32>
    %c0_8 = arith.constant 0 : index
    %c0_9 = arith.constant 0 : index
    %11 = vector.load %arg5[%c0_8, %c0_9] : memref<16x1xf32, #tpu.memory_space<vmem>>, vector<16x1xf32>
    %12 = vector.broadcast %11 : vector<16x1xf32> to vector<16x128xf32>
    %13 = arith.mulf %12, %8 : vector<16x128xf32>
    %14 = arith.select %10, %8, %13 : vector<16x128xi1>, vector<16x128xf32>
    %c0_10 = arith.constant 0 : index
    %c0_11 = arith.constant 0 : index
    %15 = vector.load %arg6[%c0_10, %c0_11] : memref<3x16xbf16, #tpu.memory_space<vmem>>, vector<3x16xbf16>
    %16 = arith.truncf %14 : vector<16x128xf32> to vector<16x128xbf16>
    %cst_12 = arith.constant dense<0.000000e+00> : vector<3x128xf32>
    %17 = tpu.matmul %15, %16, %cst_12 {dimension_numbers = #tpu.dot_dimension_numbers<[1], [0], [0], [1], [0, 0, 1, 1], [], []>} : vector<3x16xbf16>, vector<16x128xbf16>, vector<3x128xf32> -> vector<3x128xf32>
    %c0_13 = arith.constant 0 : index
    %c0_14 = arith.constant 0 : index
    %18 = vector.load %arg7[%c0_13, %c0_14] : memref<3x1xf32, #tpu.memory_space<vmem>>, vector<3x1xf32>
    %19 = vector.broadcast %18 : vector<3x1xf32> to vector<3x128xf32>
    %20 = arith.addf %17, %19 : vector<3x128xf32>
    %21 = arith.truncf %20 : vector<3x128xf32> to vector<3x128xbf16>
    %c0_15 = arith.constant 0 : index
    %c0_16 = arith.constant 0 : index
    %22 = vector.load %arg8[%c0_15, %c0_16] : memref<3x128xbf16, #tpu.memory_space<vmem>>, vector<3x128xbf16>
    tpu.vector_store %arg8[%c0_15, %c0_16], %21 {strides = array<i32>} : memref<3x128xbf16, #tpu.memory_space<vmem>>, vector<3x128xbf16>,
    return
  }
  func.func @transform_0(%arg0: i32) -> (i32, i32) {
    %c0_i32 = arith.constant 0 : i32
    %c0_i32_0 = arith.constant 0 : i32
    return %c0_i32, %arg0 : i32, i32
  }
  func.func @transform_1(%arg0: i32) -> (i32, i32) {
    %c0_i32 = arith.constant 0 : i32
    %c0_i32_0 = arith.constant 0 : i32
    %c0_i32_1 = arith.constant 0 : i32
    return %c0_i32, %c0_i32_0 : i32, i32
  }
  func.func @transform_2(%arg0: i32) -> (i32, i32) {
    %c0_i32 = arith.constant 0 : i32
    %c0_i32_0 = arith.constant 0 : i32
    %c0_i32_1 = arith.constant 0 : i32
    return %c0_i32, %c0_i32_0 : i32, i32
  }
  func.func @transform_3(%arg0: i32) -> (i32, i32) {
    %c0_i32 = arith.constant 0 : i32
    %c0_i32_0 = arith.constant 0 : i32
    %c0_i32_1 = arith.constant 0 : i32
    return %c0_i32, %c0_i32_0 : i32, i32
  }
  func.func @transform_4(%arg0: i32) -> (i32, i32) {
    %c0_i32 = arith.constant 0 : i32
    %c0_i32_0 = arith.constant 0 : i32
    %c0_i32_1 = arith.constant 0 : i32
    return %c0_i32, %c0_i32_0 : i32, i32
  }
  func.func @transform_5(%arg0: i32) -> (i32, i32) {
    %c0_i32 = arith.constant 0 : i32
    %c0_i32_0 = arith.constant 0 : i32
    %c0_i32_1 = arith.constant 0 : i32
    return %c0_i32, %c0_i32_0 : i32, i32
  }
  func.func @transform_6(%arg0: i32) -> (i32, i32) {
    %c0_i32 = arith.constant 0 : i32
    %c0_i32_0 = arith.constant 0 : i32
    %c0_i32_1 = arith.constant 0 : i32
    return %c0_i32, %c0_i32_0 : i32, i32
  }
  func.func @transform_7(%arg0: i32) -> (i32, i32) {
    %c0_i32 = arith.constant 0 : i32
    %c0_i32_0 = arith.constant 0 : i32
    return %c0_i32, %arg0 : i32, i32
  }
}

module attributes {stable_mosaic.version = 11 : i64} {
  func.func @_upsample_sigmoid_kernel(%arg0: i32, %arg1: memref<3x1x8x8xbf16, #tpu.memory_space<vmem>>, %arg2: memref<8x16xbf16, #tpu.memory_space<vmem>>, %arg3: memref<8x16xbf16, #tpu.memory_space<vmem>>, %arg4: memref<1x3x16x16xf32, #tpu.memory_space<vmem>>) attributes {dimension_semantics = [#tpu.dimension_semantics<parallel>], iteration_bounds = array<i64: 2>, scalar_prefetch = 0 : i64, scratch_operands = 0 : i64, tpu.core_type = #tpu.core_type<tc>, window_params = [{transform_indices = @transform_0, window_bounds = array<i64: 3, 1, 8, 8>}, {pipeline_mode = #tpu.pipeline_mode<synchronous>, transform_indices = @transform_1, window_bounds = array<i64: 8, 16>}, {pipeline_mode = #tpu.pipeline_mode<synchronous>, transform_indices = @transform_2, window_bounds = array<i64: 8, 16>}, {transform_indices = @transform_3, window_bounds = array<i64: 1, 3, 16, 16>}]} {
    %c0 = arith.constant 0 : index
    %c0_0 = arith.constant 0 : index
    %c0_1 = arith.constant 0 : index
    %c0_2 = arith.constant 0 : index
    %0 = vector.load %arg1[%c0, %c0_0, %c0_1, %c0_2] : memref<3x1x8x8xbf16, #tpu.memory_space<vmem>>, vector<3x1x8x8xbf16>
    %1 = vector.shape_cast %0 : vector<3x1x8x8xbf16> to vector<3x8x8xbf16>
    %c0_3 = arith.constant 0 : index
    %c0_4 = arith.constant 0 : index
    %2 = vector.load %arg2[%c0_3, %c0_4] : memref<8x16xbf16, #tpu.memory_space<vmem>>, vector<8x16xbf16>
    %c0_5 = arith.constant 0 : index
    %c0_6 = arith.constant 0 : index
    %3 = vector.load %arg3[%c0_5, %c0_6] : memref<8x16xbf16, #tpu.memory_space<vmem>>, vector<8x16xbf16>
    %4 = vector.shape_cast %1 : vector<3x8x8xbf16> to vector<24x8xbf16>
    %cst = arith.constant dense<0.000000e+00> : vector<24x16xf32>
    %5 = tpu.matmul %4, %2, %cst {dimension_numbers = #tpu.dot_dimension_numbers<[1], [0], [0], [1], [0, 0, 1, 1], [], []>} : vector<24x8xbf16>, vector<8x16xbf16>, vector<24x16xf32> -> vector<24x16xf32>
    %6 = vector.shape_cast %5 : vector<24x16xf32> to vector<3x8x16xf32>
    %7 = tpu.transpose %6, [0, 2, 1] : vector<3x8x16xf32> -> vector<3x16x8xf32>
    %8 = arith.truncf %7 : vector<3x16x8xf32> to vector<3x16x8xbf16>
    %9 = vector.shape_cast %8 : vector<3x16x8xbf16> to vector<48x8xbf16>
    %cst_7 = arith.constant dense<0.000000e+00> : vector<48x16xf32>
    %10 = tpu.matmul %9, %3, %cst_7 {dimension_numbers = #tpu.dot_dimension_numbers<[1], [0], [0], [1], [0, 0, 1, 1], [], []>} : vector<48x8xbf16>, vector<8x16xbf16>, vector<48x16xf32> -> vector<48x16xf32>
    %11 = vector.shape_cast %10 : vector<48x16xf32> to vector<3x16x16xf32>
    %12 = tpu.transpose %11, [0, 2, 1] : vector<3x16x16xf32> -> vector<3x16x16xf32>
    %13 = math.absf %12 : vector<3x16x16xf32>
    %cst_8 = arith.constant 0.000000e+00 : f32
    %14 = vector.broadcast %cst_8 : f32 to vector<3x16x16xf32>
    %15 = arith.subf %14, %13 : vector<3x16x16xf32>
    %16 = math.exp %15 : vector<3x16x16xf32>
    %cst_9 = arith.constant 0.000000e+00 : f32
    %17 = vector.broadcast %cst_9 : f32 to vector<3x16x16xf32>
    %18 = arith.cmpf oge, %12, %17 : vector<3x16x16xf32>
    %cst_10 = arith.constant 1.000000e+00 : f32
    %19 = vector.broadcast %cst_10 : f32 to vector<3x16x16xf32>
    %20 = arith.addf %19, %16 : vector<3x16x16xf32>
    %cst_11 = arith.constant 1.000000e+00 : f32
    %21 = vector.broadcast %cst_11 : f32 to vector<3x16x16xf32>
    %22 = arith.divf %21, %20 : vector<3x16x16xf32>
    %cst_12 = arith.constant 1.000000e+00 : f32
    %23 = vector.broadcast %cst_12 : f32 to vector<3x16x16xf32>
    %24 = arith.addf %23, %16 : vector<3x16x16xf32>
    %25 = arith.divf %16, %24 : vector<3x16x16xf32>
    %26 = arith.select %18, %22, %25 : vector<3x16x16xi1>, vector<3x16x16xf32>
    %27 = vector.shape_cast %26 : vector<3x16x16xf32> to vector<1x3x16x16xf32>
    %c0_13 = arith.constant 0 : index
    %c0_14 = arith.constant 0 : index
    %c0_15 = arith.constant 0 : index
    %c0_16 = arith.constant 0 : index
    %28 = vector.load %arg4[%c0_13, %c0_14, %c0_15, %c0_16] : memref<1x3x16x16xf32, #tpu.memory_space<vmem>>, vector<1x3x16x16xf32>
    tpu.vector_store %arg4[%c0_13, %c0_14, %c0_15, %c0_16], %27 {strides = array<i32>} : memref<1x3x16x16xf32, #tpu.memory_space<vmem>>, vector<1x3x16x16xf32>,
    return
  }
  func.func @transform_0(%arg0: i32) -> (i32, i32, i32, i32) {
    %c0_i32 = arith.constant 0 : i32
    %c0_i32_0 = arith.constant 0 : i32
    %c0_i32_1 = arith.constant 0 : i32
    %c0_i32_2 = arith.constant 0 : i32
    return %c0_i32, %arg0, %c0_i32_0, %c0_i32_1 : i32, i32, i32, i32
  }
  func.func @transform_1(%arg0: i32) -> (i32, i32) {
    %c0_i32 = arith.constant 0 : i32
    %c0_i32_0 = arith.constant 0 : i32
    %c0_i32_1 = arith.constant 0 : i32
    return %c0_i32, %c0_i32_0 : i32, i32
  }
  func.func @transform_2(%arg0: i32) -> (i32, i32) {
    %c0_i32 = arith.constant 0 : i32
    %c0_i32_0 = arith.constant 0 : i32
    %c0_i32_1 = arith.constant 0 : i32
    return %c0_i32, %c0_i32_0 : i32, i32
  }
  func.func @transform_3(%arg0: i32) -> (i32, i32, i32, i32) {
    %c0_i32 = arith.constant 0 : i32
    %c0_i32_0 = arith.constant 0 : i32
    %c0_i32_1 = arith.constant 0 : i32
    %c0_i32_2 = arith.constant 0 : i32
    return %arg0, %c0_i32, %c0_i32_0, %c0_i32_1 : i32, i32, i32, i32
  }
}

</mosaic_0001>

<llo_original>
// kernel: espnetv2_autoencoder_forward.6
$region0: #{espnetv2_autoencoder_forward.6}
  #allocation0 [shape = 'u32[]', space=smem, size = 0x4, offset = 0x4, fixed_abs, tag = 'smem constant byte address 0x4 - core index']
  #allocation1 [shape = 'u32[144,128]{1,0:T(1,128)}', space=vmem, size = 0x12000, scoped, tag = 'internal scratch']
  %s0 = inlined_call_operand.vmem [shape: bf16[9,128], index: 0, kind: input, shape index: {}]
  %s1 = inlined_call_operand.hbm [shape: bf16[16,9], index: 1, kind: input, shape index: {}]
  %s2 = inlined_call_operand.vmem [shape: f32[16,1], index: 2, kind: input, shape index: {}]
  %s3 = inlined_call_operand.vmem [shape: f32[16,1], index: 3, kind: input, shape index: {}]
  %s4 = inlined_call_operand.vmem [shape: f32[16,1], index: 4, kind: input, shape index: {}]
  %s5 = inlined_call_operand.vmem [shape: bf16[16,128], index: 5, kind: output, shape index: {}]
  %s6 = sld [smem:[#allocation0]]
  $region34: #{espnetv2_autoencoder_forward.6} parent=0
    _
  %s8 = ssub.s32 1, %s6
  %s9 = scalar_select 0, %s8, %s6
  $region1: #{espnetv2_autoencoder_forward.6} parent=0
    #allocation2 [shape = 'u8[4096]{0}', space=vmem, size = 0x1000, scoped, tag = 'input window, operand 1, single buffered']
    #allocation3 [shape = 's32[1]{0}', space=sflag, size = 0x4, scoped, tag = 'scoped memory for espnetv2_autoencoder_forward.6']
    %10 = vsyncpa [#allocation3], 0
    // Predicated region
    $region2: #{espnetv2_autoencoder_forward.6} parent=1 // pred_check
      _
    $region3: #{espnetv2_autoencoder_forward.6} parent=1 // pred_check_branch
      %12 = sbr.rel (0) target = $region5
    $region4: #{espnetv2_autoencoder_forward.6} parent=1 // pred_region
      _
    $region5: #{espnetv2_autoencoder_forward.6} parent=1 // pred_fallthru
      _
    // Predicated region
    $region6: #{espnetv2_autoencoder_forward.6} parent=1 // pred_check
      _
    $region7: #{espnetv2_autoencoder_forward.6} parent=1 // pred_check_branch
      %14 = sbr.rel (0) target = $region9
    $region8: #{espnetv2_autoencoder_forward.6} parent=1 // pred_region
      %s16 = ssub.s32 128, 128
      %17 = vsyncadd [#allocation3], %s16
      %s18 = sshll.u32 [#allocation2], 4
      %s19 = int_to_ptr.vmem [resolvable:$true] %s18
      %24 = dma.hbm_to_vmem [thread:$0]  %s1, 128, %s19, [#allocation3], 64, 64, 4
    $region9: #{espnetv2_autoencoder_forward.6} parent=1 // pred_fallthru
      _
    // Predicated region
    $region10: #{espnetv2_autoencoder_forward.6} parent=1 // pred_check
      _
    $region11: #{espnetv2_autoencoder_forward.6} parent=1 // pred_check_branch
      %26 = sbr.rel (0) target = $region13
    $region12: #{espnetv2_autoencoder_forward.6} parent=1 // pred_region
      _
    $region13: #{espnetv2_autoencoder_forward.6} parent=1 // pred_fallthru
      _
    // Predicated region
    $region14: #{espnetv2_autoencoder_forward.6} parent=1 // pred_check
      _
    $region15: #{espnetv2_autoencoder_forward.6} parent=1 // pred_check_branch
      %28 = sbr.rel (0) target = $region17
    $region16: #{espnetv2_autoencoder_forward.6} parent=1 // pred_region
      _
    $region17: #{espnetv2_autoencoder_forward.6} parent=1 // pred_fallthru
      _
    // Predicated region
    $region18: #{espnetv2_autoencoder_forward.6} parent=1 // pred_check
      _
    $region19: #{espnetv2_autoencoder_forward.6} parent=1 // pred_check_branch
      %30 = sbr.rel (0) target = $region21
    $region20: #{espnetv2_autoencoder_forward.6} parent=1 // pred_region
      _
    $region21: #{espnetv2_autoencoder_forward.6} parent=1 // pred_fallthru
      _
    // Predicated region
    $region22: #{espnetv2_autoencoder_forward.6} parent=1 // pred_check
      _
    $region23: #{espnetv2_autoencoder_forward.6} parent=1 // pred_check_branch
      %32 = sbr.rel (0) target = $region25
    $region24: #{espnetv2_autoencoder_forward.6} parent=1 // pred_region
      %33 = dma.done [#allocation3], 128
    $region25: #{espnetv2_autoencoder_forward.6} parent=1 // pred_fallthru
      _
    %v35 = vld [vmem:[#allocation2] sm:$0xf]
    %v36 = vld [vmem:[#allocation2 + $0x4] sm:$0xf]
    %v37 = vld [vmem:[%s0] sm:$0xf]
    %v38 = vld [vmem:[%s0 + $0x4] sm:$0x1]
    %v41 = vunpack.c.l.b16 %v35
    %v42 = vunpack.c.l.b16 %v36
    %v43 = vpack.c.b16 %v42, %v41
    %v46 = vunpack.c.l.b16 %v37
    %v47 = vunpack.c.l.b16 %v38
    %v48 = vpack.c.b16 %v47, %v46
    %vm49 = vcmask 72704
    %v51 = vsel %vm49, %v43, 0
    %vm53 = vcmask 1043456
    %vm54 = vcmask 1044480
    %v55 = vsel %vm53, 4294967295, 65535
    %v56 = vsel %vm54, %v55, 0
    %v58 = vand.u32 %v48, %v56
    %60 = vmatprep.subr.bf16.mxu0 0
    %61 = vmatpush1.bf16.msra.mxu0 %v58
    %62 = vmatprep.subr.bf16.mxu0 0
    %63 = vmatpush1.bf16.msra.mxu0 0
    %64 = vmatprep.subr.bf16.mxu0 0
    %65 = vmatpush1.bf16.msra.mxu0 0
    %66 = vmatprep.subr.bf16.mxu0 0
    %67 = vmatpush1.bf16.msra.mxu0 0
    %68 = vmatprep.subr.bf16.mxu0 0
    %69 = vmatpush1.bf16.msra.mxu0 0
    %70 = vmatprep.subr.bf16.mxu0 0
    %71 = vmatpush1.bf16.msra.mxu0 0
    %72 = vmatprep.subr.bf16.mxu0 0
    %73 = vmatpush1.bf16.msra.mxu0 0
    %74 = vmatprep.subr.bf16.mxu0 0
    %75 = vmatpush1.bf16.msra.mxu0 0
    %76 = vmatprep.subr.bf16.mxu0 0
    %77 = vmatpush1.bf16.msra.mxu0 0
    %78 = vmatprep.subr.bf16.mxu0 0
    %79 = vmatpush1.bf16.msra.mxu0 0
    %80 = vmatprep.subr.bf16.mxu0 0
    %81 = vmatpush1.bf16.msra.mxu0 0
    %82 = vmatprep.subr.bf16.mxu0 0
    %83 = vmatpush1.bf16.msra.mxu0 0
    %84 = vmatprep.subr.bf16.mxu0 0
    %85 = vmatpush1.bf16.msra.mxu0 0
    %86 = vmatprep.subr.bf16.mxu0 0
    %87 = vmatpush1.bf16.msra.mxu0 0
    %88 = vmatprep.subr.bf16.mxu0 0
    %89 = vmatpush1.bf16.msra.mxu0 0
    %90 = vmatprep.subr.bf16.mxu0 0
    %91 = vmatpush1.bf16.msra.mxu0 0
    %92 = vmatprep.mubr.bf16.mxu0 0
    %93 = vmatmul.mubr.bf16.gmra.mrb[0].mxu0 %v51
    %v94 = vpop.f32.mrb[0].mxu0
    %v95 = vadd.f32 0.0, %v94
    %v96 = vpop.f32.mrb[0].mxu0
    %v97 = vpop.f32.mrb[0].mxu0
    %v98 = vadd.f32 0.0, %v97
    %v99 = vpop.f32.mrb[0].mxu0
    %100 = vdwg.mxu0
    %v101 = vld [vmem:[%s2] sm:$0xff]
    %v102 = vld [vmem:[%s2 + $0x8] sm:$0xff]
    %104 = vset.pattern.permute.xlu0 0
    %105 = vperm.xlu0 %104, %v101
    %v106 = vpop.permute.xlu0 %105
    %109 = vset.pattern.permute.xlu0 0
    %110 = vperm.xlu0 %109, %v102
    %v111 = vpop.permute.xlu0 %110
    %v113 = vmul.f32 %v95, %v106
    %v114 = vmul.f32 %v98, %v111
    %v115 = vld [vmem:[%s3] sm:$0xff]
    %v116 = vld [vmem:[%s3 + $0x8] sm:$0xff]
    %118 = vset.pattern.permute.xlu0 0
    %119 = vperm.xlu0 %118, %v115
    %v120 = vpop.permute.xlu0 %119
    %123 = vset.pattern.permute.xlu0 0
    %124 = vperm.xlu0 %123, %v116
    %v125 = vpop.permute.xlu0 %124
    %v127 = vadd.f32 %v113, %v120
    %v128 = vadd.f32 %v114, %v125
    %vm129 = vcmp.ge.f32.partialorder %v127, 0.0
    %vm130 = vcmp.ge.f32.partialorder %v128, 0.0
    %v131 = vld [vmem:[%s4] sm:$0xff]
    %v132 = vld [vmem:[%s4 + $0x8] sm:$0xff]
    %134 = vset.pattern.permute.xlu0 0
    %135 = vperm.xlu0 %134, %v131
    %v136 = vpop.permute.xlu0 %135
    %139 = vset.pattern.permute.xlu0 0
    %140 = vperm.xlu0 %139, %v132
    %v141 = vpop.permute.xlu0 %140
    %v143 = vmul.f32 %v136, %v127
    %v144 = vmul.f32 %v141, %v128
    %v145 = vsel %vm129, %v127, %v143
    %v146 = vsel %vm130, %v128, %v144
    %v147 = vpack.c.bf16 %v146, %v145
    %v149 = vunpack.c.l.b16 %v147
    %v150 = vunpack.c.h.b16 %v147
    %v151 = vpack.c.b16 %v149, %v149
    %v152 = vpack.c.b16 %v150, %v150
    %155 = vst [vmem:[%s5] sm:$0xf] %v151
    %156 = vst [vmem:[%s5 + $0x4] sm:$0xf] %v152
    // Predicated region
    $region26: #{espnetv2_autoencoder_forward.6} parent=1 // pred_check
      _
    $region27: #{espnetv2_autoencoder_forward.6} parent=1 // pred_check_branch
      %158 = sbr.rel (0) target = $region29
    $region28: #{espnetv2_autoencoder_forward.6} parent=1 // pred_region
      _
    $region29: #{espnetv2_autoencoder_forward.6} parent=1 // pred_fallthru
      _
    // Predicated region
    $region30: #{espnetv2_autoencoder_forward.6} parent=1 // pred_check
      _
    $region31: #{espnetv2_autoencoder_forward.6} parent=1 // pred_check_branch
      %160 = sbr.rel (0) target = $region33
    $region32: #{espnetv2_autoencoder_forward.6} parent=1 // pred_region
      _
    $region33: #{espnetv2_autoencoder_forward.6} parent=1 // pred_fallthru
      _
    %161 = vsyncpa [#allocation3], 1

// kernel: espnetv2_autoencoder_forward.7
$region0: #{espnetv2_autoencoder_forward.7}
  #allocation0 [shape = 'u32[]', space=smem, size = 0x4, offset = 0x4, fixed_abs, tag = 'smem constant byte address 0x4 - core index']
  #allocation1 [shape = 'u32[144,128]{1,0:T(1,128)}', space=vmem, size = 0x12000, scoped, tag = 'internal scratch']
  %s0 = inlined_call_operand.vmem [shape: bf16[144,128], index: 0, kind: input, shape index: {}]
  %s1 = inlined_call_operand.vmem [shape: bf16[32,144], index: 1, kind: input, shape index: {}]
  %s2 = inlined_call_operand.vmem [shape: f32[32,1], index: 2, kind: input, shape index: {}]
  %s3 = inlined_call_operand.vmem [shape: f32[32,1], index: 3, kind: input, shape index: {}]
  %s4 = inlined_call_operand.vmem [shape: f32[32,1], index: 4, kind: input, shape index: {}]
  %s5 = inlined_call_operand.vmem [shape: bf16[32,128], index: 5, kind: output, shape index: {}]
  %s6 = sld [smem:[#allocation0]]
  $region30: #{espnetv2_autoencoder_forward.7} parent=0
    _
  %s8 = ssub.s32 1, %s6
  %s9 = scalar_select 0, %s8, %s6
  // Predicated region
  $region2: #{espnetv2_autoencoder_forward.7} parent=0 // pred_check
    _
  $region3: #{espnetv2_autoencoder_forward.7} parent=0 // pred_check_branch
    %11 = sbr.rel (0) target = $region5
  $region4: #{espnetv2_autoencoder_forward.7} parent=0 // pred_region
    _
  $region5: #{espnetv2_autoencoder_forward.7} parent=0 // pred_fallthru
    _
  // Predicated region
  $region6: #{espnetv2_autoencoder_forward.7} parent=0 // pred_check
    _
  $region7: #{espnetv2_autoencoder_forward.7} parent=0 // pred_check_branch
    %13 = sbr.rel (0) target = $region9
  $region8: #{espnetv2_autoencoder_forward.7} parent=0 // pred_region
    _
  $region9: #{espnetv2_autoencoder_forward.7} parent=0 // pred_fallthru
    _
  // Predicated region
  $region10: #{espnetv2_autoencoder_forward.7} parent=0 // pred_check
    _
  $region11: #{espnetv2_autoencoder_forward.7} parent=0 // pred_check_branch
    %15 = sbr.rel (0) target = $region13
  $region12: #{espnetv2_autoencoder_forward.7} parent=0 // pred_region
    _
  $region13: #{espnetv2_autoencoder_forward.7} parent=0 // pred_fallthru
    _
  // Predicated region
  $region14: #{espnetv2_autoencoder_forward.7} parent=0 // pred_check
    _
  $region15: #{espnetv2_autoencoder_forward.7} parent=0 // pred_check_branch
    %17 = sbr.rel (0) target = $region17
  $region16: #{espnetv2_autoencoder_forward.7} parent=0 // pred_region
    _
  $region17: #{espnetv2_autoencoder_forward.7} parent=0 // pred_fallthru
    _
  // Predicated region
  $region18: #{espnetv2_autoencoder_forward.7} parent=0 // pred_check
    _
  $region19: #{espnetv2_autoencoder_forward.7} parent=0 // pred_check_branch
    %19 = sbr.rel (0) target = $region21
  $region20: #{espnetv2_autoencoder_forward.7} parent=0 // pred_region
    _
  $region21: #{espnetv2_autoencoder_forward.7} parent=0 // pred_fallthru
    _
  %v21 = vld [vmem:[%s1] sm:$0xff]
  %v22 = vld [vmem:[%s1 + $0x8] sm:$0xff]
  %v23 = vld [vmem:[%s1 + $0x10] sm:$0xff]
  %v24 = vld [vmem:[%s1 + $0x18] sm:$0xff]
  %v25 = vld [vmem:[%s0] sm:$0xf]
  %v26 = vld [vmem:[%s0 + $0x4] sm:$0xf]
  %v27 = vld [vmem:[%s0 + $0x8] sm:$0xf]
  %v28 = vld [vmem:[%s0 + $0xc] sm:$0xf]
  %v29 = vld [vmem:[%s0 + $0x10] sm:$0xf]
  %v30 = vld [vmem:[%s0 + $0x14] sm:$0xf]
  %v31 = vld [vmem:[%s0 + $0x18] sm:$0xf]
  %v32 = vld [vmem:[%s0 + $0x1c] sm:$0xf]
  %v33 = vld [vmem:[%s0 + $0x20] sm:$0xf]
  %v34 = vld [vmem:[%s0 + $0x24] sm:$0xf]
  %v35 = vld [vmem:[%s0 + $0x28] sm:$0xf]
  %v36 = vld [vmem:[%s0 + $0x2c] sm:$0xf]
  %v37 = vld [vmem:[%s0 + $0x30] sm:$0xf]
  %v38 = vld [vmem:[%s0 + $0x34] sm:$0xf]
  %v39 = vld [vmem:[%s0 + $0x38] sm:$0xf]
  %v40 = vld [vmem:[%s0 + $0x3c] sm:$0xf]
  %v41 = vld [vmem:[%s0 + $0x40] sm:$0xf]
  %v42 = vld [vmem:[%s0 + $0x44] sm:$0xf]
  %v47 = vunpack.c.l.b16 %v21
  %v48 = vunpack.c.h.b16 %v21
  %v49 = vunpack.c.l.b16 %v22
  %v50 = vunpack.c.h.b16 %v22
  %v51 = vunpack.c.l.b16 %v23
  %v52 = vunpack.c.h.b16 %v23
  %v53 = vunpack.c.l.b16 %v24
  %v54 = vunpack.c.h.b16 %v24
  %v55 = vpack.c.b16 %v49, %v47
  %v56 = vpack.c.b16 %v50, %v48
  %v57 = vpack.c.b16 %v53, %v51
  %v58 = vpack.c.b16 %v54, %v52
  %v79 = vunpack.c.l.b16 %v25
  %v80 = vunpack.c.l.b16 %v26
  %v81 = vunpack.c.l.b16 %v27
  %v82 = vunpack.c.l.b16 %v28
  %v83 = vunpack.c.l.b16 %v29
  %v84 = vunpack.c.l.b16 %v30
  %v85 = vunpack.c.l.b16 %v31
  %v86 = vunpack.c.l.b16 %v32
  %v87 = vunpack.c.l.b16 %v33
  %v88 = vunpack.c.l.b16 %v34
  %v89 = vunpack.c.l.b16 %v35
  %v90 = vunpack.c.l.b16 %v36
  %v91 = vunpack.c.l.b16 %v37
  %v92 = vunpack.c.l.b16 %v38
  %v93 = vunpack.c.l.b16 %v39
  %v94 = vunpack.c.l.b16 %v40
  %v95 = vunpack.c.l.b16 %v41
  %v96 = vunpack.c.l.b16 %v42
  %v97 = vpack.c.b16 %v80, %v79
  %v98 = vpack.c.b16 %v82, %v81
  %v99 = vpack.c.b16 %v84, %v83
  %v100 = vpack.c.b16 %v86, %v85
  %v101 = vpack.c.b16 %v88, %v87
  %v102 = vpack.c.b16 %v90, %v89
  %v103 = vpack.c.b16 %v92, %v91
  %v104 = vpack.c.b16 %v94, %v93
  %v105 = vpack.c.b16 %v96, %v95
  %vm115 = vcmask 130048
  %v117 = vsel %vm115, %v56, 0
  %v120 = vsel %vm115, %v58, 0
  %122 = vmatprep.subr.bf16.mxu0 0
  %123 = vmatpush1.bf16.msra.mxu0 %v97
  %124 = vmatprep.subr.bf16.mxu0 0
  %125 = vmatpush1.bf16.msra.mxu0 %v98
  %126 = vmatprep.subr.bf16.mxu0 0
  %127 = vmatpush1.bf16.msra.mxu0 %v99
  %128 = vmatprep.subr.bf16.mxu0 0
  %129 = vmatpush1.bf16.msra.mxu0 %v100
  %130 = vmatprep.subr.bf16.mxu0 0
  %131 = vmatpush1.bf16.msra.mxu0 %v101
  %132 = vmatprep.subr.bf16.mxu0 0
  %133 = vmatpush1.bf16.msra.mxu0 %v102
  %134 = vmatprep.subr.bf16.mxu0 0
  %135 = vmatpush1.bf16.msra.mxu0 %v103
  %136 = vmatprep.subr.bf16.mxu0 0
  %137 = vmatpush1.bf16.msra.mxu0 %v104
  %138 = vmatprep.subr.bf16.mxu0 0
  %139 = vmatpush1.bf16.msra.mxu0 %v105
  %140 = vmatprep.subr.bf16.mxu0 0
  %141 = vmatpush1.bf16.msra.mxu0 0
  %142 = vmatprep.subr.bf16.mxu0 0
  %143 = vmatpush1.bf16.msra.mxu0 0
  %144 = vmatprep.subr.bf16.mxu0 0
  %145 = vmatpush1.bf16.msra.mxu0 0
  %146 = vmatprep.subr.bf16.mxu0 0
  %147 = vmatpush1.bf16.msra.mxu0 0
  %148 = vmatprep.subr.bf16.mxu0 0
  %149 = vmatpush1.bf16.msra.mxu0 0
  %150 = vmatprep.subr.bf16.mxu0 0
  %151 = vmatpush1.bf16.msra.mxu0 0
  %152 = vmatprep.subr.bf16.mxu0 0
  %153 = vmatpush1.bf16.msra.mxu0 0
  %154 = vmatprep.mubr.bf16.mxu0 %v117
  %155 = vmatmul.mubr.bf16.gmra.mrb[0].mxu0 %v55
  %v156 = vpop.f32.mrb[0].mxu0
  %v157 = vadd.f32 0.0, %v156
  %v158 = vpop.f32.mrb[0].mxu0
  %v159 = vpop.f32.mrb[0].mxu0
  %v160 = vadd.f32 0.0, %v159
  %v161 = vpop.f32.mrb[0].mxu0
  %162 = vmatprep.mubr.bf16.mxu0 %v120
  %163 = vmatmul.mubr.bf16.gmra.mrb[0].mxu0 %v57
  %v164 = vpop.f32.mrb[0].mxu0
  %v165 = vadd.f32 0.0, %v164
  %v166 = vpop.f32.mrb[0].mxu0
  %v167 = vpop.f32.mrb[0].mxu0
  %v168 = vadd.f32 0.0, %v167
  %v169 = vpop.f32.mrb[0].mxu0
  %170 = vdwg.mxu0
  %v171 = vld [vmem:[%s2] sm:$0xff]
  %v172 = vld [vmem:[%s2 + $0x8] sm:$0xff]
  %v173 = vld [vmem:[%s2 + $0x10] sm:$0xff]
  %v174 = vld [vmem:[%s2 + $0x18] sm:$0xff]
  %176 = vset.pattern.permute.xlu0 0
  %177 = vperm.xlu0 %176, %v171
  %v178 = vpop.permute.xlu0 %177
  %181 = vset.pattern.permute.xlu0 0
  %182 = vperm.xlu0 %181, %v172
  %v183 = vpop.permute.xlu0 %182
  %186 = vset.pattern.permute.xlu0 0
  %187 = vperm.xlu0 %186, %v173
  %v188 = vpop.permute.xlu0 %187
  %191 = vset.pattern.permute.xlu0 0
  %192 = vperm.xlu0 %191, %v174
  %v193 = vpop.permute.xlu0 %192
  %v195 = vmul.f32 %v157, %v178
  %v196 = vmul.f32 %v160, %v183
  %v197 = vmul.f32 %v165, %v188
  %v198 = vmul.f32 %v168, %v193
  %v199 = vld [vmem:[%s3] sm:$0xff]
  %v200 = vld [vmem:[%s3 + $0x8] sm:$0xff]
  %v201 = vld [vmem:[%s3 + $0x10] sm:$0xff]
  %v202 = vld [vmem:[%s3 + $0x18] sm:$0xff]
  %204 = vset.pattern.permute.xlu0 0
  %205 = vperm.xlu0 %204, %v199
  %v206 = vpop.permute.xlu0 %205
  %209 = vset.pattern.permute.xlu0 0
  %210 = vperm.xlu0 %209, %v200
  %v211 = vpop.permute.xlu0 %210
  %214 = vset.pattern.permute.xlu0 0
  %215 = vperm.xlu0 %214, %v201
  %v216 = vpop.permute.xlu0 %215
  %219 = vset.pattern.permute.xlu0 0
  %220 = vperm.xlu0 %219, %v202
  %v221 = vpop.permute.xlu0 %220
  %v223 = vadd.f32 %v195, %v206
  %v224 = vadd.f32 %v196, %v211
  %v225 = vadd.f32 %v197, %v216
  %v226 = vadd.f32 %v198, %v221
  %vm227 = vcmp.ge.f32.partialorder %v223, 0.0
  %vm228 = vcmp.ge.f32.partialorder %v224, 0.0
  %vm229 = vcmp.ge.f32.partialorder %v225, 0.0
  %vm230 = vcmp.ge.f32.partialorder %v226, 0.0
  %v231 = vld [vmem:[%s4] sm:$0xff]
  %v232 = vld [vmem:[%s4 + $0x8] sm:$0xff]
  %v233 = vld [vmem:[%s4 + $0x10] sm:$0xff]
  %v234 = vld [vmem:[%s4 + $0x18] sm:$0xff]
  %236 = vset.pattern.permute.xlu0 0
  %237 = vperm.xlu0 %236, %v231
  %v238 = vpop.permute.xlu0 %237
  %241 = vset.pattern.permute.xlu0 0
  %242 = vperm.xlu0 %241, %v232
  %v243 = vpop.permute.xlu0 %242
  %246 = vset.pattern.permute.xlu0 0
  %247 = vperm.xlu0 %246, %v233
  %v248 = vpop.permute.xlu0 %247
  %251 = vset.pattern.permute.xlu0 0
  %252 = vperm.xlu0 %251, %v234
  %v253 = vpop.permute.xlu0 %252
  %v255 = vmul.f32 %v238, %v223
  %v256 = vmul.f32 %v243, %v224
  %v257 = vmul.f32 %v248, %v225
  %v258 = vmul.f32 %v253, %v226
  %v259 = vsel %vm227, %v223, %v255
  %v260 = vsel %vm228, %v224, %v256
  %v261 = vsel %vm229, %v225, %v257
  %v262 = vsel %vm230, %v226, %v258
  %v263 = vpack.c.bf16 %v260, %v259
  %v264 = vpack.c.bf16 %v262, %v261
  %v267 = vunpack.c.l.b16 %v263
  %v268 = vunpack.c.h.b16 %v263
  %v269 = vunpack.c.l.b16 %v264
  %v270 = vunpack.c.h.b16 %v264
  %v271 = vpack.c.b16 %v267, %v267
  %v272 = vpack.c.b16 %v268, %v268
  %v273 = vpack.c.b16 %v269, %v269
  %v274 = vpack.c.b16 %v270, %v270
  %279 = vst [vmem:[%s5] sm:$0xf] %v271
  %280 = vst [vmem:[%s5 + $0x4] sm:$0xf] %v272
  %281 = vst [vmem:[%s5 + $0x8] sm:$0xf] %v273
  %282 = vst [vmem:[%s5 + $0xc] sm:$0xf] %v274
  // Predicated region
  $region22: #{espnetv2_autoencoder_forward.7} parent=0 // pred_check
    _
  $region23: #{espnetv2_autoencoder_forward.7} parent=0 // pred_check_branch
    %284 = sbr.rel (0) target = $region25
  $region24: #{espnetv2_autoencoder_forward.7} parent=0 // pred_region
    _
  $region25: #{espnetv2_autoencoder_forward.7} parent=0 // pred_fallthru
    _
  // Predicated region
  $region26: #{espnetv2_autoencoder_forward.7} parent=0 // pred_check
    _
  $region27: #{espnetv2_autoencoder_forward.7} parent=0 // pred_check_branch
    %286 = sbr.rel (0) target = $region29
  $region28: #{espnetv2_autoencoder_forward.7} parent=0 // pred_region
    _
  $region29: #{espnetv2_autoencoder_forward.7} parent=0 // pred_fallthru
    _

// kernel: espnetv2_autoencoder_forward.8
$region0: #{espnetv2_autoencoder_forward.8}
  #allocation0 [shape = 'u32[]', space=smem, size = 0x4, offset = 0x4, fixed_abs, tag = 'smem constant byte address 0x4 - core index']
  #allocation1 [shape = 'u32[144,128]{1,0:T(1,128)}', space=vmem, size = 0x12000, scoped, tag = 'internal scratch']
  %s0 = inlined_call_operand.vmem [shape: bf16[288,128], index: 0, kind: input, shape index: {}]
  %s1 = inlined_call_operand.vmem [shape: bf16[32,288], index: 1, kind: input, shape index: {}]
  %s2 = inlined_call_operand.vmem [shape: f32[32,1], index: 2, kind: input, shape index: {}]
  %s3 = inlined_call_operand.vmem [shape: f32[32,1], index: 3, kind: input, shape index: {}]
  %s4 = inlined_call_operand.vmem [shape: f32[32,1], index: 4, kind: input, shape index: {}]
  %s5 = inlined_call_operand.vmem [shape: bf16[32,128], index: 5, kind: output, shape index: {}]
  %s6 = sld [smem:[#allocation0]]
  $region30: #{espnetv2_autoencoder_forward.8} parent=0
    _
  %s8 = ssub.s32 1, %s6
  %s9 = scalar_select 0, %s8, %s6
  // Predicated region
  $region2: #{espnetv2_autoencoder_forward.8} parent=0 // pred_check
    _
  $region3: #{espnetv2_autoencoder_forward.8} parent=0 // pred_check_branch
    %11 = sbr.rel (0) target = $region5
  $region4: #{espnetv2_autoencoder_forward.8} parent=0 // pred_region
    _
  $region5: #{espnetv2_autoencoder_forward.8} parent=0 // pred_fallthru
    _
  // Predicated region
  $region6: #{espnetv2_autoencoder_forward.8} parent=0 // pred_check
    _
  $region7: #{espnetv2_autoencoder_forward.8} parent=0 // pred_check_branch
    %13 = sbr.rel (0) target = $region9
  $region8: #{espnetv2_autoencoder_forward.8} parent=0 // pred_region
    _
  $region9: #{espnetv2_autoencoder_forward.8} parent=0 // pred_fallthru
    _
  // Predicated region
  $region10: #{espnetv2_autoencoder_forward.8} parent=0 // pred_check
    _
  $region11: #{espnetv2_autoencoder_forward.8} parent=0 // pred_check_branch
    %15 = sbr.rel (0) target = $region13
  $region12: #{espnetv2_autoencoder_forward.8} parent=0 // pred_region
    _
  $region13: #{espnetv2_autoencoder_forward.8} parent=0 // pred_fallthru
    _
  // Predicated region
  $region14: #{espnetv2_autoencoder_forward.8} parent=0 // pred_check
    _
  $region15: #{espnetv2_autoencoder_forward.8} parent=0 // pred_check_branch
    %17 = sbr.rel (0) target = $region17
  $region16: #{espnetv2_autoencoder_forward.8} parent=0 // pred_region
    _
  $region17: #{espnetv2_autoencoder_forward.8} parent=0 // pred_fallthru
    _
  // Predicated region
  $region18: #{espnetv2_autoencoder_forward.8} parent=0 // pred_check
    _
  $region19: #{espnetv2_autoencoder_forward.8} parent=0 // pred_check_branch
    %19 = sbr.rel (0) target = $region21
  $region20: #{espnetv2_autoencoder_forward.8} parent=0 // pred_region
    _
  $region21: #{espnetv2_autoencoder_forward.8} parent=0 // pred_fallthru
    _
  %v21 = vld [vmem:[%s1] sm:$0xff]
  %v22 = vld [vmem:[%s1 + $0x8] sm:$0xf]
  %v23 = vld [vmem:[%s1 + $0xc] sm:$0xff]
  %v24 = vld [vmem:[%s1 + $0x14] sm:$0xf]
  %v25 = vld [vmem:[%s1 + $0x18] sm:$0xff]
  %v26 = vld [vmem:[%s1 + $0x20] sm:$0xf]
  %v27 = vld [vmem:[%s1 + $0x24] sm:$0xff]
  %v28 = vld [vmem:[%s1 + $0x2c] sm:$0xf]
  %v29 = vld [vmem:[%s0] sm:$0xf]
  %v30 = vld [vmem:[%s0 + $0x4] sm:$0xf]
  %v31 = vld [vmem:[%s0 + $0x8] sm:$0xf]
  %v32 = vld [vmem:[%s0 + $0xc] sm:$0xf]
  %v33 = vld [vmem:[%s0 + $0x10] sm:$0xf]
  %v34 = vld [vmem:[%s0 + $0x14] sm:$0xf]
  %v35 = vld [vmem:[%s0 + $0x18] sm:$0xf]
  %v36 = vld [vmem:[%s0 + $0x1c] sm:$0xf]
  %v37 = vld [vmem:[%s0 + $0x20] sm:$0xf]
  %v38 = vld [vmem:[%s0 + $0x24] sm:$0xf]
  %v39 = vld [vmem:[%s0 + $0x28] sm:$0xf]
  %v40 = vld [vmem:[%s0 + $0x2c] sm:$0xf]
  %v41 = vld [vmem:[%s0 + $0x30] sm:$0xf]
  %v42 = vld [vmem:[%s0 + $0x34] sm:$0xf]
  %v43 = vld [vmem:[%s0 + $0x38] sm:$0xf]
  %v44 = vld [vmem:[%s0 + $0x3c] sm:$0xf]
  %v45 = vld [vmem:[%s0 + $0x40] sm:$0xf]
  %v46 = vld [vmem:[%s0 + $0x44] sm:$0xf]
  %v47 = vld [vmem:[%s0 + $0x48] sm:$0xf]
  %v48 = vld [vmem:[%s0 + $0x4c] sm:$0xf]
  %v49 = vld [vmem:[%s0 + $0x50] sm:$0xf]
  %v50 = vld [vmem:[%s0 + $0x54] sm:$0xf]
  %v51 = vld [vmem:[%s0 + $0x58] sm:$0xf]
  %v52 = vld [vmem:[%s0 + $0x5c] sm:$0xf]
  %v53 = vld [vmem:[%s0 + $0x60] sm:$0xf]
  %v54 = vld [vmem:[%s0 + $0x64] sm:$0xf]
  %v55 = vld [vmem:[%s0 + $0x68] sm:$0xf]
  %v56 = vld [vmem:[%s0 + $0x6c] sm:$0xf]
  %v57 = vld [vmem:[%s0 + $0x70] sm:$0xf]
  %v58 = vld [vmem:[%s0 + $0x74] sm:$0xf]
  %v59 = vld [vmem:[%s0 + $0x78] sm:$0xf]
  %v60 = vld [vmem:[%s0 + $0x7c] sm:$0xf]
  %v61 = vld [vmem:[%s0 + $0x80] sm:$0xf]
  %v62 = vld [vmem:[%s0 + $0x84] sm:$0xf]
  %v63 = vld [vmem:[%s0 + $0x88] sm:$0xf]
  %v64 = vld [vmem:[%s0 + $0x8c] sm:$0xf]
  %v73 = vunpack.c.l.b16 %v21
  %v74 = vunpack.c.h.b16 %v21
  %v75 = vunpack.c.l.b16 %v22
  %v76 = vunpack.c.l.b16 %v23
  %v77 = vunpack.c.h.b16 %v23
  %v78 = vunpack.c.l.b16 %v24
  %v79 = vunpack.c.l.b16 %v25
  %v80 = vunpack.c.h.b16 %v25
  %v81 = vunpack.c.l.b16 %v26
  %v82 = vunpack.c.l.b16 %v27
  %v83 = vunpack.c.h.b16 %v27
  %v84 = vunpack.c.l.b16 %v28
  %v85 = vpack.c.b16 %v76, %v73
  %v86 = vpack.c.b16 %v77, %v74
  %v87 = vpack.c.b16 %v78, %v75
  %v88 = vpack.c.b16 %v82, %v79
  %v89 = vpack.c.b16 %v83, %v80
  %v90 = vpack.c.b16 %v84, %v81
  %v131 = vunpack.c.l.b16 %v29
  %v132 = vunpack.c.l.b16 %v30
  %v133 = vunpack.c.l.b16 %v31
  %v134 = vunpack.c.l.b16 %v32
  %v135 = vunpack.c.l.b16 %v33
  %v136 = vunpack.c.l.b16 %v34
  %v137 = vunpack.c.l.b16 %v35
  %v138 = vunpack.c.l.b16 %v36
  %v139 = vunpack.c.l.b16 %v37
  %v140 = vunpack.c.l.b16 %v38
  %v141 = vunpack.c.l.b16 %v39
  %v142 = vunpack.c.l.b16 %v40
  %v143 = vunpack.c.l.b16 %v41
  %v144 = vunpack.c.l.b16 %v42
  %v145 = vunpack.c.l.b16 %v43
  %v146 = vunpack.c.l.b16 %v44
  %v147 = vunpack.c.l.b16 %v45
  %v148 = vunpack.c.l.b16 %v46
  %v149 = vunpack.c.l.b16 %v47
  %v150 = vunpack.c.l.b16 %v48
  %v151 = vunpack.c.l.b16 %v49
  %v152 = vunpack.c.l.b16 %v50
  %v153 = vunpack.c.l.b16 %v51
  %v154 = vunpack.c.l.b16 %v52
  %v155 = vunpack.c.l.b16 %v53
  %v156 = vunpack.c.l.b16 %v54
  %v157 = vunpack.c.l.b16 %v55
  %v158 = vunpack.c.l.b16 %v56
  %v159 = vunpack.c.l.b16 %v57
  %v160 = vunpack.c.l.b16 %v58
  %v161 = vunpack.c.l.b16 %v59
  %v162 = vunpack.c.l.b16 %v60
  %v163 = vunpack.c.l.b16 %v61
  %v164 = vunpack.c.l.b16 %v62
  %v165 = vunpack.c.l.b16 %v63
  %v166 = vunpack.c.l.b16 %v64
  %v167 = vpack.c.b16 %v132, %v131
  %v168 = vpack.c.b16 %v134, %v133
  %v169 = vpack.c.b16 %v136, %v135
  %v170 = vpack.c.b16 %v138, %v137
  %v171 = vpack.c.b16 %v140, %v139
  %v172 = vpack.c.b16 %v142, %v141
  %v173 = vpack.c.b16 %v144, %v143
  %v174 = vpack.c.b16 %v146, %v145
  %v175 = vpack.c.b16 %v148, %v147
  %v176 = vpack.c.b16 %v150, %v149
  %v177 = vpack.c.b16 %v152, %v151
  %v178 = vpack.c.b16 %v154, %v153
  %v179 = vpack.c.b16 %v156, %v155
  %v180 = vpack.c.b16 %v158, %v157
  %v181 = vpack.c.b16 %v160, %v159
  %v182 = vpack.c.b16 %v162, %v161
  %v183 = vpack.c.b16 %v164, %v163
  %v184 = vpack.c.b16 %v166, %v165
  %vm203 = vcmask 261120
  %v205 = vsel %vm203, %v87, 0
  %v208 = vsel %vm203, %v90, 0
  %210 = vmatprep.subr.bf16.mxu0 0
  %211 = vmatpush1.bf16.msra.mxu0 %v167
  %212 = vmatprep.subr.bf16.mxu0 0
  %213 = vmatpush1.bf16.msra.mxu0 %v168
  %214 = vmatprep.subr.bf16.mxu0 0
  %215 = vmatpush1.bf16.msra.mxu0 %v169
  %216 = vmatprep.subr.bf16.mxu0 0
  %217 = vmatpush1.bf16.msra.mxu0 %v170
  %218 = vmatprep.subr.bf16.mxu0 0
  %219 = vmatpush1.bf16.msra.mxu0 %v171
  %220 = vmatprep.subr.bf16.mxu0 0
  %221 = vmatpush1.bf16.msra.mxu0 %v172
  %222 = vmatprep.subr.bf16.mxu0 0
  %223 = vmatpush1.bf16.msra.mxu0 %v173
  %224 = vmatprep.subr.bf16.mxu0 0
  %225 = vmatpush1.bf16.msra.mxu0 %v174
  %226 = vmatprep.subr.bf16.mxu0 0
  %227 = vmatpush1.bf16.msra.mxu0 %v175
  %228 = vmatprep.subr.bf16.mxu0 0
  %229 = vmatpush1.bf16.msra.mxu0 %v176
  %230 = vmatprep.subr.bf16.mxu0 0
  %231 = vmatpush1.bf16.msra.mxu0 %v177
  %232 = vmatprep.subr.bf16.mxu0 0
  %233 = vmatpush1.bf16.msra.mxu0 %v178
  %234 = vmatprep.subr.bf16.mxu0 0
  %235 = vmatpush1.bf16.msra.mxu0 %v179
  %236 = vmatprep.subr.bf16.mxu0 0
  %237 = vmatpush1.bf16.msra.mxu0 %v180
  %238 = vmatprep.subr.bf16.mxu0 0
  %239 = vmatpush1.bf16.msra.mxu0 %v181
  %240 = vmatprep.subr.bf16.mxu0 0
  %241 = vmatpush1.bf16.msra.mxu0 %v182
  %242 = vmatprep.mubr.bf16.mxu0 %v86
  %243 = vmatmul.mubr.bf16.gmra.mrb[0].mxu0 %v85
  %v244 = vpop.f32.mrb[0].mxu0
  %v245 = vadd.f32 0.0, %v244
  %v246 = vpop.f32.mrb[0].mxu0
  %v247 = vpop.f32.mrb[0].mxu0
  %v248 = vadd.f32 0.0, %v247
  %v249 = vpop.f32.mrb[0].mxu0
  %250 = vmatprep.mubr.bf16.mxu0 %v89
  %251 = vmatmul.mubr.bf16.gmra.mrb[0].mxu0 %v88
  %v252 = vpop.f32.mrb[0].mxu0
  %v253 = vadd.f32 0.0, %v252
  %v254 = vpop.f32.mrb[0].mxu0
  %v255 = vpop.f32.mrb[0].mxu0
  %v256 = vadd.f32 0.0, %v255
  %v257 = vpop.f32.mrb[0].mxu0
  %258 = vdwg.mxu0
  %259 = vmatprep.subr.bf16.mxu0 0
  %260 = vmatpush1.bf16.msra.mxu0 %v183
  %261 = vmatprep.subr.bf16.mxu0 0
  %262 = vmatpush1.bf16.msra.mxu0 %v184
  %263 = vmatprep.subr.bf16.mxu0 0
  %264 = vmatpush1.bf16.msra.mxu0 0
  %265 = vmatprep.subr.bf16.mxu0 0
  %266 = vmatpush1.bf16.msra.mxu0 0
  %267 = vmatprep.subr.bf16.mxu0 0
  %268 = vmatpush1.bf16.msra.mxu0 0
  %269 = vmatprep.subr.bf16.mxu0 0
  %270 = vmatpush1.bf16.msra.mxu0 0
  %271 = vmatprep.subr.bf16.mxu0 0
  %272 = vmatpush1.bf16.msra.mxu0 0
  %273 = vmatprep.subr.bf16.mxu0 0
  %274 = vmatpush1.bf16.msra.mxu0 0
  %275 = vmatprep.subr.bf16.mxu0 0
  %276 = vmatpush1.bf16.msra.mxu0 0
  %277 = vmatprep.subr.bf16.mxu0 0
  %278 = vmatpush1.bf16.msra.mxu0 0
  %279 = vmatprep.subr.bf16.mxu0 0
  %280 = vmatpush1.bf16.msra.mxu0 0
  %281 = vmatprep.subr.bf16.mxu0 0
  %282 = vmatpush1.bf16.msra.mxu0 0
  %283 = vmatprep.subr.bf16.mxu0 0
  %284 = vmatpush1.bf16.msra.mxu0 0
  %285 = vmatprep.subr.bf16.mxu0 0
  %286 = vmatpush1.bf16.msra.mxu0 0
  %287 = vmatprep.subr.bf16.mxu0 0
  %288 = vmatpush1.bf16.msra.mxu0 0
  %289 = vmatprep.subr.bf16.mxu0 0
  %290 = vmatpush1.bf16.msra.mxu0 0
  %291 = vmatprep.mubr.bf16.mxu0 0
  %292 = vmatmul.mubr.bf16.gmra.mrb[0].mxu0 %v205
  %v293 = vpop.f32.mrb[0].mxu0
  %v294 = vadd.f32 %v245, %v293
  %v295 = vpop.f32.mrb[0].mxu0
  %v296 = vpop.f32.mrb[0].mxu0
  %v297 = vadd.f32 %v248, %v296
  %v298 = vpop.f32.mrb[0].mxu0
  %299 = vmatprep.mubr.bf16.mxu0 0
  %300 = vmatmul.mubr.bf16.gmra.mrb[0].mxu0 %v208
  %v301 = vpop.f32.mrb[0].mxu0
  %v302 = vadd.f32 %v253, %v301
  %v303 = vpop.f32.mrb[0].mxu0
  %v304 = vpop.f32.mrb[0].mxu0
  %v305 = vadd.f32 %v256, %v304
  %v306 = vpop.f32.mrb[0].mxu0
  %307 = vdwg.mxu0
  %v308 = vld [vmem:[%s2] sm:$0xff]
  %v309 = vld [vmem:[%s2 + $0x8] sm:$0xff]
  %v310 = vld [vmem:[%s2 + $0x10] sm:$0xff]
  %v311 = vld [vmem:[%s2 + $0x18] sm:$0xff]
  %313 = vset.pattern.permute.xlu0 0
  %314 = vperm.xlu0 %313, %v308
  %v315 = vpop.permute.xlu0 %314
  %318 = vset.pattern.permute.xlu0 0
  %319 = vperm.xlu0 %318, %v309
  %v320 = vpop.permute.xlu0 %319
  %323 = vset.pattern.permute.xlu0 0
  %324 = vperm.xlu0 %323, %v310
  %v325 = vpop.permute.xlu0 %324
  %328 = vset.pattern.permute.xlu0 0
  %329 = vperm.xlu0 %328, %v311
  %v330 = vpop.permute.xlu0 %329
  %v332 = vmul.f32 %v294, %v315
  %v333 = vmul.f32 %v297, %v320
  %v334 = vmul.f32 %v302, %v325
  %v335 = vmul.f32 %v305, %v330
  %v336 = vld [vmem:[%s3] sm:$0xff]
  %v337 = vld [vmem:[%s3 + $0x8] sm:$0xff]
  %v338 = vld [vmem:[%s3 + $0x10] sm:$0xff]
  %v339 = vld [vmem:[%s3 + $0x18] sm:$0xff]
  %341 = vset.pattern.permute.xlu0 0
  %342 = vperm.xlu0 %341, %v336
  %v343 = vpop.permute.xlu0 %342
  %346 = vset.pattern.permute.xlu0 0
  %347 = vperm.xlu0 %346, %v337
  %v348 = vpop.permute.xlu0 %347
  %351 = vset.pattern.permute.xlu0 0
  %352 = vperm.xlu0 %351, %v338
  %v353 = vpop.permute.xlu0 %352
  %356 = vset.pattern.permute.xlu0 0
  %357 = vperm.xlu0 %356, %v339
  %v358 = vpop.permute.xlu0 %357
  %v360 = vadd.f32 %v332, %v343
  %v361 = vadd.f32 %v333, %v348
  %v362 = vadd.f32 %v334, %v353
  %v363 = vadd.f32 %v335, %v358
  %vm364 = vcmp.ge.f32.partialorder %v360, 0.0
  %vm365 = vcmp.ge.f32.partialorder %v361, 0.0
  %vm366 = vcmp.ge.f32.partialorder %v362, 0.0
  %vm367 = vcmp.ge.f32.partialorder %v363, 0.0
  %v368 = vld [vmem:[%s4] sm:$0xff]
  %v369 = vld [vmem:[%s4 + $0x8] sm:$0xff]
  %v370 = vld [vmem:[%s4 + $0x10] sm:$0xff]
  %v371 = vld [vmem:[%s4 + $0x18] sm:$0xff]
  %373 = vset.pattern.permute.xlu0 0
  %374 = vperm.xlu0 %373, %v368
  %v375 = vpop.permute.xlu0 %374
  %378 = vset.pattern.permute.xlu0 0
  %379 = vperm.xlu0 %378, %v369
  %v380 = vpop.permute.xlu0 %379
  %383 = vset.pattern.permute.xlu0 0
  %384 = vperm.xlu0 %383, %v370
  %v385 = vpop.permute.xlu0 %384
  %388 = vset.pattern.permute.xlu0 0
  %389 = vperm.xlu0 %388, %v371
  %v390 = vpop.permute.xlu0 %389
  %v392 = vmul.f32 %v375, %v360
  %v393 = vmul.f32 %v380, %v361
  %v394 = vmul.f32 %v385, %v362
  %v395 = vmul.f32 %v390, %v363
  %v396 = vsel %vm364, %v360, %v392
  %v397 = vsel %vm365, %v361, %v393
  %v398 = vsel %vm366, %v362, %v394
  %v399 = vsel %vm367, %v363, %v395
  %v400 = vpack.c.bf16 %v397, %v396
  %v401 = vpack.c.bf16 %v399, %v398
  %v404 = vunpack.c.l.b16 %v400
  %v405 = vunpack.c.h.b16 %v400
  %v406 = vunpack.c.l.b16 %v401
  %v407 = vunpack.c.h.b16 %v401
  %v408 = vpack.c.b16 %v404, %v404
  %v409 = vpack.c.b16 %v405, %v405
  %v410 = vpack.c.b16 %v406, %v406
  %v411 = vpack.c.b16 %v407, %v407
  %416 = vst [vmem:[%s5] sm:$0xf] %v408
  %417 = vst [vmem:[%s5 + $0x4] sm:$0xf] %v409
  %418 = vst [vmem:[%s5 + $0x8] sm:$0xf] %v410
  %419 = vst [vmem:[%s5 + $0xc] sm:$0xf] %v411
  // Predicated region
  $region22: #{espnetv2_autoencoder_forward.8} parent=0 // pred_check
    _
  $region23: #{espnetv2_autoencoder_forward.8} parent=0 // pred_check_branch
    %421 = sbr.rel (0) target = $region25
  $region24: #{espnetv2_autoencoder_forward.8} parent=0 // pred_region
    _
  $region25: #{espnetv2_autoencoder_forward.8} parent=0 // pred_fallthru
    _
  // Predicated region
  $region26: #{espnetv2_autoencoder_forward.8} parent=0 // pred_check
    _
  $region27: #{espnetv2_autoencoder_forward.8} parent=0 // pred_check_branch
    %423 = sbr.rel (0) target = $region29
  $region28: #{espnetv2_autoencoder_forward.8} parent=0 // pred_region
    _
  $region29: #{espnetv2_autoencoder_forward.8} parent=0 // pred_fallthru
    _

// kernel: espnetv2_autoencoder_forward.9
$region0: #{espnetv2_autoencoder_forward.9}
  #allocation0 [shape = 'u32[]', space=smem, size = 0x4, offset = 0x4, fixed_abs, tag = 'smem constant byte address 0x4 - core index']
  #allocation1 [shape = 'u32[144,128]{1,0:T(1,128)}', space=vmem, size = 0x12000, scoped, tag = 'internal scratch']
  %s0 = inlined_call_operand.vmem [shape: bf16[32,2,4,4], index: 0, kind: input, shape index: {}]
  %s1 = inlined_call_operand.vmem [shape: bf16[4,8], index: 1, kind: input, shape index: {}, may-alias: {1,2}]
  %s2 = inlined_call_operand.vmem [shape: bf16[4,8], index: 2, kind: input, shape index: {}, may-alias: {1,2}]
  %s3 = inlined_call_operand.vmem [shape: bf16[32,2,8,8], index: 3, kind: output, shape index: {}]
  %s4 = sld [smem:[#allocation0]]
  $region45: #{espnetv2_autoencoder_forward.9} parent=0
    _
  %s6 = ssub.s32 1, %s4
  %s7 = scalar_select 0, %s6, %s4
  loop: start=0, step=1, limit=6
  $region2: #{espnetv2_autoencoder_forward.9} parent=0 // loop_pre_header
    _
  $region3: #{espnetv2_autoencoder_forward.9} parent=0 // loop_header
    %s9 = sphi 0, %s13
    %p10 = scmp.ge.s32.totalorder %s9, 6
    %s19 = sphi 0, %s21
    %s22 = sphi 0, %s19
    %s23 = sphi 0, %s22
    %s39 = sphi 0, %s23
    %s43 = sphi 0, %s43
    %s45 = sphi 0, %s43
    %s46 = sphi 0, %s45
    %s60 = sphi 0, %s46
    %s64 = sphi 0, %s64
    %s66 = sphi 0, %s64
    %s67 = sphi 0, %s66
    %s81 = sphi 0, %s67
    %s87 = sphi 0, %s89
    %s90 = sphi 0, %s87
    %s91 = sphi 0, %s90
    %s107 = sphi 0, %s91
  $region4: #{espnetv2_autoencoder_forward.9} parent=0 // loop_header_branch
    %12 = sbr.rel (%p10) target = $region8
  $region5: #{espnetv2_autoencoder_forward.9} parent=0 // loop_body
    %s14 = ssub.s32 %s9, 1
    %s15 = ssub.s32 %s9, 2
    %s16 = sadd.s32 %s9, 1
    %s17 = ssub.s32 %s9, %s16
    %p18 = scmp.eq.s32.totalorder %s17, 0
    %s20 = sadd.s32 %s19, 1
    %s21 = scalar_select %p18, %s19, %s20
    %p24 = pneg %p18
    %p25 = scmp.eq.s32.totalorder %s9, 3
    %p26 = por %p24, %p25
    %p27 = scmp.ne.s32.totalorder %s19, %s22
    %p28 = scmp.eq.s32.totalorder %s9, 0
    %p29 = por %p27, %p28
    %p30 = scmp.ne.s32.totalorder %s19, %s22
    %p31 = scmp.eq.s32.totalorder %s14, 3
    %p32 = por %p30, %p31
    %p33 = scmp.ne.s32.totalorder %s22, %s23
    %p34 = scmp.eq.s32.totalorder %s14, 0
    %p35 = por %p33, %p34
    %p36 = scmp.ne.s32.totalorder %s22, %s23
    %p37 = scmp.eq.s32.totalorder %s15, 3
    %p38 = por %p36, %p37
    %p40 = scmp.ne.s32.totalorder %s23, %s39
    %p41 = scmp.eq.s32.totalorder %s15, 0
    %p42 = por %p40, %p41
    %s44 = sadd.s32 %s43, 1
    %p47 = scmp.eq.s32.totalorder %s9, 3
    %p48 = scmp.ne.s32.totalorder %s43, %s45
    %p49 = scmp.eq.s32.totalorder %s9, 0
    %p50 = por %p48, %p49
    %p51 = scmp.ne.s32.totalorder %s43, %s45
    %p52 = scmp.eq.s32.totalorder %s14, 3
    %p53 = por %p51, %p52
    %p54 = scmp.ne.s32.totalorder %s45, %s46
    %p55 = scmp.eq.s32.totalorder %s14, 0
    %p56 = por %p54, %p55
    %p57 = scmp.ne.s32.totalorder %s45, %s46
    %p58 = scmp.eq.s32.totalorder %s15, 3
    %p59 = por %p57, %p58
    %p61 = scmp.ne.s32.totalorder %s46, %s60
    %p62 = scmp.eq.s32.totalorder %s15, 0
    %p63 = por %p61, %p62
    %s65 = sadd.s32 %s64, 1
    %p68 = scmp.eq.s32.totalorder %s9, 3
    %p69 = scmp.ne.s32.totalorder %s64, %s66
    %p70 = scmp.eq.s32.totalorder %s9, 0
    %p71 = por %p69, %p70
    %p72 = scmp.ne.s32.totalorder %s64, %s66
    %p73 = scmp.eq.s32.totalorder %s14, 3
    %p74 = por %p72, %p73
    %p75 = scmp.ne.s32.totalorder %s66, %s67
    %p76 = scmp.eq.s32.totalorder %s14, 0
    %p77 = por %p75, %p76
    %p78 = scmp.ne.s32.totalorder %s66, %s67
    %p79 = scmp.eq.s32.totalorder %s15, 3
    %p80 = por %p78, %p79
    %p82 = scmp.ne.s32.totalorder %s67, %s81
    %p83 = scmp.eq.s32.totalorder %s15, 0
    %p84 = por %p82, %p83
    %s85 = ssub.s32 %s9, %s16
    %p86 = scmp.eq.s32.totalorder %s85, 0
    %s88 = sadd.s32 %s87, 1
    %s89 = scalar_select %p86, %s87, %s88
    %p92 = pneg %p86
    %p93 = scmp.eq.s32.totalorder %s9, 3
    %p94 = por %p92, %p93
    %p95 = scmp.ne.s32.totalorder %s87, %s90
    %p96 = scmp.eq.s32.totalorder %s9, 0
    %p97 = por %p95, %p96
    %p98 = scmp.ne.s32.totalorder %s87, %s90
    %p99 = scmp.eq.s32.totalorder %s14, 3
    %p100 = por %p98, %p99
    %p101 = scmp.ne.s32.totalorder %s90, %s91
    %p102 = scmp.eq.s32.totalorder %s14, 0
    %p103 = por %p101, %p102
    %p104 = scmp.ne.s32.totalorder %s90, %s91
    %p105 = scmp.eq.s32.totalorder %s15, 3
    %p106 = por %p104, %p105
    %p108 = scmp.ne.s32.totalorder %s91, %s107
    %p109 = scmp.eq.s32.totalorder %s15, 0
    %p110 = por %p108, %p109
    %p111 = scmp.le.s32.totalorder 1, %s9
    %p112 = scmp.lt.s32.totalorder %s9, 5
    %p113 = pnand %p111, %p112
    %p114 = pneg %p113
    // Predicated region
    $region9: #{espnetv2_autoencoder_forward.9} parent=5 // pred_check
      _
    $region10: #{espnetv2_autoencoder_forward.9} parent=5 // pred_check_branch
      %116 = sbr.rel (%p113) target = $region12
    $region11: #{espnetv2_autoencoder_forward.9} parent=5 // pred_region
      %s117 = ssub.s32 %s9, 1
      // Predicated region
      $region13: #{espnetv2_autoencoder_forward.9} parent=11 // pred_check
        %p118 = pneg %p56
      $region14: #{espnetv2_autoencoder_forward.9} parent=11 // pred_check_branch
        %120 = sbr.rel (%p118) target = $region16
      $region15: #{espnetv2_autoencoder_forward.9} parent=11 // pred_region
        _
      $region16: #{espnetv2_autoencoder_forward.9} parent=11 // pred_fallthru
        _
      // Predicated region
      $region17: #{espnetv2_autoencoder_forward.9} parent=11 // pred_check
        %p121 = pneg %p77
      $region18: #{espnetv2_autoencoder_forward.9} parent=11 // pred_check_branch
        %123 = sbr.rel (%p121) target = $region20
      $region19: #{espnetv2_autoencoder_forward.9} parent=11 // pred_region
        _
      $region20: #{espnetv2_autoencoder_forward.9} parent=11 // pred_fallthru
        _
    $region12: #{espnetv2_autoencoder_forward.9} parent=5 // pred_fallthru
      _
    %p124 = scmp.lt.s32.totalorder %s9, 4
    // Predicated region
    $region21: #{espnetv2_autoencoder_forward.9} parent=5 // pred_check
      %p125 = pneg %p124
    $region22: #{espnetv2_autoencoder_forward.9} parent=5 // pred_check_branch
      %127 = sbr.rel (%p125) target = $region24
    $region23: #{espnetv2_autoencoder_forward.9} parent=5 // pred_region
      // Predicated region
      $region25: #{espnetv2_autoencoder_forward.9} parent=23 // pred_check
        %p128 = pneg %p29
      $region26: #{espnetv2_autoencoder_forward.9} parent=23 // pred_check_branch
        %130 = sbr.rel (%p128) target = $region28
      $region27: #{espnetv2_autoencoder_forward.9} parent=23 // pred_region
        %s131 = smul.u32 8, %s9
        %p132 = scmp.lt.s32.totalorder %s131, 31
        %s133 = scalar_select %p132, %s131, 31
        %s134 = smul.addr %s133, 2
        %s135 = smul.addr %s134, 2
        %s136 = scalar_lea.vmem %s0, %s135
        %s137 = smul.u32 8, %s9
      $region28: #{espnetv2_autoencoder_forward.9} parent=23 // pred_fallthru
        _
    $region24: #{espnetv2_autoencoder_forward.9} parent=5 // pred_fallthru
      _
    %p138 = scmp.le.s32.totalorder 1, %s9
    %p139 = scmp.lt.s32.totalorder %s9, 5
    %p140 = pnand %p138, %p139
    %p141 = pneg %p140
    // Predicated region
    $region29: #{espnetv2_autoencoder_forward.9} parent=5 // pred_check
      _
    $region30: #{espnetv2_autoencoder_forward.9} parent=5 // pred_check_branch
      %143 = sbr.rel (%p140) target = $region32
    $region31: #{espnetv2_autoencoder_forward.9} parent=5 // pred_region
      %s144 = ssub.s32 %s9, 1
      %s145 = smul.u32 8, %s14
      %p146 = scmp.lt.s32.totalorder %s145, 31
      %s147 = scalar_select %p146, %s145, 31
      %s148 = smul.addr %s147, 2
      %s149 = smul.addr %s148, 2
      %s150 = scalar_lea.vmem %s0, %s149
      %p151 = pneg %p35
      %p152 = pneg %p32
      %p153 = pneg %p56
      %p154 = pneg %p53
      %p155 = pneg %p77
      %p156 = pneg %p74
      %p157 = pneg %p103
      %p158 = pneg %p100
      %s159 = smul.u32 8, %s14
      %p160 = scmp.lt.s32.totalorder %s159, 31
      %s161 = scalar_select %p160, %s159, 31
      %s162 = smul.addr %s161, 2
      %s163 = smul.addr %s162, 4
      %s164 = scalar_lea.vmem %s3, %s163
      %s165 = smul.u32 8, %s14
      %p166 = scmp.lt.s32.totalorder %s165, 31
      %s167 = scalar_select %p166, %s165, 31
      %s168 = smul.addr %s167, 2
      %s169 = smul.addr %s168, 2
      %s170 = scalar_lea.vmem %s0, %s169
      %s171 = smul.u32 8, %s14
      %s172 = smul.u32 8, %s14
      %p173 = scmp.lt.s32.totalorder %s172, 31
      %s174 = scalar_select %p173, %s172, 31
      %s175 = smul.addr %s174, 2
      %s176 = smul.addr %s175, 4
      %s177 = scalar_lea.vmem %s3, %s176
      %s178 = smul.u32 8, %s14
      %v180 = vld [vmem:[%s170] sm:$0x3]
      %v181 = vld [vmem:[%s170 + $0x2] sm:$0x3]
      %v182 = vld [vmem:[%s170 + $0x4] sm:$0x3]
      %v183 = vld [vmem:[%s170 + $0x6] sm:$0x3]
      %v184 = vld [vmem:[%s170 + $0x8] sm:$0x3]
      %v185 = vld [vmem:[%s170 + $0xa] sm:$0x3]
      %v186 = vld [vmem:[%s170 + $0xc] sm:$0x3]
      %v187 = vld [vmem:[%s170 + $0xe] sm:$0x3]
      %v188 = vld [vmem:[%s170 + $0x10] sm:$0x3]
      %v189 = vld [vmem:[%s170 + $0x12] sm:$0x3]
      %v190 = vld [vmem:[%s170 + $0x14] sm:$0x3]
      %v191 = vld [vmem:[%s170 + $0x16] sm:$0x3]
      %v192 = vld [vmem:[%s170 + $0x18] sm:$0x3]
      %v193 = vld [vmem:[%s170 + $0x1a] sm:$0x3]
      %v194 = vld [vmem:[%s170 + $0x1c] sm:$0x3]
      %v195 = vld [vmem:[%s170 + $0x1e] sm:$0x3]
      %v196 = vld [vmem:[%s1] sm:$0x3]
      %v197 = vld [vmem:[%s2] sm:$0x3]
      %v214 = vcombine.low %v180, %v181
      %v215 = vcombine.low %v182, %v183
      %v217 = vunpack.c.l.s4 1983009808
      %v218 = vunpack.c.0.s8 %v217
      %v219 = vlaneseq
      %v220 = vshrl.u32 %v219, 7
      %v221 = vsub.s32 %v218, %v220
      %v222 = vrot.slane %v214, %v221
      %v224 = vunpack.c.l.s4 1983009808
      %v225 = vunpack.c.0.s8 %v224
      %v226 = vlaneseq
      %v227 = vshrl.u32 %v226, 7
      %v228 = vsub.s32 %v225, %v227
      %v229 = vrot.slane %v215, %v228
      %v230 = vcombine.low %v222, %v229
      %v231 = vcombine.low %v184, %v185
      %v232 = vcombine.low %v186, %v187
      %v234 = vunpack.c.l.s4 1983009808
      %v235 = vunpack.c.0.s8 %v234
      %v236 = vlaneseq
      %v237 = vshrl.u32 %v236, 7
      %v238 = vsub.s32 %v235, %v237
      %v239 = vrot.slane %v231, %v238
      %v241 = vunpack.c.l.s4 1983009808
      %v242 = vunpack.c.0.s8 %v241
      %v243 = vlaneseq
      %v244 = vshrl.u32 %v243, 7
      %v245 = vsub.s32 %v242, %v244
      %v246 = vrot.slane %v232, %v245
      %v247 = vcombine.low %v239, %v246
      %v248 = vcombine.low %v188, %v189
      %v249 = vcombine.low %v190, %v191
      %v251 = vunpack.c.l.s4 1983009808
      %v252 = vunpack.c.0.s8 %v251
      %v253 = vlaneseq
      %v254 = vshrl.u32 %v253, 7
      %v255 = vsub.s32 %v252, %v254
      %v256 = vrot.slane %v248, %v255
      %v258 = vunpack.c.l.s4 1983009808
      %v259 = vunpack.c.0.s8 %v258
      %v260 = vlaneseq
      %v261 = vshrl.u32 %v260, 7
      %v262 = vsub.s32 %v259, %v261
      %v263 = vrot.slane %v249, %v262
      %v264 = vcombine.low %v256, %v263
      %v265 = vcombine.low %v192, %v193
      %v266 = vcombine.low %v194, %v195
      %v268 = vunpack.c.l.s4 1983009808
      %v269 = vunpack.c.0.s8 %v268
      %v270 = vlaneseq
      %v271 = vshrl.u32 %v270, 7
      %v272 = vsub.s32 %v269, %v271
      %v273 = vrot.slane %v265, %v272
      %v275 = vunpack.c.l.s4 1983009808
      %v276 = vunpack.c.0.s8 %v275
      %v277 = vlaneseq
      %v278 = vshrl.u32 %v277, 7
      %v279 = vsub.s32 %v276, %v278
      %v280 = vrot.slane %v266, %v279
      %v281 = vcombine.low %v273, %v280
      %vm282 = vcmask 31744
      %v284 = vsel %vm282, %v230, 0
      %v287 = vsel %vm282, %v247, 0
      %v290 = vsel %vm282, %v264, 0
      %v293 = vsel %vm282, %v281, 0
      %vm295 = vcmask 1041408
      %v297 = vsel %vm295, %v196, 0
      %299 = vmatprep.subr.bf16.mxu0 0
      %300 = vmatpush1.bf16.msra.mxu0 %v297
      %301 = vmatprep.subr.bf16.mxu0 0
      %302 = vmatpush1.bf16.msra.mxu0 0
      %303 = vmatprep.subr.bf16.mxu0 0
      %304 = vmatpush1.bf16.msra.mxu0 0
      %305 = vmatprep.subr.bf16.mxu0 0
      %306 = vmatpush1.bf16.msra.mxu0 0
      %307 = vmatprep.subr.bf16.mxu0 0
      %308 = vmatpush1.bf16.msra.mxu0 0
      %309 = vmatprep.subr.bf16.mxu0 0
      %310 = vmatpush1.bf16.msra.mxu0 0
      %311 = vmatprep.subr.bf16.mxu0 0
      %312 = vmatpush1.bf16.msra.mxu0 0
      %313 = vmatprep.subr.bf16.mxu0 0
      %314 = vmatpush1.bf16.msra.mxu0 0
      %315 = vmatprep.subr.bf16.mxu0 0
      %316 = vmatpush1.bf16.msra.mxu0 0
      %317 = vmatprep.subr.bf16.mxu0 0
      %318 = vmatpush1.bf16.msra.mxu0 0
      %319 = vmatprep.subr.bf16.mxu0 0
      %320 = vmatpush1.bf16.msra.mxu0 0
      %321 = vmatprep.subr.bf16.mxu0 0
      %322 = vmatpush1.bf16.msra.mxu0 0
      %323 = vmatprep.subr.bf16.mxu0 0
      %324 = vmatpush1.bf16.msra.mxu0 0
      %325 = vmatprep.subr.bf16.mxu0 0
      %326 = vmatpush1.bf16.msra.mxu0 0
      %327 = vmatprep.subr.bf16.mxu0 0
      %328 = vmatpush1.bf16.msra.mxu0 0
      %329 = vmatprep.subr.bf16.mxu0 0
      %330 = vmatpush1.bf16.msra.mxu0 0
      %331 = vmatprep.mubr.bf16.mxu0 0
      %332 = vmatmul.mubr.bf16.gmra.mrb[0].mxu0 %v284
      %v333 = vpop.f32.mrb[0].mxu0
      %v334 = vadd.f32 0.0, %v333
      %v335 = vpop.f32.mrb[0].mxu0
      %v336 = vpop.f32.mrb[0].mxu0
      %v337 = vadd.f32 0.0, %v336
      %v338 = vpop.f32.mrb[0].mxu0
      %339 = vmatprep.mubr.bf16.mxu0 0
      %340 = vmatmul.mubr.bf16.gmra.mrb[0].mxu0 %v287
      %v341 = vpop.f32.mrb[0].mxu0
      %v342 = vadd.f32 0.0, %v341
      %v343 = vpop.f32.mrb[0].mxu0
      %v344 = vpop.f32.mrb[0].mxu0
      %v345 = vadd.f32 0.0, %v344
      %v346 = vpop.f32.mrb[0].mxu0
      %347 = vmatprep.mubr.bf16.mxu0 0
      %348 = vmatmul.mubr.bf16.gmra.mrb[0].mxu0 %v290
      %v349 = vpop.f32.mrb[0].mxu0
      %v350 = vadd.f32 0.0, %v349
      %v351 = vpop.f32.mrb[0].mxu0
      %v352 = vpop.f32.mrb[0].mxu0
      %v353 = vadd.f32 0.0, %v352
      %v354 = vpop.f32.mrb[0].mxu0
      %355 = vmatprep.mubr.bf16.mxu0 0
      %356 = vmatmul.mubr.bf16.gmra.mrb[0].mxu0 %v293
      %v357 = vpop.f32.mrb[0].mxu0
      %v358 = vadd.f32 0.0, %v357
      %v359 = vpop.f32.mrb[0].mxu0
      %v360 = vpop.f32.mrb[0].mxu0
      %v361 = vadd.f32 0.0, %v360
      %v362 = vpop.f32.mrb[0].mxu0
      %363 = vdwg.mxu0
      %v372 = vcombine.high %v334, %v334
      %v373 = vcombine.high %v337, %v337
      %v374 = vcombine.high %v342, %v342
      %v375 = vcombine.high %v345, %v345
      %v376 = vcombine.high %v350, %v350
      %v377 = vcombine.high %v353, %v353
      %v378 = vcombine.high %v358, %v358
      %v379 = vcombine.high %v361, %v361
      %388 = vxpose.xlu0.b32.start [1/16] %v334, 128
      %389 = vxpose.xlu0.b32.cont [2/16] 0.0, 128
      %390 = vxpose.xlu0.b32.cont [3/16] 0.0, 128
      %391 = vxpose.xlu0.b32.cont [4/16] 0.0, 128
      %392 = vxpose.xlu0.b32.cont [5/16] 0.0, 128
      %393 = vxpose.xlu0.b32.cont [6/16] 0.0, 128
      %394 = vxpose.xlu0.b32.cont [7/16] 0.0, 128
      %395 = vxpose.xlu0.b32.cont [8/16] 0.0, 128
      %396 = vxpose.xlu0.b32.cont [9/16] 0.0, 128
      %397 = vxpose.xlu0.b32.cont [10/16] 0.0, 128
      %398 = vxpose.xlu0.b32.cont [11/16] 0.0, 128
      %399 = vxpose.xlu0.b32.cont [12/16] 0.0, 128
      %400 = vxpose.xlu0.b32.cont [13/16] 0.0, 128
      %401 = vxpose.xlu0.b32.cont [14/16] 0.0, 128
      %402 = vxpose.xlu0.b32.cont [15/16] 0.0, 128
      %403 = vxpose.xlu0.b32.end [16/16] 0.0, 128
      %v404 = vpop.trf.xlu0
      %v405 = vpop.trf.xlu0
      %v406 = vpop.trf.xlu0
      %v407 = vpop.trf.xlu0
      %v408 = vpop.trf.xlu0
      %v409 = vpop.trf.xlu0
      %v410 = vpop.trf.xlu0
      %v411 = vpop.trf.xlu0
      %v412 = vpop.trf.xlu0
      %v413 = vpop.trf.xlu0
      %v414 = vpop.trf.xlu0
      %v415 = vpop.trf.xlu0
      %v416 = vpop.trf.xlu0
      %v417 = vpop.trf.xlu0
      %v418 = vpop.trf.xlu0
      %v419 = vpop.trf.xlu0
      %420 = vxpose.xlu0.b32.start [1/16] %v372, 128
      %421 = vxpose.xlu0.b32.cont [2/16] 0.0, 128
      %422 = vxpose.xlu0.b32.cont [3/16] 0.0, 128
      %423 = vxpose.xlu0.b32.cont [4/16] 0.0, 128
      %424 = vxpose.xlu0.b32.cont [5/16] 0.0, 128
      %425 = vxpose.xlu0.b32.cont [6/16] 0.0, 128
      %426 = vxpose.xlu0.b32.cont [7/16] 0.0, 128
      %427 = vxpose.xlu0.b32.cont [8/16] 0.0, 128
      %428 = vxpose.xlu0.b32.cont [9/16] 0.0, 128
      %429 = vxpose.xlu0.b32.cont [10/16] 0.0, 128
      %430 = vxpose.xlu0.b32.cont [11/16] 0.0, 128
      %431 = vxpose.xlu0.b32.cont [12/16] 0.0, 128
      %432 = vxpose.xlu0.b32.cont [13/16] 0.0, 128
      %433 = vxpose.xlu0.b32.cont [14/16] 0.0, 128
      %434 = vxpose.xlu0.b32.cont [15/16] 0.0, 128
      %435 = vxpose.xlu0.b32.end [16/16] 0.0, 128
      %v436 = vpop.trf.xlu0
      %v437 = vpop.trf.xlu0
      %v438 = vpop.trf.xlu0
      %v439 = vpop.trf.xlu0
      %v440 = vpop.trf.xlu0
      %v441 = vpop.trf.xlu0
      %v442 = vpop.trf.xlu0
      %v443 = vpop.trf.xlu0
      %v444 = vpop.trf.xlu0
      %v445 = vpop.trf.xlu0
      %v446 = vpop.trf.xlu0
      %v447 = vpop.trf.xlu0
      %v448 = vpop.trf.xlu0
      %v449 = vpop.trf.xlu0
      %v450 = vpop.trf.xlu0
      %v451 = vpop.trf.xlu0
      %452 = vxpose.xlu0.b32.start [1/16] %v337, 128
      %453 = vxpose.xlu0.b32.cont [2/16] 0.0, 128
      %454 = vxpose.xlu0.b32.cont [3/16] 0.0, 128
      %455 = vxpose.xlu0.b32.cont [4/16] 0.0, 128
      %456 = vxpose.xlu0.b32.cont [5/16] 0.0, 128
      %457 = vxpose.xlu0.b32.cont [6/16] 0.0, 128
      %458 = vxpose.xlu0.b32.cont [7/16] 0.0, 128
      %459 = vxpose.xlu0.b32.cont [8/16] 0.0, 128
      %460 = vxpose.xlu0.b32.cont [9/16] 0.0, 128
      %461 = vxpose.xlu0.b32.cont [10/16] 0.0, 128
      %462 = vxpose.xlu0.b32.cont [11/16] 0.0, 128
      %463 = vxpose.xlu0.b32.cont [12/16] 0.0, 128
      %464 = vxpose.xlu0.b32.cont [13/16] 0.0, 128
      %465 = vxpose.xlu0.b32.cont [14/16] 0.0, 128
      %466 = vxpose.xlu0.b32.cont [15/16] 0.0, 128
      %467 = vxpose.xlu0.b32.end [16/16] 0.0, 128
      %v468 = vpop.trf.xlu0
      %v469 = vpop.trf.xlu0
      %v470 = vpop.trf.xlu0
      %v471 = vpop.trf.xlu0
      %v472 = vpop.trf.xlu0
      %v473 = vpop.trf.xlu0
      %v474 = vpop.trf.xlu0
      %v475 = vpop.trf.xlu0
      %v476 = vpop.trf.xlu0
      %v477 = vpop.trf.xlu0
      %v478 = vpop.trf.xlu0
      %v479 = vpop.trf.xlu0
      %v480 = vpop.trf.xlu0
      %v481 = vpop.trf.xlu0
      %v482 = vpop.trf.xlu0
      %v483 = vpop.trf.xlu0
      %484 = vxpose.xlu0.b32.start [1/16] %v373, 128
      %485 = vxpose.xlu0.b32.cont [2/16] 0.0, 128
      %486 = vxpose.xlu0.b32.cont [3/16] 0.0, 128
      %487 = vxpose.xlu0.b32.cont [4/16] 0.0, 128
      %488 = vxpose.xlu0.b32.cont [5/16] 0.0, 128
      %489 = vxpose.xlu0.b32.cont [6/16] 0.0, 128
      %490 = vxpose.xlu0.b32.cont [7/16] 0.0, 128
      %491 = vxpose.xlu0.b32.cont [8/16] 0.0, 128
      %492 = vxpose.xlu0.b32.cont [9/16] 0.0, 128
      %493 = vxpose.xlu0.b32.cont [10/16] 0.0, 128
      %494 = vxpose.xlu0.b32.cont [11/16] 0.0, 128
      %495 = vxpose.xlu0.b32.cont [12/16] 0.0, 128
      %496 = vxpose.xlu0.b32.cont [13/16] 0.0, 128
      %497 = vxpose.xlu0.b32.cont [14/16] 0.0, 128
      %498 = vxpose.xlu0.b32.cont [15/16] 0.0, 128
      %499 = vxpose.xlu0.b32.end [16/16] 0.0, 128
      %v500 = vpop.trf.xlu0
      %v501 = vpop.trf.xlu0
      %v502 = vpop.trf.xlu0
      %v503 = vpop.trf.xlu0
      %v504 = vpop.trf.xlu0
      %v505 = vpop.trf.xlu0
      %v506 = vpop.trf.xlu0
      %v507 = vpop.trf.xlu0
      %v508 = vpop.trf.xlu0
      %v509 = vpop.trf.xlu0
      %v510 = vpop.trf.xlu0
      %v511 = vpop.trf.xlu0
      %v512 = vpop.trf.xlu0
      %v513 = vpop.trf.xlu0
      %v514 = vpop.trf.xlu0
      %v515 = vpop.trf.xlu0
      %516 = vxpose.xlu0.b32.start [1/16] %v342, 128
      %517 = vxpose.xlu0.b32.cont [2/16] 0.0, 128
      %518 = vxpose.xlu0.b32.cont [3/16] 0.0, 128
      %519 = vxpose.xlu0.b32.cont [4/16] 0.0, 128
      %520 = vxpose.xlu0.b32.cont [5/16] 0.0, 128
      %521 = vxpose.xlu0.b32.cont [6/16] 0.0, 128
      %522 = vxpose.xlu0.b32.cont [7/16] 0.0, 128
      %523 = vxpose.xlu0.b32.cont [8/16] 0.0, 128
      %524 = vxpose.xlu0.b32.cont [9/16] 0.0, 128
      %525 = vxpose.xlu0.b32.cont [10/16] 0.0, 128
      %526 = vxpose.xlu0.b32.cont [11/16] 0.0, 128
      %527 = vxpose.xlu0.b32.cont [12/16] 0.0, 128
      %528 = vxpose.xlu0.b32.cont [13/16] 0.0, 128
      %529 = vxpose.xlu0.b32.cont [14/16] 0.0, 128
      %530 = vxpose.xlu0.b32.cont [15/16] 0.0, 128
      %531 = vxpose.xlu0.b32.end [16/16] 0.0, 128
      %v532 = vpop.trf.xlu0
      %v533 = vpop.trf.xlu0
      %v534 = vpop.trf.xlu0
      %v535 = vpop.trf.xlu0
      %v536 = vpop.trf.xlu0
      %v537 = vpop.trf.xlu0
      %v538 = vpop.trf.xlu0
      %v539 = vpop.trf.xlu0
      %v540 = vpop.trf.xlu0
      %v541 = vpop.trf.xlu0
      %v542 = vpop.trf.xlu0
      %v543 = vpop.trf.xlu0
      %v544 = vpop.trf.xlu0
      %v545 = vpop.trf.xlu0
      %v546 = vpop.trf.xlu0
      %v547 = vpop.trf.xlu0
      %548 = vxpose.xlu0.b32.start [1/16] %v374, 128
      %549 = vxpose.xlu0.b32.cont [2/16] 0.0, 128
      %550 = vxpose.xlu0.b32.cont [3/16] 0.0, 128
      %551 = vxpose.xlu0.b32.cont [4/16] 0.0, 128
      %552 = vxpose.xlu0.b32.cont [5/16] 0.0, 128
      %553 = vxpose.xlu0.b32.cont [6/16] 0.0, 128
      %554 = vxpose.xlu0.b32.cont [7/16] 0.0, 128
      %555 = vxpose.xlu0.b32.cont [8/16] 0.0, 128
      %556 = vxpose.xlu0.b32.cont [9/16] 0.0, 128
      %557 = vxpose.xlu0.b32.cont [10/16] 0.0, 128
      %558 = vxpose.xlu0.b32.cont [11/16] 0.0, 128
      %559 = vxpose.xlu0.b32.cont [12/16] 0.0, 128
      %560 = vxpose.xlu0.b32.cont [13/16] 0.0, 128
      %561 = vxpose.xlu0.b32.cont [14/16] 0.0, 128
      %562 = vxpose.xlu0.b32.cont [15/16] 0.0, 128
      %563 = vxpose.xlu0.b32.end [16/16] 0.0, 128
      %v564 = vpop.trf.xlu0
      %v565 = vpop.trf.xlu0
      %v566 = vpop.trf.xlu0
      %v567 = vpop.trf.xlu0
      %v568 = vpop.trf.xlu0
      %v569 = vpop.trf.xlu0
      %v570 = vpop.trf.xlu0
      %v571 = vpop.trf.xlu0
      %v572 = vpop.trf.xlu0
      %v573 = vpop.trf.xlu0
      %v574 = vpop.trf.xlu0
      %v575 = vpop.trf.xlu0
      %v576 = vpop.trf.xlu0
      %v577 = vpop.trf.xlu0
      %v578 = vpop.trf.xlu0
      %v579 = vpop.trf.xlu0
      %580 = vxpose.xlu0.b32.start [1/16] %v345, 128
      %581 = vxpose.xlu0.b32.cont [2/16] 0.0, 128
      %582 = vxpose.xlu0.b32.cont [3/16] 0.0, 128
      %583 = vxpose.xlu0.b32.cont [4/16] 0.0, 128
      %584 = vxpose.xlu0.b32.cont [5/16] 0.0, 128
      %585 = vxpose.xlu0.b32.cont [6/16] 0.0, 128
      %586 = vxpose.xlu0.b32.cont [7/16] 0.0, 128
      %587 = vxpose.xlu0.b32.cont [8/16] 0.0, 128
      %588 = vxpose.xlu0.b32.cont [9/16] 0.0, 128
      %589 = vxpose.xlu0.b32.cont [10/16] 0.0, 128
      %590 = vxpose.xlu0.b32.cont [11/16] 0.0, 128
      %591 = vxpose.xlu0.b32.cont [12/16] 0.0, 128
      %592 = vxpose.xlu0.b32.cont [13/16] 0.0, 128
      %593 = vxpose.xlu0.b32.cont [14/16] 0.0, 128
      %594 = vxpose.xlu0.b32.cont [15/16] 0.0, 128
      %595 = vxpose.xlu0.b32.end [16/16] 0.0, 128
      %v596 = vpop.trf.xlu0
      %v597 = vpop.trf.xlu0
      %v598 = vpop.trf.xlu0
      %v599 = vpop.trf.xlu0
      %v600 = vpop.trf.xlu0
      %v601 = vpop.trf.xlu0
      %v602 = vpop.trf.xlu0
      %v603 = vpop.trf.xlu0
      %v604 = vpop.trf.xlu0
      %v605 = vpop.trf.xlu0
      %v606 = vpop.trf.xlu0
      %v607 = vpop.trf.xlu0
      %v608 = vpop.trf.xlu0
      %v609 = vpop.trf.xlu0
      %v610 = vpop.trf.xlu0
      %v611 = vpop.trf.xlu0
      %612 = vxpose.xlu0.b32.start [1/16] %v375, 128
      %613 = vxpose.xlu0.b32.cont [2/16] 0.0, 128
      %614 = vxpose.xlu0.b32.cont [3/16] 0.0, 128
      %615 = vxpose.xlu0.b32.cont [4/16] 0.0, 128
      %616 = vxpose.xlu0.b32.cont [5/16] 0.0, 128
      %617 = vxpose.xlu0.b32.cont [6/16] 0.0, 128
      %618 = vxpose.xlu0.b32.cont [7/16] 0.0, 128
      %619 = vxpose.xlu0.b32.cont [8/16] 0.0, 128
      %620 = vxpose.xlu0.b32.cont [9/16] 0.0, 128
      %621 = vxpose.xlu0.b32.cont [10/16] 0.0, 128
      %622 = vxpose.xlu0.b32.cont [11/16] 0.0, 128
      %623 = vxpose.xlu0.b32.cont [12/16] 0.0, 128
      %624 = vxpose.xlu0.b32.cont [13/16] 0.0, 128
      %625 = vxpose.xlu0.b32.cont [14/16] 0.0, 128
      %626 = vxpose.xlu0.b32.cont [15/16] 0.0, 128
      %627 = vxpose.xlu0.b32.end [16/16] 0.0, 128
      %v628 = vpop.trf.xlu0
      %v629 = vpop.trf.xlu0
      %v630 = vpop.trf.xlu0
      %v631 = vpop.trf.xlu0
      %v632 = vpop.trf.xlu0
      %v633 = vpop.trf.xlu0
      %v634 = vpop.trf.xlu0
      %v635 = vpop.trf.xlu0
      %v636 = vpop.trf.xlu0
      %v637 = vpop.trf.xlu0
      %v638 = vpop.trf.xlu0
      %v639 = vpop.trf.xlu0
      %v640 = vpop.trf.xlu0
      %v641 = vpop.trf.xlu0
      %v642 = vpop.trf.xlu0
      %v643 = vpop.trf.xlu0
      %644 = vxpose.xlu0.b32.start [1/16] %v350, 128
      %645 = vxpose.xlu0.b32.cont [2/16] 0.0, 128
      %646 = vxpose.xlu0.b32.cont [3/16] 0.0, 128
      %647 = vxpose.xlu0.b32.cont [4/16] 0.0, 128
      %648 = vxpose.xlu0.b32.cont [5/16] 0.0, 128
      %649 = vxpose.xlu0.b32.cont [6/16] 0.0, 128
      %650 = vxpose.xlu0.b32.cont [7/16] 0.0, 128
      %651 = vxpose.xlu0.b32.cont [8/16] 0.0, 128
      %652 = vxpose.xlu0.b32.cont [9/16] 0.0, 128
      %653 = vxpose.xlu0.b32.cont [10/16] 0.0, 128
      %654 = vxpose.xlu0.b32.cont [11/16] 0.0, 128
      %655 = vxpose.xlu0.b32.cont [12/16] 0.0, 128
      %656 = vxpose.xlu0.b32.cont [13/16] 0.0, 128
      %657 = vxpose.xlu0.b32.cont [14/16] 0.0, 128
      %658 = vxpose.xlu0.b32.cont [15/16] 0.0, 128
      %659 = vxpose.xlu0.b32.end [16/16] 0.0, 128
      %v660 = vpop.trf.xlu0
      %v661 = vpop.trf.xlu0
      %v662 = vpop.trf.xlu0
      %v663 = vpop.trf.xlu0
      %v664 = vpop.trf.xlu0
      %v665 = vpop.trf.xlu0
      %v666 = vpop.trf.xlu0
      %v667 = vpop.trf.xlu0
      %v668 = vpop.trf.xlu0
      %v669 = vpop.trf.xlu0
      %v670 = vpop.trf.xlu0
      %v671 = vpop.trf.xlu0
      %v672 = vpop.trf.xlu0
      %v673 = vpop.trf.xlu0
      %v674 = vpop.trf.xlu0
      %v675 = vpop.trf.xlu0
      %676 = vxpose.xlu0.b32.start [1/16] %v376, 128
      %677 = vxpose.xlu0.b32.cont [2/16] 0.0, 128
      %678 = vxpose.xlu0.b32.cont [3/16] 0.0, 128
      %679 = vxpose.xlu0.b32.cont [4/16] 0.0, 128
      %680 = vxpose.xlu0.b32.cont [5/16] 0.0, 128
      %681 = vxpose.xlu0.b32.cont [6/16] 0.0, 128
      %682 = vxpose.xlu0.b32.cont [7/16] 0.0, 128
      %683 = vxpose.xlu0.b32.cont [8/16] 0.0, 128
      %684 = vxpose.xlu0.b32.cont [9/16] 0.0, 128
      %685 = vxpose.xlu0.b32.cont [10/16] 0.0, 128
      %686 = vxpose.xlu0.b32.cont [11/16] 0.0, 128
      %687 = vxpose.xlu0.b32.cont [12/16] 0.0, 128
      %688 = vxpose.xlu0.b32.cont [13/16] 0.0, 128
      %689 = vxpose.xlu0.b32.cont [14/16] 0.0, 128
      %690 = vxpose.xlu0.b32.cont [15/16] 0.0, 128
      %691 = vxpose.xlu0.b32.end [16/16] 0.0, 128
      %v692 = vpop.trf.xlu0
      %v693 = vpop.trf.xlu0
      %v694 = vpop.trf.xlu0
      %v695 = vpop.trf.xlu0
      %v696 = vpop.trf.xlu0
      %v697 = vpop.trf.xlu0
      %v698 = vpop.trf.xlu0
      %v699 = vpop.trf.xlu0
      %v700 = vpop.trf.xlu0
      %v701 = vpop.trf.xlu0
      %v702 = vpop.trf.xlu0
      %v703 = vpop.trf.xlu0
      %v704 = vpop.trf.xlu0
      %v705 = vpop.trf.xlu0
      %v706 = vpop.trf.xlu0
      %v707 = vpop.trf.xlu0
      %708 = vxpose.xlu0.b32.start [1/16] %v353, 128
      %709 = vxpose.xlu0.b32.cont [2/16] 0.0, 128
      %710 = vxpose.xlu0.b32.cont [3/16] 0.0, 128
      %711 = vxpose.xlu0.b32.cont [4/16] 0.0, 128
      %712 = vxpose.xlu0.b32.cont [5/16] 0.0, 128
      %713 = vxpose.xlu0.b32.cont [6/16] 0.0, 128
      %714 = vxpose.xlu0.b32.cont [7/16] 0.0, 128
      %715 = vxpose.xlu0.b32.cont [8/16] 0.0, 128
      %716 = vxpose.xlu0.b32.cont [9/16] 0.0, 128
      %717 = vxpose.xlu0.b32.cont [10/16] 0.0, 128
      %718 = vxpose.xlu0.b32.cont [11/16] 0.0, 128
      %719 = vxpose.xlu0.b32.cont [12/16] 0.0, 128
      %720 = vxpose.xlu0.b32.cont [13/16] 0.0, 128
      %721 = vxpose.xlu0.b32.cont [14/16] 0.0, 128
      %722 = vxpose.xlu0.b32.cont [15/16] 0.0, 128
      %723 = vxpose.xlu0.b32.end [16/16] 0.0, 128
      %v724 = vpop.trf.xlu0
      %v725 = vpop.trf.xlu0
      %v726 = vpop.trf.xlu0
      %v727 = vpop.trf.xlu0
      %v728 = vpop.trf.xlu0
      %v729 = vpop.trf.xlu0
      %v730 = vpop.trf.xlu0
      %v731 = vpop.trf.xlu0
      %v732 = vpop.trf.xlu0
      %v733 = vpop.trf.xlu0
      %v734 = vpop.trf.xlu0
      %v735 = vpop.trf.xlu0
      %v736 = vpop.trf.xlu0
      %v737 = vpop.trf.xlu0
      %v738 = vpop.trf.xlu0
      %v739 = vpop.trf.xlu0
      %740 = vxpose.xlu0.b32.start [1/16] %v377, 128
      %741 = vxpose.xlu0.b32.cont [2/16] 0.0, 128
      %742 = vxpose.xlu0.b32.cont [3/16] 0.0, 128
      %743 = vxpose.xlu0.b32.cont [4/16] 0.0, 128
      %744 = vxpose.xlu0.b32.cont [5/16] 0.0, 128
      %745 = vxpose.xlu0.b32.cont [6/16] 0.0, 128
      %746 = vxpose.xlu0.b32.cont [7/16] 0.0, 128
      %747 = vxpose.xlu0.b32.cont [8/16] 0.0, 128
      %748 = vxpose.xlu0.b32.cont [9/16] 0.0, 128
      %749 = vxpose.xlu0.b32.cont [10/16] 0.0, 128
      %750 = vxpose.xlu0.b32.cont [11/16] 0.0, 128
      %751 = vxpose.xlu0.b32.cont [12/16] 0.0, 128
      %752 = vxpose.xlu0.b32.cont [13/16] 0.0, 128
      %753 = vxpose.xlu0.b32.cont [14/16] 0.0, 128
      %754 = vxpose.xlu0.b32.cont [15/16] 0.0, 128
      %755 = vxpose.xlu0.b32.end [16/16] 0.0, 128
      %v756 = vpop.trf.xlu0
      %v757 = vpop.trf.xlu0
      %v758 = vpop.trf.xlu0
      %v759 = vpop.trf.xlu0
      %v760 = vpop.trf.xlu0
      %v761 = vpop.trf.xlu0
      %v762 = vpop.trf.xlu0
      %v763 = vpop.trf.xlu0
      %v764 = vpop.trf.xlu0
      %v765 = vpop.trf.xlu0
      %v766 = vpop.trf.xlu0
      %v767 = vpop.trf.xlu0
      %v768 = vpop.trf.xlu0
      %v769 = vpop.trf.xlu0
      %v770 = vpop.trf.xlu0
      %v771 = vpop.trf.xlu0
      %772 = vxpose.xlu0.b32.start [1/16] %v358, 128
      %773 = vxpose.xlu0.b32.cont [2/16] 0.0, 128
      %774 = vxpose.xlu0.b32.cont [3/16] 0.0, 128
      %775 = vxpose.xlu0.b32.cont [4/16] 0.0, 128
      %776 = vxpose.xlu0.b32.cont [5/16] 0.0, 128
      %777 = vxpose.xlu0.b32.cont [6/16] 0.0, 128
      %778 = vxpose.xlu0.b32.cont [7/16] 0.0, 128
      %779 = vxpose.xlu0.b32.cont [8/16] 0.0, 128
      %780 = vxpose.xlu0.b32.cont [9/16] 0.0, 128
      %781 = vxpose.xlu0.b32.cont [10/16] 0.0, 128
      %782 = vxpose.xlu0.b32.cont [11/16] 0.0, 128
      %783 = vxpose.xlu0.b32.cont [12/16] 0.0, 128
      %784 = vxpose.xlu0.b32.cont [13/16] 0.0, 128
      %785 = vxpose.xlu0.b32.cont [14/16] 0.0, 128
      %786 = vxpose.xlu0.b32.cont [15/16] 0.0, 128
      %787 = vxpose.xlu0.b32.end [16/16] 0.0, 128
      %v788 = vpop.trf.xlu0
      %v789 = vpop.trf.xlu0
      %v790 = vpop.trf.xlu0
      %v791 = vpop.trf.xlu0
      %v792 = vpop.trf.xlu0
      %v793 = vpop.trf.xlu0
      %v794 = vpop.trf.xlu0
      %v795 = vpop.trf.xlu0
      %v796 = vpop.trf.xlu0
      %v797 = vpop.trf.xlu0
      %v798 = vpop.trf.xlu0
      %v799 = vpop.trf.xlu0
      %v800 = vpop.trf.xlu0
      %v801 = vpop.trf.xlu0
      %v802 = vpop.trf.xlu0
      %v803 = vpop.trf.xlu0
      %804 = vxpose.xlu0.b32.start [1/16] %v378, 128
      %805 = vxpose.xlu0.b32.cont [2/16] 0.0, 128
      %806 = vxpose.xlu0.b32.cont [3/16] 0.0, 128
      %807 = vxpose.xlu0.b32.cont [4/16] 0.0, 128
      %808 = vxpose.xlu0.b32.cont [5/16] 0.0, 128
      %809 = vxpose.xlu0.b32.cont [6/16] 0.0, 128
      %810 = vxpose.xlu0.b32.cont [7/16] 0.0, 128
      %811 = vxpose.xlu0.b32.cont [8/16] 0.0, 128
      %812 = vxpose.xlu0.b32.cont [9/16] 0.0, 128
      %813 = vxpose.xlu0.b32.cont [10/16] 0.0, 128
      %814 = vxpose.xlu0.b32.cont [11/16] 0.0, 128
      %815 = vxpose.xlu0.b32.cont [12/16] 0.0, 128
      %816 = vxpose.xlu0.b32.cont [13/16] 0.0, 128
      %817 = vxpose.xlu0.b32.cont [14/16] 0.0, 128
      %818 = vxpose.xlu0.b32.cont [15/16] 0.0, 128
      %819 = vxpose.xlu0.b32.end [16/16] 0.0, 128
      %v820 = vpop.trf.xlu0
      %v821 = vpop.trf.xlu0
      %v822 = vpop.trf.xlu0
      %v823 = vpop.trf.xlu0
      %v824 = vpop.trf.xlu0
      %v825 = vpop.trf.xlu0
      %v826 = vpop.trf.xlu0
      %v827 = vpop.trf.xlu0
      %v828 = vpop.trf.xlu0
      %v829 = vpop.trf.xlu0
      %v830 = vpop.trf.xlu0
      %v831 = vpop.trf.xlu0
      %v832 = vpop.trf.xlu0
      %v833 = vpop.trf.xlu0
      %v834 = vpop.trf.xlu0
      %v835 = vpop.trf.xlu0
      %836 = vxpose.xlu0.b32.start [1/16] %v361, 128
      %837 = vxpose.xlu0.b32.cont [2/16] 0.0, 128
      %838 = vxpose.xlu0.b32.cont [3/16] 0.0, 128
      %839 = vxpose.xlu0.b32.cont [4/16] 0.0, 128
      %840 = vxpose.xlu0.b32.cont [5/16] 0.0, 128
      %841 = vxpose.xlu0.b32.cont [6/16] 0.0, 128
      %842 = vxpose.xlu0.b32.cont [7/16] 0.0, 128
      %843 = vxpose.xlu0.b32.cont [8/16] 0.0, 128
      %844 = vxpose.xlu0.b32.cont [9/16] 0.0, 128
      %845 = vxpose.xlu0.b32.cont [10/16] 0.0, 128
      %846 = vxpose.xlu0.b32.cont [11/16] 0.0, 128
      %847 = vxpose.xlu0.b32.cont [12/16] 0.0, 128
      %848 = vxpose.xlu0.b32.cont [13/16] 0.0, 128
      %849 = vxpose.xlu0.b32.cont [14/16] 0.0, 128
      %850 = vxpose.xlu0.b32.cont [15/16] 0.0, 128
      %851 = vxpose.xlu0.b32.end [16/16] 0.0, 128
      %v852 = vpop.trf.xlu0
      %v853 = vpop.trf.xlu0
      %v854 = vpop.trf.xlu0
      %v855 = vpop.trf.xlu0
      %v856 = vpop.trf.xlu0
      %v857 = vpop.trf.xlu0
      %v858 = vpop.trf.xlu0
      %v859 = vpop.trf.xlu0
      %v860 = vpop.trf.xlu0
      %v861 = vpop.trf.xlu0
      %v862 = vpop.trf.xlu0
      %v863 = vpop.trf.xlu0
      %v864 = vpop.trf.xlu0
      %v865 = vpop.trf.xlu0
      %v866 = vpop.trf.xlu0
      %v867 = vpop.trf.xlu0
      %868 = vxpose.xlu0.b32.start [1/16] %v379, 128
      %869 = vxpose.xlu0.b32.cont [2/16] 0.0, 128
      %870 = vxpose.xlu0.b32.cont [3/16] 0.0, 128
      %871 = vxpose.xlu0.b32.cont [4/16] 0.0, 128
      %872 = vxpose.xlu0.b32.cont [5/16] 0.0, 128
      %873 = vxpose.xlu0.b32.cont [6/16] 0.0, 128
      %874 = vxpose.xlu0.b32.cont [7/16] 0.0, 128
      %875 = vxpose.xlu0.b32.cont [8/16] 0.0, 128
      %876 = vxpose.xlu0.b32.cont [9/16] 0.0, 128
      %877 = vxpose.xlu0.b32.cont [10/16] 0.0, 128
      %878 = vxpose.xlu0.b32.cont [11/16] 0.0, 128
      %879 = vxpose.xlu0.b32.cont [12/16] 0.0, 128
      %880 = vxpose.xlu0.b32.cont [13/16] 0.0, 128
      %881 = vxpose.xlu0.b32.cont [14/16] 0.0, 128
      %882 = vxpose.xlu0.b32.cont [15/16] 0.0, 128
      %883 = vxpose.xlu0.b32.end [16/16] 0.0, 128
      %v884 = vpop.trf.xlu0
      %v885 = vpop.trf.xlu0
      %v886 = vpop.trf.xlu0
      %v887 = vpop.trf.xlu0
      %v888 = vpop.trf.xlu0
      %v889 = vpop.trf.xlu0
      %v890 = vpop.trf.xlu0
      %v891 = vpop.trf.xlu0
      %v892 = vpop.trf.xlu0
      %v893 = vpop.trf.xlu0
      %v894 = vpop.trf.xlu0
      %v895 = vpop.trf.xlu0
      %v896 = vpop.trf.xlu0
      %v897 = vpop.trf.xlu0
      %v898 = vpop.trf.xlu0
      %v899 = vpop.trf.xlu0
      %v900 = vpack.c.bf16 %v404, %v404
      %v901 = vpack.c.bf16 %v436, %v436
      %v902 = vpack.c.bf16 %v468, %v468
      %v903 = vpack.c.bf16 %v500, %v500
      %v904 = vpack.c.bf16 %v532, %v532
      %v905 = vpack.c.bf16 %v564, %v564
      %v906 = vpack.c.bf16 %v596, %v596
      %v907 = vpack.c.bf16 %v628, %v628
      %v908 = vpack.c.bf16 %v660, %v660
      %v909 = vpack.c.bf16 %v692, %v692
      %v910 = vpack.c.bf16 %v724, %v724
      %v911 = vpack.c.bf16 %v756, %v756
      %v912 = vpack.c.bf16 %v788, %v788
      %v913 = vpack.c.bf16 %v820, %v820
      %v914 = vpack.c.bf16 %v852, %v852
      %v915 = vpack.c.bf16 %v884, %v884
      %v932 = vunpack.c.l.b16 %v900
      %v933 = vunpack.c.l.b16 %v901
      %v934 = vunpack.c.l.b16 %v902
      %v935 = vunpack.c.l.b16 %v903
      %v936 = vunpack.c.l.b16 %v904
      %v937 = vunpack.c.l.b16 %v905
      %v938 = vunpack.c.l.b16 %v906
      %v939 = vunpack.c.l.b16 %v907
      %v940 = vunpack.c.l.b16 %v908
      %v941 = vunpack.c.l.b16 %v909
      %v942 = vunpack.c.l.b16 %v910
      %v943 = vunpack.c.l.b16 %v911
      %v944 = vunpack.c.l.b16 %v912
      %v945 = vunpack.c.l.b16 %v913
      %v946 = vunpack.c.l.b16 %v914
      %v947 = vunpack.c.l.b16 %v915
      %v948 = vpack.c.b16 %v933, %v932
      %v949 = vpack.c.b16 %v935, %v934
      %v950 = vpack.c.b16 %v937, %v936
      %v951 = vpack.c.b16 %v939, %v938
      %v952 = vpack.c.b16 %v941, %v940
      %v953 = vpack.c.b16 %v943, %v942
      %v954 = vpack.c.b16 %v945, %v944
      %v955 = vpack.c.b16 %v947, %v946
      %v957 = vsel %vm282, %v948, 0
      %v960 = vsel %vm282, %v949, 0
      %v963 = vsel %vm282, %v950, 0
      %v966 = vsel %vm282, %v951, 0
      %v969 = vsel %vm282, %v952, 0
      %v972 = vsel %vm282, %v953, 0
      %v975 = vsel %vm282, %v954, 0
      %v978 = vsel %vm282, %v955, 0
      %v981 = vsel %vm295, %v197, 0
      %983 = vmatprep.subr.bf16.mxu0 0
      %984 = vmatpush1.bf16.msra.mxu0 %v981
      %985 = vmatprep.subr.bf16.mxu0 0
      %986 = vmatpush1.bf16.msra.mxu0 0
      %987 = vmatprep.subr.bf16.mxu0 0
      %988 = vmatpush1.bf16.msra.mxu0 0
      %989 = vmatprep.subr.bf16.mxu0 0
      %990 = vmatpush1.bf16.msra.mxu0 0
      %991 = vmatprep.subr.bf16.mxu0 0
      %992 = vmatpush1.bf16.msra.mxu0 0
      %993 = vmatprep.subr.bf16.mxu0 0
      %994 = vmatpush1.bf16.msra.mxu0 0
      %995 = vmatprep.subr.bf16.mxu0 0
      %996 = vmatpush1.bf16.msra.mxu0 0
      %997 = vmatprep.subr.bf16.mxu0 0
      %998 = vmatpush1.bf16.msra.mxu0 0
      %999 = vmatprep.subr.bf16.mxu0 0
      %1000 = vmatpush1.bf16.msra.mxu0 0
      %1001 = vmatprep.subr.bf16.mxu0 0
      %1002 = vmatpush1.bf16.msra.mxu0 0
      %1003 = vmatprep.subr.bf16.mxu0 0
      %1004 = vmatpush1.bf16.msra.mxu0 0
      %1005 = vmatprep.subr.bf16.mxu0 0
      %1006 = vmatpush1.bf16.msra.mxu0 0
      %1007 = vmatprep.subr.bf16.mxu0 0
      %1008 = vmatpush1.bf16.msra.mxu0 0
      %1009 = vmatprep.subr.bf16.mxu0 0
      %1010 = vmatpush1.bf16.msra.mxu0 0
      %1011 = vmatprep.subr.bf16.mxu0 0
      %1012 = vmatpush1.bf16.msra.mxu0 0
      %1013 = vmatprep.subr.bf16.mxu0 0
      %1014 = vmatpush1.bf16.msra.mxu0 0
      %1015 = vmatprep.mubr.bf16.mxu0 0
      %1016 = vmatmul.mubr.bf16.gmra.mrb[0].mxu0 %v957
      %v1017 = vpop.f32.mrb[0].mxu0
      %v1018 = vadd.f32 0.0, %v1017
      %v1019 = vpop.f32.mrb[0].mxu0
      %v1020 = vpop.f32.mrb[0].mxu0
      %v1021 = vadd.f32 0.0, %v1020
      %v1022 = vpop.f32.mrb[0].mxu0
      %1023 = vmatprep.mubr.bf16.mxu0 0
      %1024 = vmatmul.mubr.bf16.gmra.mrb[0].mxu0 %v960
      %v1025 = vpop.f32.mrb[0].mxu0
      %v1026 = vadd.f32 0.0, %v1025
      %v1027 = vpop.f32.mrb[0].mxu0
      %v1028 = vpop.f32.mrb[0].mxu0
      %v1029 = vadd.f32 0.0, %v1028
      %v1030 = vpop.f32.mrb[0].mxu0
      %1031 = vmatprep.mubr.bf16.mxu0 0
      %1032 = vmatmul.mubr.bf16.gmra.mrb[0].mxu0 %v963
      %v1033 = vpop.f32.mrb[0].mxu0
      %v1034 = vadd.f32 0.0, %v1033
      %v1035 = vpop.f32.mrb[0].mxu0
      %v1036 = vpop.f32.mrb[0].mxu0
      %v1037 = vadd.f32 0.0, %v1036
      %v1038 = vpop.f32.mrb[0].mxu0
      %1039 = vmatprep.mubr.bf16.mxu0 0
      %1040 = vmatmul.mubr.bf16.gmra.mrb[0].mxu0 %v966
      %v1041 = vpop.f32.mrb[0].mxu0
      %v1042 = vadd.f32 0.0, %v1041
      %v1043 = vpop.f32.mrb[0].mxu0
      %v1044 = vpop.f32.mrb[0].mxu0
      %v1045 = vadd.f32 0.0, %v1044
      %v1046 = vpop.f32.mrb[0].mxu0
      %1047 = vmatprep.mubr.bf16.mxu0 0
      %1048 = vmatmul.mubr.bf16.gmra.mrb[0].mxu0 %v969
      %v1049 = vpop.f32.mrb[0].mxu0
      %v1050 = vadd.f32 0.0, %v1049
      %v1051 = vpop.f32.mrb[0].mxu0
      %v1052 = vpop.f32.mrb[0].mxu0
      %v1053 = vadd.f32 0.0, %v1052
      %v1054 = vpop.f32.mrb[0].mxu0
      %1055 = vmatprep.mubr.bf16.mxu0 0
      %1056 = vmatmul.mubr.bf16.gmra.mrb[0].mxu0 %v972
      %v1057 = vpop.f32.mrb[0].mxu0
      %v1058 = vadd.f32 0.0, %v1057
      %v1059 = vpop.f32.mrb[0].mxu0
      %v1060 = vpop.f32.mrb[0].mxu0
      %v1061 = vadd.f32 0.0, %v1060
      %v1062 = vpop.f32.mrb[0].mxu0
      %1063 = vmatprep.mubr.bf16.mxu0 0
      %1064 = vmatmul.mubr.bf16.gmra.mrb[0].mxu0 %v975
      %v1065 = vpop.f32.mrb[0].mxu0
      %v1066 = vadd.f32 0.0, %v1065
      %v1067 = vpop.f32.mrb[0].mxu0
      %v1068 = vpop.f32.mrb[0].mxu0
      %v1069 = vadd.f32 0.0, %v1068
      %v1070 = vpop.f32.mrb[0].mxu0
      %1071 = vmatprep.mubr.bf16.mxu0 0
      %1072 = vmatmul.mubr.bf16.gmra.mrb[0].mxu0 %v978
      %v1073 = vpop.f32.mrb[0].mxu0
      %v1074 = vadd.f32 0.0, %v1073
      %v1075 = vpop.f32.mrb[0].mxu0
      %v1076 = vpop.f32.mrb[0].mxu0
      %v1077 = vadd.f32 0.0, %v1076
      %v1078 = vpop.f32.mrb[0].mxu0
      %1079 = vdwg.mxu0
      %1080 = vxpose.xlu0.b32.start [1/16] %v1018, 128
      %1081 = vxpose.xlu0.b32.cont [2/16] 0.0, 128
      %1082 = vxpose.xlu0.b32.cont [3/16] 0.0, 128
      %1083 = vxpose.xlu0.b32.cont [4/16] 0.0, 128
      %1084 = vxpose.xlu0.b32.cont [5/16] 0.0, 128
      %1085 = vxpose.xlu0.b32.cont [6/16] 0.0, 128
      %1086 = vxpose.xlu0.b32.cont [7/16] 0.0, 128
      %1087 = vxpose.xlu0.b32.cont [8/16] 0.0, 128
      %1088 = vxpose.xlu0.b32.cont [9/16] 0.0, 128
      %1089 = vxpose.xlu0.b32.cont [10/16] 0.0, 128
      %1090 = vxpose.xlu0.b32.cont [11/16] 0.0, 128
      %1091 = vxpose.xlu0.b32.cont [12/16] 0.0, 128
      %1092 = vxpose.xlu0.b32.cont [13/16] 0.0, 128
      %1093 = vxpose.xlu0.b32.cont [14/16] 0.0, 128
      %1094 = vxpose.xlu0.b32.cont [15/16] 0.0, 128
      %1095 = vxpose.xlu0.b32.end [16/16] 0.0, 128
      %v1096 = vpop.trf.xlu0
      %v1097 = vpop.trf.xlu0
      %v1098 = vpop.trf.xlu0
      %v1099 = vpop.trf.xlu0
      %v1100 = vpop.trf.xlu0
      %v1101 = vpop.trf.xlu0
      %v1102 = vpop.trf.xlu0
      %v1103 = vpop.trf.xlu0
      %v1104 = vpop.trf.xlu0
      %v1105 = vpop.trf.xlu0
      %v1106 = vpop.trf.xlu0
      %v1107 = vpop.trf.xlu0
      %v1108 = vpop.trf.xlu0
      %v1109 = vpop.trf.xlu0
      %v1110 = vpop.trf.xlu0
      %v1111 = vpop.trf.xlu0
      %1112 = vxpose.xlu0.b32.start [1/16] %v1021, 128
      %1113 = vxpose.xlu0.b32.cont [2/16] 0.0, 128
      %1114 = vxpose.xlu0.b32.cont [3/16] 0.0, 128
      %1115 = vxpose.xlu0.b32.cont [4/16] 0.0, 128
      %1116 = vxpose.xlu0.b32.cont [5/16] 0.0, 128
      %1117 = vxpose.xlu0.b32.cont [6/16] 0.0, 128
      %1118 = vxpose.xlu0.b32.cont [7/16] 0.0, 128
      %1119 = vxpose.xlu0.b32.cont [8/16] 0.0, 128
      %1120 = vxpose.xlu0.b32.cont [9/16] 0.0, 128
      %1121 = vxpose.xlu0.b32.cont [10/16] 0.0, 128
      %1122 = vxpose.xlu0.b32.cont [11/16] 0.0, 128
      %1123 = vxpose.xlu0.b32.cont [12/16] 0.0, 128
      %1124 = vxpose.xlu0.b32.cont [13/16] 0.0, 128
      %1125 = vxpose.xlu0.b32.cont [14/16] 0.0, 128
      %1126 = vxpose.xlu0.b32.cont [15/16] 0.0, 128
      %1127 = vxpose.xlu0.b32.end [16/16] 0.0, 128
      %v1128 = vpop.trf.xlu0
      %v1129 = vpop.trf.xlu0
      %v1130 = vpop.trf.xlu0
      %v1131 = vpop.trf.xlu0
      %v1132 = vpop.trf.xlu0
      %v1133 = vpop.trf.xlu0
      %v1134 = vpop.trf.xlu0
      %v1135 = vpop.trf.xlu0
      %v1136 = vpop.trf.xlu0
      %v1137 = vpop.trf.xlu0
      %v1138 = vpop.trf.xlu0
      %v1139 = vpop.trf.xlu0
      %v1140 = vpop.trf.xlu0
      %v1141 = vpop.trf.xlu0
      %v1142 = vpop.trf.xlu0
      %v1143 = vpop.trf.xlu0
      %1144 = vxpose.xlu0.b32.start [1/16] %v1026, 128
      %1145 = vxpose.xlu0.b32.cont [2/16] 0.0, 128
      %1146 = vxpose.xlu0.b32.cont [3/16] 0.0, 128
      %1147 = vxpose.xlu0.b32.cont [4/16] 0.0, 128
      %1148 = vxpose.xlu0.b32.cont [5/16] 0.0, 128
      %1149 = vxpose.xlu0.b32.cont [6/16] 0.0, 128
      %1150 = vxpose.xlu0.b32.cont [7/16] 0.0, 128
      %1151 = vxpose.xlu0.b32.cont [8/16] 0.0, 128
      %1152 = vxpose.xlu0.b32.cont [9/16] 0.0, 128
      %1153 = vxpose.xlu0.b32.cont [10/16] 0.0, 128
      %1154 = vxpose.xlu0.b32.cont [11/16] 0.0, 128
      %1155 = vxpose.xlu0.b32.cont [12/16] 0.0, 128
      %1156 = vxpose.xlu0.b32.cont [13/16] 0.0, 128
      %1157 = vxpose.xlu0.b32.cont [14/16] 0.0, 128
      %1158 = vxpose.xlu0.b32.cont [15/16] 0.0, 128
      %1159 = vxpose.xlu0.b32.end [16/16] 0.0, 128
      %v1160 = vpop.trf.xlu0
      %v1161 = vpop.trf.xlu0
      %v1162 = vpop.trf.xlu0
      %v1163 = vpop.trf.xlu0
      %v1164 = vpop.trf.xlu0
      %v1165 = vpop.trf.xlu0
      %v1166 = vpop.trf.xlu0
      %v1167 = vpop.trf.xlu0
      %v1168 = vpop.trf.xlu0
      %v1169 = vpop.trf.xlu0
      %v1170 = vpop.trf.xlu0
      %v1171 = vpop.trf.xlu0
      %v1172 = vpop.trf.xlu0
      %v1173 = vpop.trf.xlu0
      %v1174 = vpop.trf.xlu0
      %v1175 = vpop.trf.xlu0
      %1176 = vxpose.xlu0.b32.start [1/16] %v1029, 128
      %1177 = vxpose.xlu0.b32.cont [2/16] 0.0, 128
      %1178 = vxpose.xlu0.b32.cont [3/16] 0.0, 128
      %1179 = vxpose.xlu0.b32.cont [4/16] 0.0, 128
      %1180 = vxpose.xlu0.b32.cont [5/16] 0.0, 128
      %1181 = vxpose.xlu0.b32.cont [6/16] 0.0, 128
      %1182 = vxpose.xlu0.b32.cont [7/16] 0.0, 128
      %1183 = vxpose.xlu0.b32.cont [8/16] 0.0, 128
      %1184 = vxpose.xlu0.b32.cont [9/16] 0.0, 128
      %1185 = vxpose.xlu0.b32.cont [10/16] 0.0, 128
      %1186 = vxpose.xlu0.b32.cont [11/16] 0.0, 128
      %1187 = vxpose.xlu0.b32.cont [12/16] 0.0, 128
      %1188 = vxpose.xlu0.b32.cont [13/16] 0.0, 128
      %1189 = vxpose.xlu0.b32.cont [14/16] 0.0, 128
      %1190 = vxpose.xlu0.b32.cont [15/16] 0.0, 128
      %1191 = vxpose.xlu0.b32.end [16/16] 0.0, 128
      %v1192 = vpop.trf.xlu0
      %v1193 = vpop.trf.xlu0
      %v1194 = vpop.trf.xlu0
      %v1195 = vpop.trf.xlu0
      %v1196 = vpop.trf.xlu0
      %v1197 = vpop.trf.xlu0
      %v1198 = vpop.trf.xlu0
      %v1199 = vpop.trf.xlu0
      %v1200 = vpop.trf.xlu0
      %v1201 = vpop.trf.xlu0
      %v1202 = vpop.trf.xlu0
      %v1203 = vpop.trf.xlu0
      %v1204 = vpop.trf.xlu0
      %v1205 = vpop.trf.xlu0
      %v1206 = vpop.trf.xlu0
      %v1207 = vpop.trf.xlu0
      %1208 = vxpose.xlu0.b32.start [1/16] %v1034, 128
      %1209 = vxpose.xlu0.b32.cont [2/16] 0.0, 128
      %1210 = vxpose.xlu0.b32.cont [3/16] 0.0, 128
      %1211 = vxpose.xlu0.b32.cont [4/16] 0.0, 128
      %1212 = vxpose.xlu0.b32.cont [5/16] 0.0, 128
      %1213 = vxpose.xlu0.b32.cont [6/16] 0.0, 128
      %1214 = vxpose.xlu0.b32.cont [7/16] 0.0, 128
      %1215 = vxpose.xlu0.b32.cont [8/16] 0.0, 128
      %1216 = vxpose.xlu0.b32.cont [9/16] 0.0, 128
      %1217 = vxpose.xlu0.b32.cont [10/16] 0.0, 128
      %1218 = vxpose.xlu0.b32.cont [11/16] 0.0, 128
      %1219 = vxpose.xlu0.b32.cont [12/16] 0.0, 128
      %1220 = vxpose.xlu0.b32.cont [13/16] 0.0, 128
      %1221 = vxpose.xlu0.b32.cont [14/16] 0.0, 128
      %1222 = vxpose.xlu0.b32.cont [15/16] 0.0, 128
      %1223 = vxpose.xlu0.b32.end [16/16] 0.0, 128
      %v1224 = vpop.trf.xlu0
      %v1225 = vpop.trf.xlu0
      %v1226 = vpop.trf.xlu0
      %v1227 = vpop.trf.xlu0
      %v1228 = vpop.trf.xlu0
      %v1229 = vpop.trf.xlu0
      %v1230 = vpop.trf.xlu0
      %v1231 = vpop.trf.xlu0
      %v1232 = vpop.trf.xlu0
      %v1233 = vpop.trf.xlu0
      %v1234 = vpop.trf.xlu0
      %v1235 = vpop.trf.xlu0
      %v1236 = vpop.trf.xlu0
      %v1237 = vpop.trf.xlu0
      %v1238 = vpop.trf.xlu0
      %v1239 = vpop.trf.xlu0
      %1240 = vxpose.xlu0.b32.start [1/16] %v1037, 128
      %1241 = vxpose.xlu0.b32.cont [2/16] 0.0, 128
      %1242 = vxpose.xlu0.b32.cont [3/16] 0.0, 128
      %1243 = vxpose.xlu0.b32.cont [4/16] 0.0, 128
      %1244 = vxpose.xlu0.b32.cont [5/16] 0.0, 128
      %1245 = vxpose.xlu0.b32.cont [6/16] 0.0, 128
      %1246 = vxpose.xlu0.b32.cont [7/16] 0.0, 128
      %1247 = vxpose.xlu0.b32.cont [8/16] 0.0, 128
      %1248 = vxpose.xlu0.b32.cont [9/16] 0.0, 128
      %1249 = vxpose.xlu0.b32.cont [10/16] 0.0, 128
      %1250 = vxpose.xlu0.b32.cont [11/16] 0.0, 128
      %1251 = vxpose.xlu0.b32.cont [12/16] 0.0, 128
      %1252 = vxpose.xlu0.b32.cont [13/16] 0.0, 128
      %1253 = vxpose.xlu0.b32.cont [14/16] 0.0, 128
      %1254 = vxpose.xlu0.b32.cont [15/16] 0.0, 128
      %1255 = vxpose.xlu0.b32.end [16/16] 0.0, 128
      %v1256 = vpop.trf.xlu0
      %v1257 = vpop.trf.xlu0
      %v1258 = vpop.trf.xlu0
      %v1259 = vpop.trf.xlu0
      %v1260 = vpop.trf.xlu0
      %v1261 = vpop.trf.xlu0
      %v1262 = vpop.trf.xlu0
      %v1263 = vpop.trf.xlu0
      %v1264 = vpop.trf.xlu0
      %v1265 = vpop.trf.xlu0
      %v1266 = vpop.trf.xlu0
      %v1267 = vpop.trf.xlu0
      %v1268 = vpop.trf.xlu0
      %v1269 = vpop.trf.xlu0
      %v1270 = vpop.trf.xlu0
      %v1271 = vpop.trf.xlu0
      %1272 = vxpose.xlu0.b32.start [1/16] %v1042, 128
      %1273 = vxpose.xlu0.b32.cont [2/16] 0.0, 128
      %1274 = vxpose.xlu0.b32.cont [3/16] 0.0, 128
      %1275 = vxpose.xlu0.b32.cont [4/16] 0.0, 128
      %1276 = vxpose.xlu0.b32.cont [5/16] 0.0, 128
      %1277 = vxpose.xlu0.b32.cont [6/16] 0.0, 128
      %1278 = vxpose.xlu0.b32.cont [7/16] 0.0, 128
      %1279 = vxpose.xlu0.b32.cont [8/16] 0.0, 128
      %1280 = vxpose.xlu0.b32.cont [9/16] 0.0, 128
      %1281 = vxpose.xlu0.b32.cont [10/16] 0.0, 128
      %1282 = vxpose.xlu0.b32.cont [11/16] 0.0, 128
      %1283 = vxpose.xlu0.b32.cont [12/16] 0.0, 128
      %1284 = vxpose.xlu0.b32.cont [13/16] 0.0, 128
      %1285 = vxpose.xlu0.b32.cont [14/16] 0.0, 128
      %1286 = vxpose.xlu0.b32.cont [15/16] 0.0, 128
      %1287 = vxpose.xlu0.b32.end [16/16] 0.0, 128
      %v1288 = vpop.trf.xlu0
      %v1289 = vpop.trf.xlu0
      %v1290 = vpop.trf.xlu0
      %v1291 = vpop.trf.xlu0
      %v1292 = vpop.trf.xlu0
      %v1293 = vpop.trf.xlu0
      %v1294 = vpop.trf.xlu0
      %v1295 = vpop.trf.xlu0
      %v1296 = vpop.trf.xlu0
      %v1297 = vpop.trf.xlu0
      %v1298 = vpop.trf.xlu0
      %v1299 = vpop.trf.xlu0
      %v1300 = vpop.trf.xlu0
      %v1301 = vpop.trf.xlu0
      %v1302 = vpop.trf.xlu0
      %v1303 = vpop.trf.xlu0
      %1304 = vxpose.xlu0.b32.start [1/16] %v1045, 128
      %1305 = vxpose.xlu0.b32.cont [2/16] 0.0, 128
      %1306 = vxpose.xlu0.b32.cont [3/16] 0.0, 128
      %1307 = vxpose.xlu0.b32.cont [4/16] 0.0, 128
      %1308 = vxpose.xlu0.b32.cont [5/16] 0.0, 128
      %1309 = vxpose.xlu0.b32.cont [6/16] 0.0, 128
      %1310 = vxpose.xlu0.b32.cont [7/16] 0.0, 128
      %1311 = vxpose.xlu0.b32.cont [8/16] 0.0, 128
      %1312 = vxpose.xlu0.b32.cont [9/16] 0.0, 128
      %1313 = vxpose.xlu0.b32.cont [10/16] 0.0, 128
      %1314 = vxpose.xlu0.b32.cont [11/16] 0.0, 128
      %1315 = vxpose.xlu0.b32.cont [12/16] 0.0, 128
      %1316 = vxpose.xlu0.b32.cont [13/16] 0.0, 128
      %1317 = vxpose.xlu0.b32.cont [14/16] 0.0, 128
      %1318 = vxpose.xlu0.b32.cont [15/16] 0.0, 128
      %1319 = vxpose.xlu0.b32.end [16/16] 0.0, 128
      %v1320 = vpop.trf.xlu0
      %v1321 = vpop.trf.xlu0
      %v1322 = vpop.trf.xlu0
      %v1323 = vpop.trf.xlu0
      %v1324 = vpop.trf.xlu0
      %v1325 = vpop.trf.xlu0
      %v1326 = vpop.trf.xlu0
      %v1327 = vpop.trf.xlu0
      %v1328 = vpop.trf.xlu0
      %v1329 = vpop.trf.xlu0
      %v1330 = vpop.trf.xlu0
      %v1331 = vpop.trf.xlu0
      %v1332 = vpop.trf.xlu0
      %v1333 = vpop.trf.xlu0
      %v1334 = vpop.trf.xlu0
      %v1335 = vpop.trf.xlu0
      %1336 = vxpose.xlu0.b32.start [1/16] %v1050, 128
      %1337 = vxpose.xlu0.b32.cont [2/16] 0.0, 128
      %1338 = vxpose.xlu0.b32.cont [3/16] 0.0, 128
      %1339 = vxpose.xlu0.b32.cont [4/16] 0.0, 128
      %1340 = vxpose.xlu0.b32.cont [5/16] 0.0, 128
      %1341 = vxpose.xlu0.b32.cont [6/16] 0.0, 128
      %1342 = vxpose.xlu0.b32.cont [7/16] 0.0, 128
      %1343 = vxpose.xlu0.b32.cont [8/16] 0.0, 128
      %1344 = vxpose.xlu0.b32.cont [9/16] 0.0, 128
      %1345 = vxpose.xlu0.b32.cont [10/16] 0.0, 128
      %1346 = vxpose.xlu0.b32.cont [11/16] 0.0, 128
      %1347 = vxpose.xlu0.b32.cont [12/16] 0.0, 128
      %1348 = vxpose.xlu0.b32.cont [13/16] 0.0, 128
      %1349 = vxpose.xlu0.b32.cont [14/16] 0.0, 128
      %1350 = vxpose.xlu0.b32.cont [15/16] 0.0, 128
      %1351 = vxpose.xlu0.b32.end [16/16] 0.0, 128
      %v1352 = vpop.trf.xlu0
      %v1353 = vpop.trf.xlu0
      %v1354 = vpop.trf.xlu0
      %v1355 = vpop.trf.xlu0
      %v1356 = vpop.trf.xlu0
      %v1357 = vpop.trf.xlu0
      %v1358 = vpop.trf.xlu0
      %v1359 = vpop.trf.xlu0
      %v1360 = vpop.trf.xlu0
      %v1361 = vpop.trf.xlu0
      %v1362 = vpop.trf.xlu0
      %v1363 = vpop.trf.xlu0
      %v1364 = vpop.trf.xlu0
      %v1365 = vpop.trf.xlu0
      %v1366 = vpop.trf.xlu0
      %v1367 = vpop.trf.xlu0
      %1368 = vxpose.xlu0.b32.start [1/16] %v1053, 128
      %1369 = vxpose.xlu0.b32.cont [2/16] 0.0, 128
      %1370 = vxpose.xlu0.b32.cont [3/16] 0.0, 128
      %1371 = vxpose.xlu0.b32.cont [4/16] 0.0, 128
      %1372 = vxpose.xlu0.b32.cont [5/16] 0.0, 128
      %1373 = vxpose.xlu0.b32.cont [6/16] 0.0, 128
      %1374 = vxpose.xlu0.b32.cont [7/16] 0.0, 128
      %1375 = vxpose.xlu0.b32.cont [8/16] 0.0, 128
      %1376 = vxpose.xlu0.b32.cont [9/16] 0.0, 128
      %1377 = vxpose.xlu0.b32.cont [10/16] 0.0, 128
      %1378 = vxpose.xlu0.b32.cont [11/16] 0.0, 128
      %1379 = vxpose.xlu0.b32.cont [12/16] 0.0, 128
      %1380 = vxpose.xlu0.b32.cont [13/16] 0.0, 128
      %1381 = vxpose.xlu0.b32.cont [14/16] 0.0, 128
      %1382 = vxpose.xlu0.b32.cont [15/16] 0.0, 128
      %1383 = vxpose.xlu0.b32.end [16/16] 0.0, 128
      %v1384 = vpop.trf.xlu0
      %v1385 = vpop.trf.xlu0
      %v1386 = vpop.trf.xlu0
      %v1387 = vpop.trf.xlu0
      %v1388 = vpop.trf.xlu0
      %v1389 = vpop.trf.xlu0
      %v1390 = vpop.trf.xlu0
      %v1391 = vpop.trf.xlu0
      %v1392 = vpop.trf.xlu0
      %v1393 = vpop.trf.xlu0
      %v1394 = vpop.trf.xlu0
      %v1395 = vpop.trf.xlu0
      %v1396 = vpop.trf.xlu0
      %v1397 = vpop.trf.xlu0
      %v1398 = vpop.trf.xlu0
      %v1399 = vpop.trf.xlu0
      %1400 = vxpose.xlu0.b32.start [1/16] %v1058, 128
      %1401 = vxpose.xlu0.b32.cont [2/16] 0.0, 128
      %1402 = vxpose.xlu0.b32.cont [3/16] 0.0, 128
      %1403 = vxpose.xlu0.b32.cont [4/16] 0.0, 128
      %1404 = vxpose.xlu0.b32.cont [5/16] 0.0, 128
      %1405 = vxpose.xlu0.b32.cont [6/16] 0.0, 128
      %1406 = vxpose.xlu0.b32.cont [7/16] 0.0, 128
      %1407 = vxpose.xlu0.b32.cont [8/16] 0.0, 128
      %1408 = vxpose.xlu0.b32.cont [9/16] 0.0, 128
      %1409 = vxpose.xlu0.b32.cont [10/16] 0.0, 128
      %1410 = vxpose.xlu0.b32.cont [11/16] 0.0, 128
      %1411 = vxpose.xlu0.b32.cont [12/16] 0.0, 128
      %1412 = vxpose.xlu0.b32.cont [13/16] 0.0, 128
      %1413 = vxpose.xlu0.b32.cont [14/16] 0.0, 128
      %1414 = vxpose.xlu0.b32.cont [15/16] 0.0, 128
      %1415 = vxpose.xlu0.b32.end [16/16] 0.0, 128
      %v1416 = vpop.trf.xlu0
      %v1417 = vpop.trf.xlu0
      %v1418 = vpop.trf.xlu0
      %v1419 = vpop.trf.xlu0
      %v1420 = vpop.trf.xlu0
      %v1421 = vpop.trf.xlu0
      %v1422 = vpop.trf.xlu0
      %v1423 = vpop.trf.xlu0
      %v1424 = vpop.trf.xlu0
      %v1425 = vpop.trf.xlu0
      %v1426 = vpop.trf.xlu0
      %v1427 = vpop.trf.xlu0
      %v1428 = vpop.trf.xlu0
      %v1429 = vpop.trf.xlu0
      %v1430 = vpop.trf.xlu0
      %v1431 = vpop.trf.xlu0
      %1432 = vxpose.xlu0.b32.start [1/16] %v1061, 128
      %1433 = vxpose.xlu0.b32.cont [2/16] 0.0, 128
      %1434 = vxpose.xlu0.b32.cont [3/16] 0.0, 128
      %1435 = vxpose.xlu0.b32.cont [4/16] 0.0, 128
      %1436 = vxpose.xlu0.b32.cont [5/16] 0.0, 128
      %1437 = vxpose.xlu0.b32.cont [6/16] 0.0, 128
      %1438 = vxpose.xlu0.b32.cont [7/16] 0.0, 128
      %1439 = vxpose.xlu0.b32.cont [8/16] 0.0, 128
      %1440 = vxpose.xlu0.b32.cont [9/16] 0.0, 128
      %1441 = vxpose.xlu0.b32.cont [10/16] 0.0, 128
      %1442 = vxpose.xlu0.b32.cont [11/16] 0.0, 128
      %1443 = vxpose.xlu0.b32.cont [12/16] 0.0, 128
      %1444 = vxpose.xlu0.b32.cont [13/16] 0.0, 128
      %1445 = vxpose.xlu0.b32.cont [14/16] 0.0, 128
      %1446 = vxpose.xlu0.b32.cont [15/16] 0.0, 128
      %1447 = vxpose.xlu0.b32.end [16/16] 0.0, 128
      %v1448 = vpop.trf.xlu0
      %v1449 = vpop.trf.xlu0
      %v1450 = vpop.trf.xlu0
      %v1451 = vpop.trf.xlu0
      %v1452 = vpop.trf.xlu0
      %v1453 = vpop.trf.xlu0
      %v1454 = vpop.trf.xlu0
      %v1455 = vpop.trf.xlu0
      %v1456 = vpop.trf.xlu0
      %v1457 = vpop.trf.xlu0
      %v1458 = vpop.trf.xlu0
      %v1459 = vpop.trf.xlu0
      %v1460 = vpop.trf.xlu0
      %v1461 = vpop.trf.xlu0
      %v1462 = vpop.trf.xlu0
      %v1463 = vpop.trf.xlu0
      %1464 = vxpose.xlu0.b32.start [1/16] %v1066, 128
      %1465 = vxpose.xlu0.b32.cont [2/16] 0.0, 128
      %1466 = vxpose.xlu0.b32.cont [3/16] 0.0, 128
      %1467 = vxpose.xlu0.b32.cont [4/16] 0.0, 128
      %1468 = vxpose.xlu0.b32.cont [5/16] 0.0, 128
      %1469 = vxpose.xlu0.b32.cont [6/16] 0.0, 128
      %1470 = vxpose.xlu0.b32.cont [7/16] 0.0, 128
      %1471 = vxpose.xlu0.b32.cont [8/16] 0.0, 128
      %1472 = vxpose.xlu0.b32.cont [9/16] 0.0, 128
      %1473 = vxpose.xlu0.b32.cont [10/16] 0.0, 128
      %1474 = vxpose.xlu0.b32.cont [11/16] 0.0, 128
      %1475 = vxpose.xlu0.b32.cont [12/16] 0.0, 128
      %1476 = vxpose.xlu0.b32.cont [13/16] 0.0, 128
      %1477 = vxpose.xlu0.b32.cont [14/16] 0.0, 128
      %1478 = vxpose.xlu0.b32.cont [15/16] 0.0, 128
      %1479 = vxpose.xlu0.b32.end [16/16] 0.0, 128
      %v1480 = vpop.trf.xlu0
      %v1481 = vpop.trf.xlu0
      %v1482 = vpop.trf.xlu0
      %v1483 = vpop.trf.xlu0
      %v1484 = vpop.trf.xlu0
      %v1485 = vpop.trf.xlu0
      %v1486 = vpop.trf.xlu0
      %v1487 = vpop.trf.xlu0
      %v1488 = vpop.trf.xlu0
      %v1489 = vpop.trf.xlu0
      %v1490 = vpop.trf.xlu0
      %v1491 = vpop.trf.xlu0
      %v1492 = vpop.trf.xlu0
      %v1493 = vpop.trf.xlu0
      %v1494 = vpop.trf.xlu0
      %v1495 = vpop.trf.xlu0
      %1496 = vxpose.xlu0.b32.start [1/16] %v1069, 128
      %1497 = vxpose.xlu0.b32.cont [2/16] 0.0, 128
      %1498 = vxpose.xlu0.b32.cont [3/16] 0.0, 128
      %1499 = vxpose.xlu0.b32.cont [4/16] 0.0, 128
      %1500 = vxpose.xlu0.b32.cont [5/16] 0.0, 128
      %1501 = vxpose.xlu0.b32.cont [6/16] 0.0, 128
      %1502 = vxpose.xlu0.b32.cont [7/16] 0.0, 128
      %1503 = vxpose.xlu0.b32.cont [8/16] 0.0, 128
      %1504 = vxpose.xlu0.b32.cont [9/16] 0.0, 128
      %1505 = vxpose.xlu0.b32.cont [10/16] 0.0, 128
      %1506 = vxpose.xlu0.b32.cont [11/16] 0.0, 128
      %1507 = vxpose.xlu0.b32.cont [12/16] 0.0, 128
      %1508 = vxpose.xlu0.b32.cont [13/16] 0.0, 128
      %1509 = vxpose.xlu0.b32.cont [14/16] 0.0, 128
      %1510 = vxpose.xlu0.b32.cont [15/16] 0.0, 128
      %1511 = vxpose.xlu0.b32.end [16/16] 0.0, 128
      %v1512 = vpop.trf.xlu0
      %v1513 = vpop.trf.xlu0
      %v1514 = vpop.trf.xlu0
      %v1515 = vpop.trf.xlu0
      %v1516 = vpop.trf.xlu0
      %v1517 = vpop.trf.xlu0
      %v1518 = vpop.trf.xlu0
      %v1519 = vpop.trf.xlu0
      %v1520 = vpop.trf.xlu0
      %v1521 = vpop.trf.xlu0
      %v1522 = vpop.trf.xlu0
      %v1523 = vpop.trf.xlu0
      %v1524 = vpop.trf.xlu0
      %v1525 = vpop.trf.xlu0
      %v1526 = vpop.trf.xlu0
      %v1527 = vpop.trf.xlu0
      %1528 = vxpose.xlu0.b32.start [1/16] %v1074, 128
      %1529 = vxpose.xlu0.b32.cont [2/16] 0.0, 128
      %1530 = vxpose.xlu0.b32.cont [3/16] 0.0, 128
      %1531 = vxpose.xlu0.b32.cont [4/16] 0.0, 128
      %1532 = vxpose.xlu0.b32.cont [5/16] 0.0, 128
      %1533 = vxpose.xlu0.b32.cont [6/16] 0.0, 128
      %1534 = vxpose.xlu0.b32.cont [7/16] 0.0, 128
      %1535 = vxpose.xlu0.b32.cont [8/16] 0.0, 128
      %1536 = vxpose.xlu0.b32.cont [9/16] 0.0, 128
      %1537 = vxpose.xlu0.b32.cont [10/16] 0.0, 128
      %1538 = vxpose.xlu0.b32.cont [11/16] 0.0, 128
      %1539 = vxpose.xlu0.b32.cont [12/16] 0.0, 128
      %1540 = vxpose.xlu0.b32.cont [13/16] 0.0, 128
      %1541 = vxpose.xlu0.b32.cont [14/16] 0.0, 128
      %1542 = vxpose.xlu0.b32.cont [15/16] 0.0, 128
      %1543 = vxpose.xlu0.b32.end [16/16] 0.0, 128
      %v1544 = vpop.trf.xlu0
      %v1545 = vpop.trf.xlu0
      %v1546 = vpop.trf.xlu0
      %v1547 = vpop.trf.xlu0
      %v1548 = vpop.trf.xlu0
      %v1549 = vpop.trf.xlu0
      %v1550 = vpop.trf.xlu0
      %v1551 = vpop.trf.xlu0
      %v1552 = vpop.trf.xlu0
      %v1553 = vpop.trf.xlu0
      %v1554 = vpop.trf.xlu0
      %v1555 = vpop.trf.xlu0
      %v1556 = vpop.trf.xlu0
      %v1557 = vpop.trf.xlu0
      %v1558 = vpop.trf.xlu0
      %v1559 = vpop.trf.xlu0
      %1560 = vxpose.xlu0.b32.start [1/16] %v1077, 128
      %1561 = vxpose.xlu0.b32.cont [2/16] 0.0, 128
      %1562 = vxpose.xlu0.b32.cont [3/16] 0.0, 128
      %1563 = vxpose.xlu0.b32.cont [4/16] 0.0, 128
      %1564 = vxpose.xlu0.b32.cont [5/16] 0.0, 128
      %1565 = vxpose.xlu0.b32.cont [6/16] 0.0, 128
      %1566 = vxpose.xlu0.b32.cont [7/16] 0.0, 128
      %1567 = vxpose.xlu0.b32.cont [8/16] 0.0, 128
      %1568 = vxpose.xlu0.b32.cont [9/16] 0.0, 128
      %1569 = vxpose.xlu0.b32.cont [10/16] 0.0, 128
      %1570 = vxpose.xlu0.b32.cont [11/16] 0.0, 128
      %1571 = vxpose.xlu0.b32.cont [12/16] 0.0, 128
      %1572 = vxpose.xlu0.b32.cont [13/16] 0.0, 128
      %1573 = vxpose.xlu0.b32.cont [14/16] 0.0, 128
      %1574 = vxpose.xlu0.b32.cont [15/16] 0.0, 128
      %1575 = vxpose.xlu0.b32.end [16/16] 0.0, 128
      %v1576 = vpop.trf.xlu0
      %v1577 = vpop.trf.xlu0
      %v1578 = vpop.trf.xlu0
      %v1579 = vpop.trf.xlu0
      %v1580 = vpop.trf.xlu0
      %v1581 = vpop.trf.xlu0
      %v1582 = vpop.trf.xlu0
      %v1583 = vpop.trf.xlu0
      %v1584 = vpop.trf.xlu0
      %v1585 = vpop.trf.xlu0
      %v1586 = vpop.trf.xlu0
      %v1587 = vpop.trf.xlu0
      %v1588 = vpop.trf.xlu0
      %v1589 = vpop.trf.xlu0
      %v1590 = vpop.trf.xlu0
      %v1591 = vpop.trf.xlu0
      %v1592 = vpack.c.bf16 %v1096, %v1096
      %v1593 = vpack.c.bf16 %v1128, %v1128
      %v1594 = vpack.c.bf16 %v1160, %v1160
      %v1595 = vpack.c.bf16 %v1192, %v1192
      %v1596 = vpack.c.bf16 %v1224, %v1224
      %v1597 = vpack.c.bf16 %v1256, %v1256
      %v1598 = vpack.c.bf16 %v1288, %v1288
      %v1599 = vpack.c.bf16 %v1320, %v1320
      %v1600 = vpack.c.bf16 %v1352, %v1352
      %v1601 = vpack.c.bf16 %v1384, %v1384
      %v1602 = vpack.c.bf16 %v1416, %v1416
      %v1603 = vpack.c.bf16 %v1448, %v1448
      %v1604 = vpack.c.bf16 %v1480, %v1480
      %v1605 = vpack.c.bf16 %v1512, %v1512
      %v1606 = vpack.c.bf16 %v1544, %v1544
      %v1607 = vpack.c.bf16 %v1576, %v1576
      %vm1608 = vcmask 60416
      %1609 = vst.msk [vmem:[%s177] sm:$0xf] %vm1608, %v1592
      %1610 = vst.msk [vmem:[%s177 + $0x4] sm:$0xf] %vm1608, %v1593
      %1611 = vst.msk [vmem:[%s177 + $0x8] sm:$0xf] %vm1608, %v1594
      %1612 = vst.msk [vmem:[%s177 + $0xc] sm:$0xf] %vm1608, %v1595
      %1613 = vst.msk [vmem:[%s177 + $0x10] sm:$0xf] %vm1608, %v1596
      %1614 = vst.msk [vmem:[%s177 + $0x14] sm:$0xf] %vm1608, %v1597
      %1615 = vst.msk [vmem:[%s177 + $0x18] sm:$0xf] %vm1608, %v1598
      %1616 = vst.msk [vmem:[%s177 + $0x1c] sm:$0xf] %vm1608, %v1599
      %1617 = vst.msk [vmem:[%s177 + $0x20] sm:$0xf] %vm1608, %v1600
      %1618 = vst.msk [vmem:[%s177 + $0x24] sm:$0xf] %vm1608, %v1601
      %1619 = vst.msk [vmem:[%s177 + $0x28] sm:$0xf] %vm1608, %v1602
      %1620 = vst.msk [vmem:[%s177 + $0x2c] sm:$0xf] %vm1608, %v1603
      %1621 = vst.msk [vmem:[%s177 + $0x30] sm:$0xf] %vm1608, %v1604
      %1622 = vst.msk [vmem:[%s177 + $0x34] sm:$0xf] %vm1608, %v1605
      %1623 = vst.msk [vmem:[%s177 + $0x38] sm:$0xf] %vm1608, %v1606
      %1624 = vst.msk [vmem:[%s177 + $0x3c] sm:$0xf] %vm1608, %v1607
      %s1625 = smul.u32 8, %s14
      %p1626 = scmp.lt.s32.totalorder %s1625, 31
      %s1627 = scalar_select %p1626, %s1625, 31
      %s1628 = smul.addr %s1627, 2
      %s1629 = smul.addr %s1628, 4
      %s1630 = scalar_lea.vmem %s3, %s1629
      // Predicated region
      $region33: #{espnetv2_autoencoder_forward.9} parent=31 // pred_check
        %p1631 = pneg %p100
      $region34: #{espnetv2_autoencoder_forward.9} parent=31 // pred_check_branch
        %1633 = sbr.rel (%p1631) target = $region36
      $region35: #{espnetv2_autoencoder_forward.9} parent=31 // pred_region
        %s1634 = smul.u32 8, %s14
      $region36: #{espnetv2_autoencoder_forward.9} parent=31 // pred_fallthru
        _
    $region32: #{espnetv2_autoencoder_forward.9} parent=5 // pred_fallthru
      _
    %p1635 = scmp.le.s32.totalorder 2, %s9
    // Predicated region
    $region37: #{espnetv2_autoencoder_forward.9} parent=5 // pred_check
      %p1636 = pneg %p1635
    $region38: #{espnetv2_autoencoder_forward.9} parent=5 // pred_check_branch
      %1638 = sbr.rel (%p1636) target = $region40
    $region39: #{espnetv2_autoencoder_forward.9} parent=5 // pred_region
      %s1639 = ssub.s32 %s9, 2
      // Predicated region
      $region41: #{espnetv2_autoencoder_forward.9} parent=39 // pred_check
        %p1640 = pneg %p106
      $region42: #{espnetv2_autoencoder_forward.9} parent=39 // pred_check_branch
        %1642 = sbr.rel (%p1640) target = $region44
      $region43: #{espnetv2_autoencoder_forward.9} parent=39 // pred_region
        %s1643 = smul.u32 8, %s15
        %p1644 = scmp.lt.s32.totalorder %s1643, 31
        %s1645 = scalar_select %p1644, %s1643, 31
        %s1646 = smul.addr %s1645, 2
        %s1647 = smul.addr %s1646, 4
        %s1648 = scalar_lea.vmem %s3, %s1647
      $region44: #{espnetv2_autoencoder_forward.9} parent=39 // pred_fallthru
        _
    $region40: #{espnetv2_autoencoder_forward.9} parent=5 // pred_fallthru
      _
  $region6: #{espnetv2_autoencoder_forward.9} parent=0 // loop_footer
    %s13 = sadd.s32 1, %s9
  $region7: #{espnetv2_autoencoder_forward.9} parent=0 // loop_footer_branch
    %8 = sbr.rel target = $region3
  $region8: #{espnetv2_autoencoder_forward.9} parent=0 // loop_exit
    _

// kernel: espnetv2_autoencoder_forward.11
$region0: #{espnetv2_autoencoder_forward.11}
  #allocation0 [shape = 'u32[]', space=smem, size = 0x4, offset = 0x4, fixed_abs, tag = 'smem constant byte address 0x4 - core index']
  #allocation1 [shape = 'u32[144,128]{1,0:T(1,128)}', space=vmem, size = 0x12000, scoped, tag = 'internal scratch']
  %s0 = inlined_call_operand.vmem [shape: bf16[3,2,8,8], index: 0, kind: input, shape index: {}]
  %s1 = inlined_call_operand.vmem [shape: bf16[8,16], index: 1, kind: input, shape index: {}, may-alias: {1,2}]
  %s2 = inlined_call_operand.vmem [shape: bf16[8,16], index: 2, kind: input, shape index: {}, may-alias: {1,2}]
  %s3 = inlined_call_operand.hbm [shape: f32[2,3,16,16], index: 3, kind: output, shape index: {}]
  %s4 = sld [smem:[#allocation0]]
  $region86: #{espnetv2_autoencoder_forward.11} parent=0
    _
  %s6 = ssub.s32 1, %s4
  %s7 = scalar_select 0, %s6, %s4
  $region1: #{espnetv2_autoencoder_forward.11} parent=0
    #allocation2 [shape = 'u8[12288]{0}', space=vmem, size = 0x3000, scoped, tag = 'input window, operand 0']
    #allocation3 [shape = 'u8[49152]{0}', space=vmem, size = 0xc000, scoped, tag = 'output window, operand 0']
    #allocation4 [shape = 's32[2]{0}', space=sflag, size = 0x8, scoped, tag = 'scoped memory for espnetv2_autoencoder_forward.11']
    %8 = vsyncpa [#allocation4], 0
    %s9 = scalar_lea.sflag [#allocation4], 1
    %10 = vsyncpa %s9, 0
    loop: start=0, step=1, limit=4
    $region2: #{espnetv2_autoencoder_forward.11} parent=1 // loop_pre_header
      _
    $region3: #{espnetv2_autoencoder_forward.11} parent=1 // loop_header
      %s12 = sphi 0, %s16
      %p13 = scmp.ge.s32.totalorder %s12, 4
      %s22 = sphi 0, %s24
      %s25 = sphi 0, %s22
      %s26 = sphi 0, %s25
      %s42 = sphi 0, %s26
      %s46 = sphi 0, %s46
      %s48 = sphi 0, %s46
      %s49 = sphi 0, %s48
      %s63 = sphi 0, %s49
      %s67 = sphi 0, %s67
      %s69 = sphi 0, %s67
      %s70 = sphi 0, %s69
      %s84 = sphi 0, %s70
      %s90 = sphi 0, %s92
      %s93 = sphi 0, %s90
      %s94 = sphi 0, %s93
      %s110 = sphi 0, %s94
    $region4: #{espnetv2_autoencoder_forward.11} parent=1 // loop_header_branch
      %15 = sbr.rel (%p13) target = $region8
    $region5: #{espnetv2_autoencoder_forward.11} parent=1 // loop_body
      %s17 = ssub.s32 %s12, 1
      %s18 = ssub.s32 %s12, 2
      %s19 = sadd.s32 %s12, 1
      %s20 = ssub.s32 %s12, %s19
      %p21 = scmp.eq.s32.totalorder %s20, 0
      %s23 = sadd.s32 %s22, 1
      %s24 = scalar_select %p21, %s22, %s23
      %p27 = pneg %p21
      %p28 = scmp.eq.s32.totalorder %s12, 1
      %p29 = por %p27, %p28
      %p30 = scmp.ne.s32.totalorder %s22, %s25
      %p31 = scmp.eq.s32.totalorder %s12, 0
      %p32 = por %p30, %p31
      %p33 = scmp.ne.s32.totalorder %s22, %s25
      %p34 = scmp.eq.s32.totalorder %s17, 1
      %p35 = por %p33, %p34
      %p36 = scmp.ne.s32.totalorder %s25, %s26
      %p37 = scmp.eq.s32.totalorder %s17, 0
      %p38 = por %p36, %p37
      %p39 = scmp.ne.s32.totalorder %s25, %s26
      %p40 = scmp.eq.s32.totalorder %s18, 1
      %p41 = por %p39, %p40
      %p43 = scmp.ne.s32.totalorder %s26, %s42
      %p44 = scmp.eq.s32.totalorder %s18, 0
      %p45 = por %p43, %p44
      %s47 = sadd.s32 %s46, 1
      %p50 = scmp.eq.s32.totalorder %s12, 1
      %p51 = scmp.ne.s32.totalorder %s46, %s48
      %p52 = scmp.eq.s32.totalorder %s12, 0
      %p53 = por %p51, %p52
      %p54 = scmp.ne.s32.totalorder %s46, %s48
      %p55 = scmp.eq.s32.totalorder %s17, 1
      %p56 = por %p54, %p55
      %p57 = scmp.ne.s32.totalorder %s48, %s49
      %p58 = scmp.eq.s32.totalorder %s17, 0
      %p59 = por %p57, %p58
      %p60 = scmp.ne.s32.totalorder %s48, %s49
      %p61 = scmp.eq.s32.totalorder %s18, 1
      %p62 = por %p60, %p61
      %p64 = scmp.ne.s32.totalorder %s49, %s63
      %p65 = scmp.eq.s32.totalorder %s18, 0
      %p66 = por %p64, %p65
      %s68 = sadd.s32 %s67, 1
      %p71 = scmp.eq.s32.totalorder %s12, 1
      %p72 = scmp.ne.s32.totalorder %s67, %s69
      %p73 = scmp.eq.s32.totalorder %s12, 0
      %p74 = por %p72, %p73
      %p75 = scmp.ne.s32.totalorder %s67, %s69
      %p76 = scmp.eq.s32.totalorder %s17, 1
      %p77 = por %p75, %p76
      %p78 = scmp.ne.s32.totalorder %s69, %s70
      %p79 = scmp.eq.s32.totalorder %s17, 0
      %p80 = por %p78, %p79
      %p81 = scmp.ne.s32.totalorder %s69, %s70
      %p82 = scmp.eq.s32.totalorder %s18, 1
      %p83 = por %p81, %p82
      %p85 = scmp.ne.s32.totalorder %s70, %s84
      %p86 = scmp.eq.s32.totalorder %s18, 0
      %p87 = por %p85, %p86
      %s88 = ssub.s32 %s12, %s19
      %p89 = scmp.eq.s32.totalorder %s88, 0
      %s91 = sadd.s32 %s90, 1
      %s92 = scalar_select %p89, %s90, %s91
      %p95 = pneg %p89
      %p96 = scmp.eq.s32.totalorder %s12, 1
      %p97 = por %p95, %p96
      %p98 = scmp.ne.s32.totalorder %s90, %s93
      %p99 = scmp.eq.s32.totalorder %s12, 0
      %p100 = por %p98, %p99
      %p101 = scmp.ne.s32.totalorder %s90, %s93
      %p102 = scmp.eq.s32.totalorder %s17, 1
      %p103 = por %p101, %p102
      %p104 = scmp.ne.s32.totalorder %s93, %s94
      %p105 = scmp.eq.s32.totalorder %s17, 0
      %p106 = por %p104, %p105
      %p107 = scmp.ne.s32.totalorder %s93, %s94
      %p108 = scmp.eq.s32.totalorder %s18, 1
      %p109 = por %p107, %p108
      %p111 = scmp.ne.s32.totalorder %s94, %s110
      %p112 = scmp.eq.s32.totalorder %s18, 0
      %p113 = por %p111, %p112
      %p114 = scmp.le.s32.totalorder 1, %s12
      %p115 = scmp.lt.s32.totalorder %s12, 3
      %p116 = pnand %p114, %p115
      %p117 = pneg %p116
      // Predicated region
      $region9: #{espnetv2_autoencoder_forward.11} parent=5 // pred_check
        _
      $region10: #{espnetv2_autoencoder_forward.11} parent=5 // pred_check_branch
        %119 = sbr.rel (%p116) target = $region12
      $region11: #{espnetv2_autoencoder_forward.11} parent=5 // pred_region
        %s120 = ssub.s32 %s12, 1
        // Predicated region
        $region13: #{espnetv2_autoencoder_forward.11} parent=11 // pred_check
          %p121 = pneg %p59
        $region14: #{espnetv2_autoencoder_forward.11} parent=11 // pred_check_branch
          %123 = sbr.rel (%p121) target = $region16
        $region15: #{espnetv2_autoencoder_forward.11} parent=11 // pred_region
          _
        $region16: #{espnetv2_autoencoder_forward.11} parent=11 // pred_fallthru
          _
        // Predicated region
        $region17: #{espnetv2_autoencoder_forward.11} parent=11 // pred_check
          %p124 = pneg %p80
        $region18: #{espnetv2_autoencoder_forward.11} parent=11 // pred_check_branch
          %126 = sbr.rel (%p124) target = $region20
        $region19: #{espnetv2_autoencoder_forward.11} parent=11 // pred_region
          _
        $region20: #{espnetv2_autoencoder_forward.11} parent=11 // pred_fallthru
          _
      $region12: #{espnetv2_autoencoder_forward.11} parent=5 // pred_fallthru
        _
      %p127 = scmp.lt.s32.totalorder %s12, 2
      // Predicated region
      $region21: #{espnetv2_autoencoder_forward.11} parent=5 // pred_check
        %p128 = pneg %p127
      $region22: #{espnetv2_autoencoder_forward.11} parent=5 // pred_check_branch
        %130 = sbr.rel (%p128) target = $region24
      $region23: #{espnetv2_autoencoder_forward.11} parent=5 // pred_region
        // Predicated region
        $region25: #{espnetv2_autoencoder_forward.11} parent=23 // pred_check
          %p131 = pneg %p32
        $region26: #{espnetv2_autoencoder_forward.11} parent=23 // pred_check_branch
          %133 = sbr.rel (%p131) target = $region28
        $region27: #{espnetv2_autoencoder_forward.11} parent=23 // pred_region
          %s134 = sand.u32 %s22, 1
          %s135 = sand.u32 %s22, 1
          %s136 = smul.addr %s135, 12
          %s137 = scalar_lea.vmem [#allocation2], %s136
          %s138 = smul.addr %s12, 4
          %s139 = scalar_lea.vmem %s0, %s138
          // Predicated region
          $region29: #{espnetv2_autoencoder_forward.11} parent=27 // pred_check
            _
          $region30: #{espnetv2_autoencoder_forward.11} parent=27 // pred_check_branch
            %141 = sbr.rel (0) target = $region32
          $region31: #{espnetv2_autoencoder_forward.11} parent=27 // pred_region
            // Predicated region
            $region33: #{espnetv2_autoencoder_forward.11} parent=31 // pred_check
              _
            $region34: #{espnetv2_autoencoder_forward.11} parent=31 // pred_check_branch
              %143 = sbr.rel target = $region36
            $region35: #{espnetv2_autoencoder_forward.11} parent=31 // pred_region
              // Predicated region
              $region48: #{espnetv2_autoencoder_forward.11} parent=35 // pred_check
                _
              $region49: #{espnetv2_autoencoder_forward.11} parent=35 // pred_check_branch
                %162 = sbr.rel (0) target = $region51
              $region50: #{espnetv2_autoencoder_forward.11} parent=35 // pred_region
                loop: start=0, step=1, limit=1
                $region52: #{espnetv2_autoencoder_forward.11} parent=50 // loop_pre_header
                  _
                $region53: #{espnetv2_autoencoder_forward.11} parent=50 // loop_header
                  %s164 = sphi 0, %s168
                  %p165 = scmp.ge.s32.totalorder %s164, 1
                  %s169 = sphi %s139, %s139
                  %s170 = sphi %s137, %s137
                $region54: #{espnetv2_autoencoder_forward.11} parent=50 // loop_header_branch
                  %167 = sbr.rel (%p165) target = $region58
                $region55: #{espnetv2_autoencoder_forward.11} parent=50 // loop_body
                  _
                $region56: #{espnetv2_autoencoder_forward.11} parent=50 // loop_footer
                  %s168 = sadd.s32 1, %s164
                $region57: #{espnetv2_autoencoder_forward.11} parent=50 // loop_footer_branch
                  %163 = sbr.rel target = $region53
                $region58: #{espnetv2_autoencoder_forward.11} parent=50 // loop_exit
                  _
                loop: start=0, step=1, limit=1
                $region59: #{espnetv2_autoencoder_forward.11} parent=50 // loop_pre_header
                  _
                $region60: #{espnetv2_autoencoder_forward.11} parent=50 // loop_header
                  %s173 = sphi 0, %s177
                  %p174 = scmp.ge.s32.totalorder %s173, 1
                  %s178 = sphi %s139, %s139
                  %s179 = sphi %s137, %s137
                $region61: #{espnetv2_autoencoder_forward.11} parent=50 // loop_header_branch
                  %176 = sbr.rel (%p174) target = $region65
                $region62: #{espnetv2_autoencoder_forward.11} parent=50 // loop_body
                  %v180 = vld [vmem:[%s178] sm:$0xf]
                  %181 = vst [vmem:[%s179] sm:$0xf] %v180
                  %v182 = vld [vmem:[%s178 + $0x8] sm:$0xf]
                  %183 = vst [vmem:[%s179 + $0x4] sm:$0xf] %v182
                  %v184 = vld [vmem:[%s178 + $0x10] sm:$0xf]
                  %185 = vst [vmem:[%s179 + $0x8] sm:$0xf] %v184
                $region63: #{espnetv2_autoencoder_forward.11} parent=50 // loop_footer
                  %s177 = sadd.s32 1, %s173
                $region64: #{espnetv2_autoencoder_forward.11} parent=50 // loop_footer_branch
                  %172 = sbr.rel target = $region60
                $region65: #{espnetv2_autoencoder_forward.11} parent=50 // loop_exit
                  _
              $region51: #{espnetv2_autoencoder_forward.11} parent=35 // pred_fallthru
                _
            $region36: #{espnetv2_autoencoder_forward.11} parent=31 // pred_fallthru
              _
            // Predicated region
            $region37: #{espnetv2_autoencoder_forward.11} parent=31 // pred_check
              _
            $region38: #{espnetv2_autoencoder_forward.11} parent=31 // pred_check_branch
              %145 = sbr.rel (0) target = $region40
            $region39: #{espnetv2_autoencoder_forward.11} parent=31 // pred_region
              loop: start=0, step=1, limit=1
              $region41: #{espnetv2_autoencoder_forward.11} parent=39 // loop_pre_header
                _
              $region42: #{espnetv2_autoencoder_forward.11} parent=39 // loop_header
                %s148 = sphi 0, %s152
                %p149 = scmp.ge.s32.totalorder %s148, 1
                %s153 = sphi %s139, %s139
                %s154 = sphi %s137, %s137
              $region43: #{espnetv2_autoencoder_forward.11} parent=39 // loop_header_branch
                %151 = sbr.rel (%p149) target = $region47
              $region44: #{espnetv2_autoencoder_forward.11} parent=39 // loop_body
                %v155 = vld [vmem:[%s153] sm:$0xf]
                %156 = vst [vmem:[%s154] sm:$0xf] %v155
                %v157 = vld [vmem:[%s153 + $0x8] sm:$0xf]
                %158 = vst [vmem:[%s154 + $0x4] sm:$0xf] %v157
                %v159 = vld [vmem:[%s153 + $0x10] sm:$0xf]
                %160 = vst [vmem:[%s154 + $0x8] sm:$0xf] %v159
              $region45: #{espnetv2_autoencoder_forward.11} parent=39 // loop_footer
                %s152 = sadd.s32 1, %s148
              $region46: #{espnetv2_autoencoder_forward.11} parent=39 // loop_footer_branch
                %147 = sbr.rel target = $region42
              $region47: #{espnetv2_autoencoder_forward.11} parent=39 // loop_exit
                _
            $region40: #{espnetv2_autoencoder_forward.11} parent=31 // pred_fallthru
              _
          $region32: #{espnetv2_autoencoder_forward.11} parent=27 // pred_fallthru
            _
          %186 = vnop
        $region28: #{espnetv2_autoencoder_forward.11} parent=23 // pred_fallthru
          _
      $region24: #{espnetv2_autoencoder_forward.11} parent=5 // pred_fallthru
        _
      %p187 = scmp.le.s32.totalorder 1, %s12
      %p188 = scmp.lt.s32.totalorder %s12, 3
      %p189 = pnand %p187, %p188
      %p190 = pneg %p189
      // Predicated region
      $region66: #{espnetv2_autoencoder_forward.11} parent=5 // pred_check
        _
      $region67: #{espnetv2_autoencoder_forward.11} parent=5 // pred_check_branch
        %192 = sbr.rel (%p189) target = $region69
      $region68: #{espnetv2_autoencoder_forward.11} parent=5 // pred_region
        %s193 = ssub.s32 %s12, 1
        %s194 = sand.u32 %s25, 1
        %s195 = sand.u32 %s25, 1
        %s196 = smul.addr %s195, 12
        %s197 = scalar_lea.vmem [#allocation2], %s196
        // Predicated region
        $region70: #{espnetv2_autoencoder_forward.11} parent=68 // pred_check
          %p198 = pneg %p38
        $region71: #{espnetv2_autoencoder_forward.11} parent=68 // pred_check_branch
          %200 = sbr.rel (%p198) target = $region73
        $region72: #{espnetv2_autoencoder_forward.11} parent=68 // pred_region
          _
        $region73: #{espnetv2_autoencoder_forward.11} parent=68 // pred_fallthru
          _
        %s201 = sand.u32 %s25, 1
        %s202 = sand.u32 %s25, 1
        %s203 = smul.addr %s202, 12
        %s204 = scalar_lea.vmem [#allocation2], %s203
        %p205 = pneg %p38
        %p206 = pneg %p35
        %p207 = pneg %p59
        %p208 = pneg %p56
        %p209 = pneg %p80
        %p210 = pneg %p77
        %p211 = pneg %p106
        %p212 = pneg %p103
        %s213 = sand.u32 %s93, 1
        %s214 = scalar_lea.sflag [#allocation4], %s213
        %s215 = sand.u32 %s93, 1
        %s216 = smul.addr %s215, 48
        %s217 = scalar_lea.vmem [#allocation3], %s216
        %v219 = vld [vmem:[%s197] sm:$0xf]
        %v220 = vld [vmem:[%s197 + $0x4] sm:$0xf]
        %v221 = vld [vmem:[%s197 + $0x8] sm:$0xf]
        %v222 = vld [vmem:[%s1] sm:$0xf]
        %v223 = vld [vmem:[%s2] sm:$0xf]
        %v227 = vunpack.c.l.b16 %v219
        %v228 = vunpack.c.l.b16 %v220
        %v229 = vunpack.c.l.b16 %v221
        %v230 = vpack.c.b16 %v228, %v227
        %v231 = vpack.c.b16 %v229, %v229
        %vm232 = vcmask 64512
        %v234 = vsel %vm232, %v230, 0
        %v237 = vsel %vm232, %v231, 0
        %vm239 = vcmask 1043456
        %v241 = vsel %vm239, %v222, 0
        %243 = vmatprep.subr.bf16.mxu0 0
        %244 = vmatpush1.bf16.msra.mxu0 %v241
        %245 = vmatprep.subr.bf16.mxu0 0
        %246 = vmatpush1.bf16.msra.mxu0 0
        %247 = vmatprep.subr.bf16.mxu0 0
        %248 = vmatpush1.bf16.msra.mxu0 0
        %249 = vmatprep.subr.bf16.mxu0 0
        %250 = vmatpush1.bf16.msra.mxu0 0
        %251 = vmatprep.subr.bf16.mxu0 0
        %252 = vmatpush1.bf16.msra.mxu0 0
        %253 = vmatprep.subr.bf16.mxu0 0
        %254 = vmatpush1.bf16.msra.mxu0 0
        %255 = vmatprep.subr.bf16.mxu0 0
        %256 = vmatpush1.bf16.msra.mxu0 0
        %257 = vmatprep.subr.bf16.mxu0 0
        %258 = vmatpush1.bf16.msra.mxu0 0
        %259 = vmatprep.subr.bf16.mxu0 0
        %260 = vmatpush1.bf16.msra.mxu0 0
        %261 = vmatprep.subr.bf16.mxu0 0
        %262 = vmatpush1.bf16.msra.mxu0 0
        %263 = vmatprep.subr.bf16.mxu0 0
        %264 = vmatpush1.bf16.msra.mxu0 0
        %265 = vmatprep.subr.bf16.mxu0 0
        %266 = vmatpush1.bf16.msra.mxu0 0
        %267 = vmatprep.subr.bf16.mxu0 0
        %268 = vmatpush1.bf16.msra.mxu0 0
        %269 = vmatprep.subr.bf16.mxu0 0
        %270 = vmatpush1.bf16.msra.mxu0 0
        %271 = vmatprep.subr.bf16.mxu0 0
        %272 = vmatpush1.bf16.msra.mxu0 0
        %273 = vmatprep.subr.bf16.mxu0 0
        %274 = vmatpush1.bf16.msra.mxu0 0
        %275 = vmatprep.mubr.bf16.mxu0 0
        %276 = vmatmul.mubr.bf16.gmra.mrb[0].mxu0 %v234
        %v277 = vpop.f32.mrb[0].mxu0
        %v278 = vadd.f32 0.0, %v277
        %v279 = vpop.f32.mrb[0].mxu0
        %v280 = vpop.f32.mrb[0].mxu0
        %v281 = vadd.f32 0.0, %v280
        %v282 = vpop.f32.mrb[0].mxu0
        %283 = vmatprep.mubr.bf16.mxu0 0
        %284 = vmatmul.mubr.bf16.gmra.mrb[0].mxu0 %v237
        %v285 = vpop.f32.mrb[0].mxu0
        %v286 = vadd.f32 0.0, %v285
        %v287 = vpop.f32.mrb[0].mxu0
        %v288 = vpop.f32.mrb[0].mxu0
        %v289 = vpop.f32.mrb[0].mxu0
        %290 = vdwg.mxu0
        %291 = vxpose.xlu0.b32.start [1/16] %v278, 128
        %292 = vxpose.xlu0.b32.cont [2/16] 0.0, 128
        %293 = vxpose.xlu0.b32.cont [3/16] 0.0, 128
        %294 = vxpose.xlu0.b32.cont [4/16] 0.0, 128
        %295 = vxpose.xlu0.b32.cont [5/16] 0.0, 128
        %296 = vxpose.xlu0.b32.cont [6/16] 0.0, 128
        %297 = vxpose.xlu0.b32.cont [7/16] 0.0, 128
        %298 = vxpose.xlu0.b32.cont [8/16] 0.0, 128
        %299 = vxpose.xlu0.b32.cont [9/16] 0.0, 128
        %300 = vxpose.xlu0.b32.cont [10/16] 0.0, 128
        %301 = vxpose.xlu0.b32.cont [11/16] 0.0, 128
        %302 = vxpose.xlu0.b32.cont [12/16] 0.0, 128
        %303 = vxpose.xlu0.b32.cont [13/16] 0.0, 128
        %304 = vxpose.xlu0.b32.cont [14/16] 0.0, 128
        %305 = vxpose.xlu0.b32.cont [15/16] 0.0, 128
        %306 = vxpose.xlu0.b32.end [16/16] 0.0, 128
        %v307 = vpop.trf.xlu0
        %v308 = vpop.trf.xlu0
        %v309 = vpop.trf.xlu0
        %v310 = vpop.trf.xlu0
        %v311 = vpop.trf.xlu0
        %v312 = vpop.trf.xlu0
        %v313 = vpop.trf.xlu0
        %v314 = vpop.trf.xlu0
        %v315 = vpop.trf.xlu0
        %v316 = vpop.trf.xlu0
        %v317 = vpop.trf.xlu0
        %v318 = vpop.trf.xlu0
        %v319 = vpop.trf.xlu0
        %v320 = vpop.trf.xlu0
        %v321 = vpop.trf.xlu0
        %v322 = vpop.trf.xlu0
        %323 = vxpose.xlu0.b32.start [1/16] %v281, 128
        %324 = vxpose.xlu0.b32.cont [2/16] 0.0, 128
        %325 = vxpose.xlu0.b32.cont [3/16] 0.0, 128
        %326 = vxpose.xlu0.b32.cont [4/16] 0.0, 128
        %327 = vxpose.xlu0.b32.cont [5/16] 0.0, 128
        %328 = vxpose.xlu0.b32.cont [6/16] 0.0, 128
        %329 = vxpose.xlu0.b32.cont [7/16] 0.0, 128
        %330 = vxpose.xlu0.b32.cont [8/16] 0.0, 128
        %331 = vxpose.xlu0.b32.cont [9/16] 0.0, 128
        %332 = vxpose.xlu0.b32.cont [10/16] 0.0, 128
        %333 = vxpose.xlu0.b32.cont [11/16] 0.0, 128
        %334 = vxpose.xlu0.b32.cont [12/16] 0.0, 128
        %335 = vxpose.xlu0.b32.cont [13/16] 0.0, 128
        %336 = vxpose.xlu0.b32.cont [14/16] 0.0, 128
        %337 = vxpose.xlu0.b32.cont [15/16] 0.0, 128
        %338 = vxpose.xlu0.b32.end [16/16] 0.0, 128
        %v339 = vpop.trf.xlu0
        %v340 = vpop.trf.xlu0
        %v341 = vpop.trf.xlu0
        %v342 = vpop.trf.xlu0
        %v343 = vpop.trf.xlu0
        %v344 = vpop.trf.xlu0
        %v345 = vpop.trf.xlu0
        %v346 = vpop.trf.xlu0
        %v347 = vpop.trf.xlu0
        %v348 = vpop.trf.xlu0
        %v349 = vpop.trf.xlu0
        %v350 = vpop.trf.xlu0
        %v351 = vpop.trf.xlu0
        %v352 = vpop.trf.xlu0
        %v353 = vpop.trf.xlu0
        %v354 = vpop.trf.xlu0
        %355 = vxpose.xlu0.b32.start [1/16] %v286, 128
        %356 = vxpose.xlu0.b32.cont [2/16] 0.0, 128
        %357 = vxpose.xlu0.b32.cont [3/16] 0.0, 128
        %358 = vxpose.xlu0.b32.cont [4/16] 0.0, 128
        %359 = vxpose.xlu0.b32.cont [5/16] 0.0, 128
        %360 = vxpose.xlu0.b32.cont [6/16] 0.0, 128
        %361 = vxpose.xlu0.b32.cont [7/16] 0.0, 128
        %362 = vxpose.xlu0.b32.cont [8/16] 0.0, 128
        %363 = vxpose.xlu0.b32.cont [9/16] 0.0, 128
        %364 = vxpose.xlu0.b32.cont [10/16] 0.0, 128
        %365 = vxpose.xlu0.b32.cont [11/16] 0.0, 128
        %366 = vxpose.xlu0.b32.cont [12/16] 0.0, 128
        %367 = vxpose.xlu0.b32.cont [13/16] 0.0, 128
        %368 = vxpose.xlu0.b32.cont [14/16] 0.0, 128
        %369 = vxpose.xlu0.b32.cont [15/16] 0.0, 128
        %370 = vxpose.xlu0.b32.end [16/16] 0.0, 128
        %v371 = vpop.trf.xlu0
        %v372 = vpop.trf.xlu0
        %v373 = vpop.trf.xlu0
        %v374 = vpop.trf.xlu0
        %v375 = vpop.trf.xlu0
        %v376 = vpop.trf.xlu0
        %v377 = vpop.trf.xlu0
        %v378 = vpop.trf.xlu0
        %v379 = vpop.trf.xlu0
        %v380 = vpop.trf.xlu0
        %v381 = vpop.trf.xlu0
        %v382 = vpop.trf.xlu0
        %v383 = vpop.trf.xlu0
        %v384 = vpop.trf.xlu0
        %v385 = vpop.trf.xlu0
        %v386 = vpop.trf.xlu0
        %v387 = vpack.c.bf16 %v308, %v307
        %v388 = vpack.c.bf16 %v340, %v339
        %v389 = vpack.c.bf16 %v372, %v371
        %v391 = vsel %vm232, %v387, 0
        %v394 = vsel %vm232, %v388, 0
        %v397 = vsel %vm232, %v389, 0
        %v400 = vsel %vm239, %v223, 0
        %402 = vmatprep.subr.bf16.mxu0 0
        %403 = vmatpush1.bf16.msra.mxu0 %v400
        %404 = vmatprep.subr.bf16.mxu0 0
        %405 = vmatpush1.bf16.msra.mxu0 0
        %406 = vmatprep.subr.bf16.mxu0 0
        %407 = vmatpush1.bf16.msra.mxu0 0
        %408 = vmatprep.subr.bf16.mxu0 0
        %409 = vmatpush1.bf16.msra.mxu0 0
        %410 = vmatprep.subr.bf16.mxu0 0
        %411 = vmatpush1.bf16.msra.mxu0 0
        %412 = vmatprep.subr.bf16.mxu0 0
        %413 = vmatpush1.bf16.msra.mxu0 0
        %414 = vmatprep.subr.bf16.mxu0 0
        %415 = vmatpush1.bf16.msra.mxu0 0
        %416 = vmatprep.subr.bf16.mxu0 0
        %417 = vmatpush1.bf16.msra.mxu0 0
        %418 = vmatprep.subr.bf16.mxu0 0
        %419 = vmatpush1.bf16.msra.mxu0 0
        %420 = vmatprep.subr.bf16.mxu0 0
        %421 = vmatpush1.bf16.msra.mxu0 0
        %422 = vmatprep.subr.bf16.mxu0 0
        %423 = vmatpush1.bf16.msra.mxu0 0
        %424 = vmatprep.subr.bf16.mxu0 0
        %425 = vmatpush1.bf16.msra.mxu0 0
        %426 = vmatprep.subr.bf16.mxu0 0
        %427 = vmatpush1.bf16.msra.mxu0 0
        %428 = vmatprep.subr.bf16.mxu0 0
        %429 = vmatpush1.bf16.msra.mxu0 0
        %430 = vmatprep.subr.bf16.mxu0 0
        %431 = vmatpush1.bf16.msra.mxu0 0
        %432 = vmatprep.subr.bf16.mxu0 0
        %433 = vmatpush1.bf16.msra.mxu0 0
        %434 = vmatprep.mubr.bf16.mxu0 0
        %435 = vmatmul.mubr.bf16.gmra.mrb[0].mxu0 %v391
        %v436 = vpop.f32.mrb[0].mxu0
        %v437 = vadd.f32 0.0, %v436
        %v438 = vpop.f32.mrb[0].mxu0
        %v439 = vpop.f32.mrb[0].mxu0
        %v440 = vadd.f32 0.0, %v439
        %v441 = vpop.f32.mrb[0].mxu0
        %442 = vmatprep.mubr.bf16.mxu0 0
        %443 = vmatmul.mubr.bf16.gmra.mrb[0].mxu0 %v394
        %v444 = vpop.f32.mrb[0].mxu0
        %v445 = vadd.f32 0.0, %v444
        %v446 = vpop.f32.mrb[0].mxu0
        %v447 = vpop.f32.mrb[0].mxu0
        %v448 = vadd.f32 0.0, %v447
        %v449 = vpop.f32.mrb[0].mxu0
        %450 = vmatprep.mubr.bf16.mxu0 0
        %451 = vmatmul.mubr.bf16.gmra.mrb[0].mxu0 %v397
        %v452 = vpop.f32.mrb[0].mxu0
        %v453 = vadd.f32 0.0, %v452
        %v454 = vpop.f32.mrb[0].mxu0
        %v455 = vpop.f32.mrb[0].mxu0
        %v456 = vadd.f32 0.0, %v455
        %v457 = vpop.f32.mrb[0].mxu0
        %458 = vdwg.mxu0
        %459 = vxpose.xlu0.b32.start [1/16] %v437, 128
        %460 = vxpose.xlu0.b32.cont [2/16] %v440, 128
        %461 = vxpose.xlu0.b32.cont [3/16] 0.0, 128
        %462 = vxpose.xlu0.b32.cont [4/16] 0.0, 128
        %463 = vxpose.xlu0.b32.cont [5/16] 0.0, 128
        %464 = vxpose.xlu0.b32.cont [6/16] 0.0, 128
        %465 = vxpose.xlu0.b32.cont [7/16] 0.0, 128
        %466 = vxpose.xlu0.b32.cont [8/16] 0.0, 128
        %467 = vxpose.xlu0.b32.cont [9/16] 0.0, 128
        %468 = vxpose.xlu0.b32.cont [10/16] 0.0, 128
        %469 = vxpose.xlu0.b32.cont [11/16] 0.0, 128
        %470 = vxpose.xlu0.b32.cont [12/16] 0.0, 128
        %471 = vxpose.xlu0.b32.cont [13/16] 0.0, 128
        %472 = vxpose.xlu0.b32.cont [14/16] 0.0, 128
        %473 = vxpose.xlu0.b32.cont [15/16] 0.0, 128
        %474 = vxpose.xlu0.b32.end [16/16] 0.0, 128
        %v475 = vpop.trf.xlu0
        %v476 = vpop.trf.xlu0
        %v477 = vpop.trf.xlu0
        %v478 = vpop.trf.xlu0
        %v479 = vpop.trf.xlu0
        %v480 = vpop.trf.xlu0
        %v481 = vpop.trf.xlu0
        %v482 = vpop.trf.xlu0
        %v483 = vpop.trf.xlu0
        %v484 = vpop.trf.xlu0
        %v485 = vpop.trf.xlu0
        %v486 = vpop.trf.xlu0
        %v487 = vpop.trf.xlu0
        %v488 = vpop.trf.xlu0
        %v489 = vpop.trf.xlu0
        %v490 = vpop.trf.xlu0
        %491 = vxpose.xlu0.b32.start [1/16] %v445, 128
        %492 = vxpose.xlu0.b32.cont [2/16] %v448, 128
        %493 = vxpose.xlu0.b32.cont [3/16] 0.0, 128
        %494 = vxpose.xlu0.b32.cont [4/16] 0.0, 128
        %495 = vxpose.xlu0.b32.cont [5/16] 0.0, 128
        %496 = vxpose.xlu0.b32.cont [6/16] 0.0, 128
        %497 = vxpose.xlu0.b32.cont [7/16] 0.0, 128
        %498 = vxpose.xlu0.b32.cont [8/16] 0.0, 128
        %499 = vxpose.xlu0.b32.cont [9/16] 0.0, 128
        %500 = vxpose.xlu0.b32.cont [10/16] 0.0, 128
        %501 = vxpose.xlu0.b32.cont [11/16] 0.0, 128
        %502 = vxpose.xlu0.b32.cont [12/16] 0.0, 128
        %503 = vxpose.xlu0.b32.cont [13/16] 0.0, 128
        %504 = vxpose.xlu0.b32.cont [14/16] 0.0, 128
        %505 = vxpose.xlu0.b32.cont [15/16] 0.0, 128
        %506 = vxpose.xlu0.b32.end [16/16] 0.0, 128
        %v507 = vpop.trf.xlu0
        %v508 = vpop.trf.xlu0
        %v509 = vpop.trf.xlu0
        %v510 = vpop.trf.xlu0
        %v511 = vpop.trf.xlu0
        %v512 = vpop.trf.xlu0
        %v513 = vpop.trf.xlu0
        %v514 = vpop.trf.xlu0
        %v515 = vpop.trf.xlu0
        %v516 = vpop.trf.xlu0
        %v517 = vpop.trf.xlu0
        %v518 = vpop.trf.xlu0
        %v519 = vpop.trf.xlu0
        %v520 = vpop.trf.xlu0
        %v521 = vpop.trf.xlu0
        %v522 = vpop.trf.xlu0
        %523 = vxpose.xlu0.b32.start [1/16] %v453, 128
        %524 = vxpose.xlu0.b32.cont [2/16] %v456, 128
        %525 = vxpose.xlu0.b32.cont [3/16] 0.0, 128
        %526 = vxpose.xlu0.b32.cont [4/16] 0.0, 128
        %527 = vxpose.xlu0.b32.cont [5/16] 0.0, 128
        %528 = vxpose.xlu0.b32.cont [6/16] 0.0, 128
        %529 = vxpose.xlu0.b32.cont [7/16] 0.0, 128
        %530 = vxpose.xlu0.b32.cont [8/16] 0.0, 128
        %531 = vxpose.xlu0.b32.cont [9/16] 0.0, 128
        %532 = vxpose.xlu0.b32.cont [10/16] 0.0, 128
        %533 = vxpose.xlu0.b32.cont [11/16] 0.0, 128
        %534 = vxpose.xlu0.b32.cont [12/16] 0.0, 128
        %535 = vxpose.xlu0.b32.cont [13/16] 0.0, 128
        %536 = vxpose.xlu0.b32.cont [14/16] 0.0, 128
        %537 = vxpose.xlu0.b32.cont [15/16] 0.0, 128
        %538 = vxpose.xlu0.b32.end [16/16] 0.0, 128
        %v539 = vpop.trf.xlu0
        %v540 = vpop.trf.xlu0
        %v541 = vpop.trf.xlu0
        %v542 = vpop.trf.xlu0
        %v543 = vpop.trf.xlu0
        %v544 = vpop.trf.xlu0
        %v545 = vpop.trf.xlu0
        %v546 = vpop.trf.xlu0
        %v547 = vpop.trf.xlu0
        %v548 = vpop.trf.xlu0
        %v549 = vpop.trf.xlu0
        %v550 = vpop.trf.xlu0
        %v551 = vpop.trf.xlu0
        %v552 = vpop.trf.xlu0
        %v553 = vpop.trf.xlu0
        %v554 = vpop.trf.xlu0
        %v555 = vand.u32 2147483647, %v475
        %v556 = vand.u32 2147483647, %v476
        %v557 = vand.u32 2147483647, %v507
        %v558 = vand.u32 2147483647, %v508
        %v559 = vand.u32 2147483647, %v539
        %v560 = vand.u32 2147483647, %v540
        %v561 = vsub.f32 0.0, %v555
        %v562 = vsub.f32 0.0, %v556
        %v563 = vsub.f32 0.0, %v557
        %v564 = vsub.f32 0.0, %v558
        %v565 = vsub.f32 0.0, %v559
        %v566 = vsub.f32 0.0, %v560
        %v567 = vmul.f32 %v561, 1.442695
        %v568 = vpow.pop %v567
        %v569 = vmul.f32 %v562, 1.442695
        %v570 = vpow.pop %v569
        %v571 = vmul.f32 %v563, 1.442695
        %v572 = vpow.pop %v571
        %v573 = vmul.f32 %v564, 1.442695
        %v574 = vpow.pop %v573
        %v575 = vmul.f32 %v565, 1.442695
        %v576 = vpow.pop %v575
        %v577 = vmul.f32 %v566, 1.442695
        %v578 = vpow.pop %v577
        %vm579 = vcmp.ge.f32.partialorder %v475, 0.0
        %vm580 = vcmp.ge.f32.partialorder %v476, 0.0
        %vm581 = vcmp.ge.f32.partialorder %v507, 0.0
        %vm582 = vcmp.ge.f32.partialorder %v508, 0.0
        %vm583 = vcmp.ge.f32.partialorder %v539, 0.0
        %vm584 = vcmp.ge.f32.partialorder %v540, 0.0
        %v585 = vadd.f32 %v568, 1.0
        %v586 = vadd.f32 %v570, 1.0
        %v587 = vadd.f32 %v572, 1.0
        %v588 = vadd.f32 %v574, 1.0
        %v589 = vadd.f32 %v576, 1.0
        %v590 = vadd.f32 %v578, 1.0
        %v591 = vrcp.pop %v585
        %v592 = vmul.f32 1.0, %v591
        %v593 = vrcp.pop %v586
        %v594 = vmul.f32 1.0, %v593
        %v595 = vrcp.pop %v587
        %v596 = vmul.f32 1.0, %v595
        %v597 = vrcp.pop %v588
        %v598 = vmul.f32 1.0, %v597
        %v599 = vrcp.pop %v589
        %v600 = vmul.f32 1.0, %v599
        %v601 = vrcp.pop %v590
        %v602 = vmul.f32 1.0, %v601
        %v603 = vmul.f32 %v568, %v591
        %v604 = vmul.f32 %v570, %v593
        %v605 = vmul.f32 %v572, %v595
        %v606 = vmul.f32 %v574, %v597
        %v607 = vmul.f32 %v576, %v599
        %v608 = vmul.f32 %v578, %v601
        %v609 = vsel %vm579, %v592, %v603
        %v610 = vsel %vm580, %v594, %v604
        %v611 = vsel %vm581, %v596, %v605
        %v612 = vsel %vm582, %v598, %v606
        %v613 = vsel %vm583, %v600, %v607
        %v614 = vsel %vm584, %v602, %v608
        %vm615 = vcmask 130048
        %616 = vst.msk [vmem:[%s217] sm:$0xff] %vm615, %v609
        %617 = vst.msk [vmem:[%s217 + $0x8] sm:$0xff] %vm615, %v610
        %618 = vst.msk [vmem:[%s217 + $0x10] sm:$0xff] %vm615, %v611
        %619 = vst.msk [vmem:[%s217 + $0x18] sm:$0xff] %vm615, %v612
        %620 = vst.msk [vmem:[%s217 + $0x20] sm:$0xff] %vm615, %v613
        %621 = vst.msk [vmem:[%s217 + $0x28] sm:$0xff] %vm615, %v614
        %s622 = sand.u32 %s93, 1
        %s623 = scalar_lea.sflag [#allocation4], %s622
        %s624 = sand.u32 %s93, 1
        %s625 = smul.addr %s624, 48
        %s626 = scalar_lea.vmem [#allocation3], %s625
        // Predicated region
        $region74: #{espnetv2_autoencoder_forward.11} parent=68 // pred_check
          %p627 = pneg %p103
        $region75: #{espnetv2_autoencoder_forward.11} parent=68 // pred_check_branch
          %629 = sbr.rel (%p627) target = $region77
        $region76: #{espnetv2_autoencoder_forward.11} parent=68 // pred_region
          %s631 = ssub.s32 768, 768
          %632 = vsyncadd %s623, %s631
          %s633 = smul.addr %s17, 6
          %s634 = smul.addr %s633, 128
          %s635 = scalar_lea.hbm %s3, %s634
          %s636 = sshll.u32 %s626, 4
          %s637 = int_to_ptr.vmem [resolvable:$true] %s636
          %642 = dma.vmem_to_hbm [thread:$0]  %s637, 768, %s635, %s623, 128, 128, 8
        $region77: #{espnetv2_autoencoder_forward.11} parent=68 // pred_fallthru
          _
      $region69: #{espnetv2_autoencoder_forward.11} parent=5 // pred_fallthru
        _
      %p643 = scmp.le.s32.totalorder 2, %s12
      // Predicated region
      $region78: #{espnetv2_autoencoder_forward.11} parent=5 // pred_check
        %p644 = pneg %p643
      $region79: #{espnetv2_autoencoder_forward.11} parent=5 // pred_check_branch
        %646 = sbr.rel (%p644) target = $region81
      $region80: #{espnetv2_autoencoder_forward.11} parent=5 // pred_region
        %s647 = ssub.s32 %s12, 2
        // Predicated region
        $region82: #{espnetv2_autoencoder_forward.11} parent=80 // pred_check
          %p648 = pneg %p109
        $region83: #{espnetv2_autoencoder_forward.11} parent=80 // pred_check_branch
          %650 = sbr.rel (%p648) target = $region85
        $region84: #{espnetv2_autoencoder_forward.11} parent=80 // pred_region
          %s651 = sand.u32 %s94, 1
          %s652 = scalar_lea.sflag [#allocation4], %s651
          %s653 = sand.u32 %s94, 1
          %s654 = smul.addr %s653, 48
          %s655 = scalar_lea.vmem [#allocation3], %s654
          %656 = dma.done %s652, 768
        $region85: #{espnetv2_autoencoder_forward.11} parent=80 // pred_fallthru
          _
      $region81: #{espnetv2_autoencoder_forward.11} parent=5 // pred_fallthru
        _
    $region6: #{espnetv2_autoencoder_forward.11} parent=1 // loop_footer
      %s16 = sadd.s32 1, %s12
    $region7: #{espnetv2_autoencoder_forward.11} parent=1 // loop_footer_branch
      %11 = sbr.rel target = $region3
    $region8: #{espnetv2_autoencoder_forward.11} parent=1 // loop_exit
      _
    %657 = vsyncpa [#allocation4], 1
    %s658 = scalar_lea.sflag [#allocation4], 1
    %659 = vsyncpa %s658, 1

// kernel: espnetv2_autoencoder_forward.10
$region0: #{espnetv2_autoencoder_forward.10}
  #allocation0 [shape = 'u32[]', space=smem, size = 0x4, offset = 0x4, fixed_abs, tag = 'smem constant byte address 0x4 - core index']
  #allocation1 [shape = 'u32[144,128]{1,0:T(1,128)}', space=vmem, size = 0x12000, scoped, tag = 'internal scratch']
  %s0 = inlined_call_operand.vmem [shape: bf16[288,128], index: 0, kind: input, shape index: {}]
  %s1 = inlined_call_operand.vmem [shape: bf16[16,288], index: 1, kind: input, shape index: {}]
  %s2 = inlined_call_operand.vmem [shape: f32[16,1], index: 2, kind: input, shape index: {}]
  %s3 = inlined_call_operand.vmem [shape: f32[16,1], index: 3, kind: input, shape index: {}]
  %s4 = inlined_call_operand.vmem [shape: f32[16,1], index: 4, kind: input, shape index: {}]
  %s5 = inlined_call_operand.vmem [shape: bf16[3,16], index: 5, kind: input, shape index: {}]
  %s6 = inlined_call_operand.vmem [shape: f32[3,1], index: 6, kind: input, shape index: {}]
  %s7 = inlined_call_operand.vmem [shape: bf16[3,128], index: 7, kind: output, shape index: {}]
  %s8 = sld [smem:[#allocation0]]
  $region38: #{espnetv2_autoencoder_forward.10} parent=0
    _
  %s10 = ssub.s32 1, %s8
  %s11 = scalar_select 0, %s10, %s8
  // Predicated region
  $region2: #{espnetv2_autoencoder_forward.10} parent=0 // pred_check
    _
  $region3: #{espnetv2_autoencoder_forward.10} parent=0 // pred_check_branch
    %13 = sbr.rel (0) target = $region5
  $region4: #{espnetv2_autoencoder_forward.10} parent=0 // pred_region
    _
  $region5: #{espnetv2_autoencoder_forward.10} parent=0 // pred_fallthru
    _
  // Predicated region
  $region6: #{espnetv2_autoencoder_forward.10} parent=0 // pred_check
    _
  $region7: #{espnetv2_autoencoder_forward.10} parent=0 // pred_check_branch
    %15 = sbr.rel (0) target = $region9
  $region8: #{espnetv2_autoencoder_forward.10} parent=0 // pred_region
    _
  $region9: #{espnetv2_autoencoder_forward.10} parent=0 // pred_fallthru
    _
  // Predicated region
  $region10: #{espnetv2_autoencoder_forward.10} parent=0 // pred_check
    _
  $region11: #{espnetv2_autoencoder_forward.10} parent=0 // pred_check_branch
    %17 = sbr.rel (0) target = $region13
  $region12: #{espnetv2_autoencoder_forward.10} parent=0 // pred_region
    _
  $region13: #{espnetv2_autoencoder_forward.10} parent=0 // pred_fallthru
    _
  // Predicated region
  $region14: #{espnetv2_autoencoder_forward.10} parent=0 // pred_check
    _
  $region15: #{espnetv2_autoencoder_forward.10} parent=0 // pred_check_branch
    %19 = sbr.rel (0) target = $region17
  $region16: #{espnetv2_autoencoder_forward.10} parent=0 // pred_region
    _
  $region17: #{espnetv2_autoencoder_forward.10} parent=0 // pred_fallthru
    _
  // Predicated region
  $region18: #{espnetv2_autoencoder_forward.10} parent=0 // pred_check
    _
  $region19: #{espnetv2_autoencoder_forward.10} parent=0 // pred_check_branch
    %21 = sbr.rel (0) target = $region21
  $region20: #{espnetv2_autoencoder_forward.10} parent=0 // pred_region
    _
  $region21: #{espnetv2_autoencoder_forward.10} parent=0 // pred_fallthru
    _
  // Predicated region
  $region22: #{espnetv2_autoencoder_forward.10} parent=0 // pred_check
    _
  $region23: #{espnetv2_autoencoder_forward.10} parent=0 // pred_check_branch
    %23 = sbr.rel (0) target = $region25
  $region24: #{espnetv2_autoencoder_forward.10} parent=0 // pred_region
    _
  $region25: #{espnetv2_autoencoder_forward.10} parent=0 // pred_fallthru
    _
  // Predicated region
  $region26: #{espnetv2_autoencoder_forward.10} parent=0 // pred_check
    _
  $region27: #{espnetv2_autoencoder_forward.10} parent=0 // pred_check_branch
    %25 = sbr.rel (0) target = $region29
  $region28: #{espnetv2_autoencoder_forward.10} parent=0 // pred_region
    _
  $region29: #{espnetv2_autoencoder_forward.10} parent=0 // pred_fallthru
    _
  %v27 = vld [vmem:[%s1] sm:$0xff]
  %v28 = vld [vmem:[%s1 + $0x8] sm:$0xf]
  %v29 = vld [vmem:[%s1 + $0xc] sm:$0xff]
  %v30 = vld [vmem:[%s1 + $0x14] sm:$0xf]
  %v31 = vld [vmem:[%s0] sm:$0xf]
  %v32 = vld [vmem:[%s0 + $0x4] sm:$0xf]
  %v33 = vld [vmem:[%s0 + $0x8] sm:$0xf]
  %v34 = vld [vmem:[%s0 + $0xc] sm:$0xf]
  %v35 = vld [vmem:[%s0 + $0x10] sm:$0xf]
  %v36 = vld [vmem:[%s0 + $0x14] sm:$0xf]
  %v37 = vld [vmem:[%s0 + $0x18] sm:$0xf]
  %v38 = vld [vmem:[%s0 + $0x1c] sm:$0xf]
  %v39 = vld [vmem:[%s0 + $0x20] sm:$0xf]
  %v40 = vld [vmem:[%s0 + $0x24] sm:$0xf]
  %v41 = vld [vmem:[%s0 + $0x28] sm:$0xf]
  %v42 = vld [vmem:[%s0 + $0x2c] sm:$0xf]
  %v43 = vld [vmem:[%s0 + $0x30] sm:$0xf]
  %v44 = vld [vmem:[%s0 + $0x34] sm:$0xf]
  %v45 = vld [vmem:[%s0 + $0x38] sm:$0xf]
  %v46 = vld [vmem:[%s0 + $0x3c] sm:$0xf]
  %v47 = vld [vmem:[%s0 + $0x40] sm:$0xf]
  %v48 = vld [vmem:[%s0 + $0x44] sm:$0xf]
  %v49 = vld [vmem:[%s0 + $0x48] sm:$0xf]
  %v50 = vld [vmem:[%s0 + $0x4c] sm:$0xf]
  %v51 = vld [vmem:[%s0 + $0x50] sm:$0xf]
  %v52 = vld [vmem:[%s0 + $0x54] sm:$0xf]
  %v53 = vld [vmem:[%s0 + $0x58] sm:$0xf]
  %v54 = vld [vmem:[%s0 + $0x5c] sm:$0xf]
  %v55 = vld [vmem:[%s0 + $0x60] sm:$0xf]
  %v56 = vld [vmem:[%s0 + $0x64] sm:$0xf]
  %v57 = vld [vmem:[%s0 + $0x68] sm:$0xf]
  %v58 = vld [vmem:[%s0 + $0x6c] sm:$0xf]
  %v59 = vld [vmem:[%s0 + $0x70] sm:$0xf]
  %v60 = vld [vmem:[%s0 + $0x74] sm:$0xf]
  %v61 = vld [vmem:[%s0 + $0x78] sm:$0xf]
  %v62 = vld [vmem:[%s0 + $0x7c] sm:$0xf]
  %v63 = vld [vmem:[%s0 + $0x80] sm:$0xf]
  %v64 = vld [vmem:[%s0 + $0x84] sm:$0xf]
  %v65 = vld [vmem:[%s0 + $0x88] sm:$0xf]
  %v66 = vld [vmem:[%s0 + $0x8c] sm:$0xf]
  %v71 = vunpack.c.l.b16 %v27
  %v72 = vunpack.c.h.b16 %v27
  %v73 = vunpack.c.l.b16 %v28
  %v74 = vunpack.c.l.b16 %v29
  %v75 = vunpack.c.h.b16 %v29
  %v76 = vunpack.c.l.b16 %v30
  %v77 = vpack.c.b16 %v74, %v71
  %v78 = vpack.c.b16 %v75, %v72
  %v79 = vpack.c.b16 %v76, %v73
  %v118 = vunpack.c.l.b16 %v31
  %v119 = vunpack.c.l.b16 %v32
  %v120 = vunpack.c.l.b16 %v33
  %v121 = vunpack.c.l.b16 %v34
  %v122 = vunpack.c.l.b16 %v35
  %v123 = vunpack.c.l.b16 %v36
  %v124 = vunpack.c.l.b16 %v37
  %v125 = vunpack.c.l.b16 %v38
  %v126 = vunpack.c.l.b16 %v39
  %v127 = vunpack.c.l.b16 %v40
  %v128 = vunpack.c.l.b16 %v41
  %v129 = vunpack.c.l.b16 %v42
  %v130 = vunpack.c.l.b16 %v43
  %v131 = vunpack.c.l.b16 %v44
  %v132 = vunpack.c.l.b16 %v45
  %v133 = vunpack.c.l.b16 %v46
  %v134 = vunpack.c.l.b16 %v47
  %v135 = vunpack.c.l.b16 %v48
  %v136 = vunpack.c.l.b16 %v49
  %v137 = vunpack.c.l.b16 %v50
  %v138 = vunpack.c.l.b16 %v51
  %v139 = vunpack.c.l.b16 %v52
  %v140 = vunpack.c.l.b16 %v53
  %v141 = vunpack.c.l.b16 %v54
  %v142 = vunpack.c.l.b16 %v55
  %v143 = vunpack.c.l.b16 %v56
  %v144 = vunpack.c.l.b16 %v57
  %v145 = vunpack.c.l.b16 %v58
  %v146 = vunpack.c.l.b16 %v59
  %v147 = vunpack.c.l.b16 %v60
  %v148 = vunpack.c.l.b16 %v61
  %v149 = vunpack.c.l.b16 %v62
  %v150 = vunpack.c.l.b16 %v63
  %v151 = vunpack.c.l.b16 %v64
  %v152 = vunpack.c.l.b16 %v65
  %v153 = vunpack.c.l.b16 %v66
  %v154 = vpack.c.b16 %v119, %v118
  %v155 = vpack.c.b16 %v121, %v120
  %v156 = vpack.c.b16 %v123, %v122
  %v157 = vpack.c.b16 %v125, %v124
  %v158 = vpack.c.b16 %v127, %v126
  %v159 = vpack.c.b16 %v129, %v128
  %v160 = vpack.c.b16 %v131, %v130
  %v161 = vpack.c.b16 %v133, %v132
  %v162 = vpack.c.b16 %v135, %v134
  %v163 = vpack.c.b16 %v137, %v136
  %v164 = vpack.c.b16 %v139, %v138
  %v165 = vpack.c.b16 %v141, %v140
  %v166 = vpack.c.b16 %v143, %v142
  %v167 = vpack.c.b16 %v145, %v144
  %v168 = vpack.c.b16 %v147, %v146
  %v169 = vpack.c.b16 %v149, %v148
  %v170 = vpack.c.b16 %v151, %v150
  %v171 = vpack.c.b16 %v153, %v152
  %vm190 = vcmask 261120
  %v192 = vsel %vm190, %v79, 0
  %194 = vmatprep.subr.bf16.mxu0 0
  %195 = vmatpush1.bf16.msra.mxu0 %v154
  %196 = vmatprep.subr.bf16.mxu0 0
  %197 = vmatpush1.bf16.msra.mxu0 %v155
  %198 = vmatprep.subr.bf16.mxu0 0
  %199 = vmatpush1.bf16.msra.mxu0 %v156
  %200 = vmatprep.subr.bf16.mxu0 0
  %201 = vmatpush1.bf16.msra.mxu0 %v157
  %202 = vmatprep.subr.bf16.mxu0 0
  %203 = vmatpush1.bf16.msra.mxu0 %v158
  %204 = vmatprep.subr.bf16.mxu0 0
  %205 = vmatpush1.bf16.msra.mxu0 %v159
  %206 = vmatprep.subr.bf16.mxu0 0
  %207 = vmatpush1.bf16.msra.mxu0 %v160
  %208 = vmatprep.subr.bf16.mxu0 0
  %209 = vmatpush1.bf16.msra.mxu0 %v161
  %210 = vmatprep.subr.bf16.mxu0 0
  %211 = vmatpush1.bf16.msra.mxu0 %v162
  %212 = vmatprep.subr.bf16.mxu0 0
  %213 = vmatpush1.bf16.msra.mxu0 %v163
  %214 = vmatprep.subr.bf16.mxu0 0
  %215 = vmatpush1.bf16.msra.mxu0 %v164
  %216 = vmatprep.subr.bf16.mxu0 0
  %217 = vmatpush1.bf16.msra.mxu0 %v165
  %218 = vmatprep.subr.bf16.mxu0 0
  %219 = vmatpush1.bf16.msra.mxu0 %v166
  %220 = vmatprep.subr.bf16.mxu0 0
  %221 = vmatpush1.bf16.msra.mxu0 %v167
  %222 = vmatprep.subr.bf16.mxu0 0
  %223 = vmatpush1.bf16.msra.mxu0 %v168
  %224 = vmatprep.subr.bf16.mxu0 0
  %225 = vmatpush1.bf16.msra.mxu0 %v169
  %226 = vmatprep.mubr.bf16.mxu0 %v78
  %227 = vmatmul.mubr.bf16.gmra.mrb[0].mxu0 %v77
  %v228 = vpop.f32.mrb[0].mxu0
  %v229 = vadd.f32 0.0, %v228
  %v230 = vpop.f32.mrb[0].mxu0
  %v231 = vpop.f32.mrb[0].mxu0
  %v232 = vadd.f32 0.0, %v231
  %v233 = vpop.f32.mrb[0].mxu0
  %234 = vdwg.mxu0
  %235 = vmatprep.subr.bf16.mxu0 0
  %236 = vmatpush1.bf16.msra.mxu0 %v170
  %237 = vmatprep.subr.bf16.mxu0 0
  %238 = vmatpush1.bf16.msra.mxu0 %v171
  %239 = vmatprep.subr.bf16.mxu0 0
  %240 = vmatpush1.bf16.msra.mxu0 0
  %241 = vmatprep.subr.bf16.mxu0 0
  %242 = vmatpush1.bf16.msra.mxu0 0
  %243 = vmatprep.subr.bf16.mxu0 0
  %244 = vmatpush1.bf16.msra.mxu0 0
  %245 = vmatprep.subr.bf16.mxu0 0
  %246 = vmatpush1.bf16.msra.mxu0 0
  %247 = vmatprep.subr.bf16.mxu0 0
  %248 = vmatpush1.bf16.msra.mxu0 0
  %249 = vmatprep.subr.bf16.mxu0 0
  %250 = vmatpush1.bf16.msra.mxu0 0
  %251 = vmatprep.subr.bf16.mxu0 0
  %252 = vmatpush1.bf16.msra.mxu0 0
  %253 = vmatprep.subr.bf16.mxu0 0
  %254 = vmatpush1.bf16.msra.mxu0 0
  %255 = vmatprep.subr.bf16.mxu0 0
  %256 = vmatpush1.bf16.msra.mxu0 0
  %257 = vmatprep.subr.bf16.mxu0 0
  %258 = vmatpush1.bf16.msra.mxu0 0
  %259 = vmatprep.subr.bf16.mxu0 0
  %260 = vmatpush1.bf16.msra.mxu0 0
  %261 = vmatprep.subr.bf16.mxu0 0
  %262 = vmatpush1.bf16.msra.mxu0 0
  %263 = vmatprep.subr.bf16.mxu0 0
  %264 = vmatpush1.bf16.msra.mxu0 0
  %265 = vmatprep.subr.bf16.mxu0 0
  %266 = vmatpush1.bf16.msra.mxu0 0
  %267 = vmatprep.mubr.bf16.mxu0 0
  %268 = vmatmul.mubr.bf16.gmra.mrb[0].mxu0 %v192
  %v269 = vpop.f32.mrb[0].mxu0
  %v270 = vadd.f32 %v229, %v269
  %v271 = vpop.f32.mrb[0].mxu0
  %v272 = vpop.f32.mrb[0].mxu0
  %v273 = vadd.f32 %v232, %v272
  %v274 = vpop.f32.mrb[0].mxu0
  %275 = vdwg.mxu0
  %v276 = vld [vmem:[%s2] sm:$0xff]
  %v277 = vld [vmem:[%s2 + $0x8] sm:$0xff]
  %279 = vset.pattern.permute.xlu0 0
  %280 = vperm.xlu0 %279, %v276
  %v281 = vpop.permute.xlu0 %280
  %284 = vset.pattern.permute.xlu0 0
  %285 = vperm.xlu0 %284, %v277
  %v286 = vpop.permute.xlu0 %285
  %v288 = vmul.f32 %v270, %v281
  %v289 = vmul.f32 %v273, %v286
  %v290 = vld [vmem:[%s3] sm:$0xff]
  %v291 = vld [vmem:[%s3 + $0x8] sm:$0xff]
  %293 = vset.pattern.permute.xlu0 0
  %294 = vperm.xlu0 %293, %v290
  %v295 = vpop.permute.xlu0 %294
  %298 = vset.pattern.permute.xlu0 0
  %299 = vperm.xlu0 %298, %v291
  %v300 = vpop.permute.xlu0 %299
  %v302 = vadd.f32 %v288, %v295
  %v303 = vadd.f32 %v289, %v300
  %vm304 = vcmp.ge.f32.partialorder %v302, 0.0
  %vm305 = vcmp.ge.f32.partialorder %v303, 0.0
  %v306 = vld [vmem:[%s4] sm:$0xff]
  %v307 = vld [vmem:[%s4 + $0x8] sm:$0xff]
  %309 = vset.pattern.permute.xlu0 0
  %310 = vperm.xlu0 %309, %v306
  %v311 = vpop.permute.xlu0 %310
  %314 = vset.pattern.permute.xlu0 0
  %315 = vperm.xlu0 %314, %v307
  %v316 = vpop.permute.xlu0 %315
  %v318 = vmul.f32 %v311, %v302
  %v319 = vmul.f32 %v316, %v303
  %v320 = vsel %vm304, %v302, %v318
  %v321 = vsel %vm305, %v303, %v319
  %v322 = vld [vmem:[%s5] sm:$0x3]
  %v323 = vpack.c.bf16 %v321, %v320
  %v324 = vld [vmem:[%s6] sm:$0x7]
  %326 = vset.pattern.permute.xlu0 0
  %327 = vperm.xlu0 %326, %v324
  %v328 = vpop.permute.xlu0 %327
  %vm330 = vcmask 130048
  %v332 = vsel %vm330, %v322, 0
  %334 = vmatprep.subr.bf16.mxu0 0
  %335 = vmatpush1.bf16.msra.mxu0 %v323
  %336 = vmatprep.subr.bf16.mxu0 0
  %337 = vmatpush1.bf16.msra.mxu0 0
  %338 = vmatprep.subr.bf16.mxu0 0
  %339 = vmatpush1.bf16.msra.mxu0 0
  %340 = vmatprep.subr.bf16.mxu0 0
  %341 = vmatpush1.bf16.msra.mxu0 0
  %342 = vmatprep.subr.bf16.mxu0 0
  %343 = vmatpush1.bf16.msra.mxu0 0
  %344 = vmatprep.subr.bf16.mxu0 0
  %345 = vmatpush1.bf16.msra.mxu0 0
  %346 = vmatprep.subr.bf16.mxu0 0
  %347 = vmatpush1.bf16.msra.mxu0 0
  %348 = vmatprep.subr.bf16.mxu0 0
  %349 = vmatpush1.bf16.msra.mxu0 0
  %350 = vmatprep.subr.bf16.mxu0 0
  %351 = vmatpush1.bf16.msra.mxu0 0
  %352 = vmatprep.subr.bf16.mxu0 0
  %353 = vmatpush1.bf16.msra.mxu0 0
  %354 = vmatprep.subr.bf16.mxu0 0
  %355 = vmatpush1.bf16.msra.mxu0 0
  %356 = vmatprep.subr.bf16.mxu0 0
  %357 = vmatpush1.bf16.msra.mxu0 0
  %358 = vmatprep.subr.bf16.mxu0 0
  %359 = vmatpush1.bf16.msra.mxu0 0
  %360 = vmatprep.subr.bf16.mxu0 0
  %361 = vmatpush1.bf16.msra.mxu0 0
  %362 = vmatprep.subr.bf16.mxu0 0
  %363 = vmatpush1.bf16.msra.mxu0 0
  %364 = vmatprep.subr.bf16.mxu0 0
  %365 = vmatpush1.bf16.msra.mxu0 0
  %366 = vmatprep.mubr.bf16.mxu0 0
  %367 = vmatmul.mubr.bf16.gmra.mrb[0].mxu0 %v332
  %v368 = vpop.f32.mrb[0].mxu0
  %v369 = vadd.f32 %v328, %v368
  %v370 = vpop.f32.mrb[0].mxu0
  %v371 = vpop.f32.mrb[0].mxu0
  %v372 = vpop.f32.mrb[0].mxu0
  %373 = vdwg.mxu0
  %v374 = vpack.c.bf16 %v369, %v369
  %vm375 = vcmask 1041408
  %vm376 = vsmask.f32 1280
  %vm377 = vmand %vm375, %vm376
  %v378 = vld [vmem:[%s7] sm:$0x3]
  %v379 = vsel %vm377, %v374, %v378
  %380 = vst [vmem:[%s7] sm:$0x3] %v379
  // Predicated region
  $region30: #{espnetv2_autoencoder_forward.10} parent=0 // pred_check
    _
  $region31: #{espnetv2_autoencoder_forward.10} parent=0 // pred_check_branch
    %382 = sbr.rel (0) target = $region33
  $region32: #{espnetv2_autoencoder_forward.10} parent=0 // pred_region
    _
  $region33: #{espnetv2_autoencoder_forward.10} parent=0 // pred_fallthru
    _
  // Predicated region
  $region34: #{espnetv2_autoencoder_forward.10} parent=0 // pred_check
    _
  $region35: #{espnetv2_autoencoder_forward.10} parent=0 // pred_check_branch
    %384 = sbr.rel (0) target = $region37
  $region36: #{espnetv2_autoencoder_forward.10} parent=0 // pred_region
    _
  $region37: #{espnetv2_autoencoder_forward.10} parent=0 // pred_fallthru
    _

</llo_original>
